<compile_context>
chip_gen: v7x
topology: tpu7x:2x2x1
jax: 0.10.0
libtpu: 0.0.40
codegen_flags: <defaults>
</compile_context>

<pallas_src>
import functools

import jax
import jax.numpy as jnp
from jax.experimental import pallas as pl
from jax.experimental.pallas import tpu as pltpu

IN_VECTOR_SIZE = 160
IN_PADDED = 256                    # layer-0 K padded with zeros (lane/MXU aligned)
HIDDEN0 = 512
HIDDEN1 = 1024
OUT_C, OUT_H, OUT_W = 1, 28, 28
OUT_SIZE = OUT_C * OUT_H * OUT_W   # 784
OUT_PADDED = 7 * 128               # 896, lane-dense output width


def _round_up(n, m):
    return ((n + m - 1) // m) * m


def _cdiv(a, b):
    return (a + b - 1) // b


def _decoder_kernel(x_ref, w0_ref, b0_ref, w1_ref, b1_ref, w2_ref, b2_ref,
                    o_ref):
    # Layer 0: (bm, 256) @ (256, 512) + b0, ReLU   (bf16 in, f32 accum)
    h = jnp.dot(x_ref[...], w0_ref[...], preferred_element_type=jnp.float32)
    h = jnp.maximum(h + b0_ref[...], 0.0)
    # Layer 1: (bm, 512) @ (512, 1024) + b1, ReLU
    h = jnp.dot(h.astype(jnp.bfloat16), w1_ref[...],
                preferred_element_type=jnp.float32)
    h = jnp.maximum(h + b1_ref[...], 0.0)
    # Layer 2: (bm, 1024) @ (1024, 896) + b2, sigmoid (cols 784..895 are pad)
    h = jnp.dot(h.astype(jnp.bfloat16), w2_ref[...],
                preferred_element_type=jnp.float32)
    z = h + b2_ref[...]
    # sigmoid(z) = 1 / (1 + exp(-z)): exp + approx reciprocal both on the EUP.
    h = pl.reciprocal(1.0 + jnp.exp(-z), approx=True)
    o_ref[...] = h.astype(o_ref.dtype)


def _resident_spec(shape):
    """Full-array block, constant index_map: stays resident across the grid.

    Buffered(1): no point double-buffering blocks that never change.
    """
    idx = lambda i: (0,) * len(shape)
    try:
        return pl.BlockSpec(shape, idx, pipeline_mode=pl.Buffered(1))
    except Exception:  # older jax without pipeline_mode on BlockSpec
        return pl.BlockSpec(shape, idx)


def _choose_tile(B, block_m):
    """Balanced batch tile: minimal padding, >=2 grid steps when B > 8."""
    B8 = _round_up(B, 8)
    if B8 <= 8:
        return 8
    n_steps = max(2, _cdiv(B8, block_m))
    return _round_up(_cdiv(B8, n_steps), 8)


@functools.partial(jax.jit, static_argnames=("block_m",))
def decoder_forward(x, params, *, block_m=256):
    """x: (B, 160) float32 -> (B, 1, 28, 28) float32.

    params: packed kernel params from `pack_params` (bf16 weights, K-padded
    first layer, lane-padded last layer). block_m=256 is safe on v5e and fills
    the MXU on v6e/v7x; 512 is also fine on v6e/v7x for very large B.
    """
    w0, b0, w1, b1, w2, b2 = params
    B = x.shape[0]

    bm = _choose_tile(B, block_m)
    Bp = _round_up(B, bm)
    # Pad batch rows and the contraction dim (160 -> 256) with zeros and cast
    # to bf16 in the same wrapper pass (zeros contribute nothing to the dot).
    x = jnp.pad(x, ((0, Bp - B), (0, IN_PADDED - IN_VECTOR_SIZE))
                ).astype(jnp.bfloat16)
    grid = (Bp // bm,)

    flops = 2 * Bp * (IN_PADDED * HIDDEN0
                      + HIDDEN0 * HIDDEN1
                      + HIDDEN1 * OUT_PADDED)
    weight_bytes = 2 * (IN_PADDED * HIDDEN0 + HIDDEN0 * HIDDEN1
                        + HIDDEN1 * OUT_PADDED)           # bf16 weights
    bias_bytes = 4 * (HIDDEN0 + HIDDEN1 + OUT_PADDED)     # f32 biases
    io_bytes = 2 * Bp * (IN_PADDED + OUT_PADDED)          # bf16 activations
    cost = pl.CostEstimate(
        flops=flops,
        transcendentals=Bp * OUT_PADDED,                  # sigmoid exps
        bytes_accessed=weight_bytes + bias_bytes + io_bytes,
    )

    flat = pl.pallas_call(
        _decoder_kernel,
        out_shape=jax.ShapeDtypeStruct((Bp, OUT_PADDED), jnp.bfloat16),
        grid_spec=pltpu.PrefetchScalarGridSpec(
            num_scalar_prefetch=0,
            grid=grid,
            in_specs=[
                # activations tiled over batch (double-buffered by default)
                pl.BlockSpec((bm, IN_PADDED), lambda i: (i, 0)),
                # weights / biases: resident, single-buffered
                _resident_spec((IN_PADDED, HIDDEN0)),
                _resident_spec((1, HIDDEN0)),
                _resident_spec((HIDDEN0, HIDDEN1)),
                _resident_spec((1, HIDDEN1)),
                _resident_spec((HIDDEN1, OUT_PADDED)),
                _resident_spec((1, OUT_PADDED)),
            ],
            out_specs=pl.BlockSpec((bm, OUT_PADDED), lambda i: (i, 0)),
        ),
        compiler_params=pltpu.CompilerParams(
            dimension_semantics=("parallel",)),
        cost_estimate=cost,
    )(x, w0, b0, w1, b1, w2, b2)

    # Drop batch padding + the 112 lane-pad columns, upcast, NCHW view.
    flat = flat[:B, :OUT_SIZE].astype(jnp.float32)
    return flat.reshape(-1, OUT_C, OUT_H, OUT_W)


def init_params(key):
    """Deterministic f32 params (PyTorch-Linear-style uniform bounds).

    Weights are stored transposed vs. torch, i.e. (in_features, out_features),
    so the kernel computes x @ W + b directly. Biases are (1, N) rows.
    """
    def linear(key, fan_in, fan_out):
        kw, kb = jax.random.split(key)
        bound = 1.0 / jnp.sqrt(float(fan_in))
        w = jax.random.uniform(kw, (fan_in, fan_out), jnp.float32,
                               minval=-bound, maxval=bound)
        b = jax.random.uniform(kb, (1, fan_out), jnp.float32,
                               minval=-bound, maxval=bound)
        return w, b

    k0, k1, k2 = jax.random.split(key, 3)
    w0, b0 = linear(k0, IN_VECTOR_SIZE, HIDDEN0)
    w1, b1 = linear(k1, HIDDEN0, HIDDEN1)
    w2, b2 = linear(k2, HIDDEN1, OUT_SIZE)
    return (w0, b0, w1, b1, w2, b2)


def pack_params(params_f32):
    """f32 reference params -> kernel params.

    bf16 weights; layer-0 K padded 160 -> 256 with zero rows; last layer
    padded 784 -> 896 columns (lane-dense output). Biases stay f32.
    NOTE: bf16 weights/activations make the kernel deliberately not
    bit-accurate vs the f32 reference (covered by a 2e-2 tolerance).
    """
    w0, b0, w1, b1, w2, b2 = params_f32
    w0p = jnp.pad(w0, ((0, IN_PADDED - IN_VECTOR_SIZE), (0, 0)))
    pad_n = OUT_PADDED - OUT_SIZE
    w2p = jnp.pad(w2, ((0, 0), (0, pad_n)))
    b2p = jnp.pad(b2, ((0, 0), (0, pad_n)))
    return (w0p.astype(jnp.bfloat16), b0,
            w1.astype(jnp.bfloat16), b1,
            w2p.astype(jnp.bfloat16), b2p)


def _reference(x, params_f32):
    w0, b0, w1, b1, w2, b2 = params_f32
    h = jnp.maximum(x @ w0 + b0, 0.0)
    h = jnp.maximum(h @ w1 + b1, 0.0)
    h = jax.nn.sigmoid(h @ w2 + b2)
    return h.reshape(-1, OUT_C, OUT_H, OUT_W)


if __name__ == "__main__":
    key = jax.random.PRNGKey(0)
    kp, kx, kx2 = jax.random.split(key, 3)
    params_f32 = init_params(kp)
    params = pack_params(params_f32)

    # Small batch (tile shrinks to 8 automatically, single grid step).
    batch = 8
    x = jax.random.normal(kx, (batch, IN_VECTOR_SIZE), jnp.float32)
    out = jax.block_until_ready(decoder_forward(x, params))
    ref = _reference(x, params_f32)
    assert out.shape == (batch, OUT_C, OUT_H, OUT_W), out.shape
    assert jnp.allclose(out, ref, atol=2e-2, rtol=2e-2), "mismatch (small B)"

    # Ragged batch: exercises balanced tiling (200 -> bm=104, 2 grid steps,
    # only 8 padded rows) and the megacore-friendly >=2-step grid.
    batch2 = 200
    x2 = jax.random.normal(kx2, (batch2, IN_VECTOR_SIZE), jnp.float32)
    out2 = jax.block_until_ready(decoder_forward(x2, params))
    ref2 = _reference(x2, params_f32)
    assert out2.shape == (batch2, OUT_C, OUT_H, OUT_W), out2.shape
    assert jnp.allclose(out2, ref2, atol=2e-2, rtol=2e-2), "mismatch (large B)"

    print("KERNEL_OK")
</pallas_src>

<mosaic_0001>
module attributes {stable_mosaic.version = 11 : i64} {
  func.func @_decoder_kernel(%arg0: i32, %arg1: memref<8x256xbf16, #tpu.memory_space<vmem>>, %arg2: memref<256x512xbf16, #tpu.memory_space<vmem>>, %arg3: memref<1x512xf32, #tpu.memory_space<vmem>>, %arg4: memref<512x1024xbf16, #tpu.memory_space<vmem>>, %arg5: memref<1x1024xf32, #tpu.memory_space<vmem>>, %arg6: memref<1024x896xbf16, #tpu.memory_space<vmem>>, %arg7: memref<1x896xf32, #tpu.memory_space<vmem>>, %arg8: memref<8x896xbf16, #tpu.memory_space<vmem>>) attributes {dimension_semantics = [#tpu.dimension_semantics<parallel>], iteration_bounds = array<i64: 1>, scalar_prefetch = 0 : i64, scratch_operands = 0 : i64, tpu.core_type = #tpu.core_type<tc>, window_params = [{transform_indices = @transform_0, window_bounds = array<i64: 8, 256>}, {pipeline_mode = #tpu.pipeline_mode<synchronous>, transform_indices = @transform_1, window_bounds = array<i64: 256, 512>}, {pipeline_mode = #tpu.pipeline_mode<synchronous>, transform_indices = @transform_2, window_bounds = array<i64: 1, 512>}, {pipeline_mode = #tpu.pipeline_mode<synchronous>, transform_indices = @transform_3, window_bounds = array<i64: 512, 1024>}, {pipeline_mode = #tpu.pipeline_mode<synchronous>, transform_indices = @transform_4, window_bounds = array<i64: 1, 1024>}, {pipeline_mode = #tpu.pipeline_mode<synchronous>, transform_indices = @transform_5, window_bounds = array<i64: 1024, 896>}, {pipeline_mode = #tpu.pipeline_mode<synchronous>, transform_indices = @transform_6, window_bounds = array<i64: 1, 896>}, {transform_indices = @transform_7, window_bounds = array<i64: 8, 896>}]} {
    %c0 = arith.constant 0 : index
    %c0_0 = arith.constant 0 : index
    %0 = vector.load %arg1[%c0, %c0_0] : memref<8x256xbf16, #tpu.memory_space<vmem>>, vector<8x256xbf16>
    %c0_1 = arith.constant 0 : index
    %c0_2 = arith.constant 0 : index
    %1 = vector.load %arg2[%c0_1, %c0_2] : memref<256x512xbf16, #tpu.memory_space<vmem>>, vector<256x512xbf16>
    %cst = arith.constant dense<0.000000e+00> : vector<8x512xf32>
    %2 = tpu.matmul %0, %1, %cst {dimension_numbers = #tpu.dot_dimension_numbers<[1], [0], [0], [1], [0, 0, 1, 1], [], []>} : vector<8x256xbf16>, vector<256x512xbf16>, vector<8x512xf32> -> vector<8x512xf32>
    %c0_3 = arith.constant 0 : index
    %c0_4 = arith.constant 0 : index
    %3 = vector.load %arg3[%c0_3, %c0_4] : memref<1x512xf32, #tpu.memory_space<vmem>>, vector<1x512xf32>
    %4 = vector.broadcast %3 : vector<1x512xf32> to vector<8x512xf32>
    %5 = arith.addf %2, %4 : vector<8x512xf32>
    %cst_5 = arith.constant 0.000000e+00 : f32
    %6 = vector.broadcast %cst_5 : f32 to vector<8x512xf32>
    %7 = arith.maximumf %5, %6 : vector<8x512xf32>
    %8 = arith.truncf %7 : vector<8x512xf32> to vector<8x512xbf16>
    %c0_6 = arith.constant 0 : index
    %c0_7 = arith.constant 0 : index
    %9 = vector.load %arg4[%c0_6, %c0_7] : memref<512x1024xbf16, #tpu.memory_space<vmem>>, vector<512x1024xbf16>
    %cst_8 = arith.constant dense<0.000000e+00> : vector<8x1024xf32>
    %10 = tpu.matmul %8, %9, %cst_8 {dimension_numbers = #tpu.dot_dimension_numbers<[1], [0], [0], [1], [0, 0, 1, 1], [], []>} : vector<8x512xbf16>, vector<512x1024xbf16>, vector<8x1024xf32> -> vector<8x1024xf32>
    %c0_9 = arith.constant 0 : index
    %c0_10 = arith.constant 0 : index
    %11 = vector.load %arg5[%c0_9, %c0_10] : memref<1x1024xf32, #tpu.memory_space<vmem>>, vector<1x1024xf32>
    %12 = vector.broadcast %11 : vector<1x1024xf32> to vector<8x1024xf32>
    %13 = arith.addf %10, %12 : vector<8x1024xf32>
    %cst_11 = arith.constant 0.000000e+00 : f32
    %14 = vector.broadcast %cst_11 : f32 to vector<8x1024xf32>
    %15 = arith.maximumf %13, %14 : vector<8x1024xf32>
    %16 = arith.truncf %15 : vector<8x1024xf32> to vector<8x1024xbf16>
    %c0_12 = arith.constant 0 : index
    %c0_13 = arith.constant 0 : index
    %17 = vector.load %arg6[%c0_12, %c0_13] : memref<1024x896xbf16, #tpu.memory_space<vmem>>, vector<1024x896xbf16>
    %cst_14 = arith.constant dense<0.000000e+00> : vector<8x896xf32>
    %18 = tpu.matmul %16, %17, %cst_14 {dimension_numbers = #tpu.dot_dimension_numbers<[1], [0], [0], [1], [0, 0, 1, 1], [], []>} : vector<8x1024xbf16>, vector<1024x896xbf16>, vector<8x896xf32> -> vector<8x896xf32>
    %c0_15 = arith.constant 0 : index
    %c0_16 = arith.constant 0 : index
    %19 = vector.load %arg7[%c0_15, %c0_16] : memref<1x896xf32, #tpu.memory_space<vmem>>, vector<1x896xf32>
    %20 = vector.broadcast %19 : vector<1x896xf32> to vector<8x896xf32>
    %21 = arith.addf %18, %20 : vector<8x896xf32>
    %cst_17 = arith.constant 0.000000e+00 : f32
    %22 = vector.broadcast %cst_17 : f32 to vector<8x896xf32>
    %23 = arith.subf %22, %21 : vector<8x896xf32>
    %24 = math.exp %23 : vector<8x896xf32>
    %cst_18 = arith.constant 1.000000e+00 : f32
    %25 = vector.broadcast %cst_18 : f32 to vector<8x896xf32>
    %26 = arith.addf %25, %24 : vector<8x896xf32>
    %27 = tpu.reciprocal %26 {approx = true} : vector<8x896xf32> -> vector<8x896xf32>
    %28 = arith.truncf %27 : vector<8x896xf32> to vector<8x896xbf16>
    %c0_19 = arith.constant 0 : index
    %c0_20 = arith.constant 0 : index
    %29 = vector.load %arg8[%c0_19, %c0_20] : memref<8x896xbf16, #tpu.memory_space<vmem>>, vector<8x896xbf16>
    tpu.vector_store %arg8[%c0_19, %c0_20], %28 {strides = array<i32>} : memref<8x896xbf16, #tpu.memory_space<vmem>>, vector<8x896xbf16>,
    return
  }
  func.func @transform_0(%arg0: i32) -> (i32, i32) {
    %c0_i32 = arith.constant 0 : i32
    %c0_i32_0 = arith.constant 0 : i32
    return %arg0, %c0_i32 : i32, i32
  }
  func.func @transform_1(%arg0: i32) -> (i32, i32) {
    %c0_i32 = arith.constant 0 : i32
    %c0_i32_0 = arith.constant 0 : i32
    %c0_i32_1 = arith.constant 0 : i32
    return %c0_i32, %c0_i32_0 : i32, i32
  }
  func.func @transform_2(%arg0: i32) -> (i32, i32) {
    %c0_i32 = arith.constant 0 : i32
    %c0_i32_0 = arith.constant 0 : i32
    %c0_i32_1 = arith.constant 0 : i32
    return %c0_i32, %c0_i32_0 : i32, i32
  }
  func.func @transform_3(%arg0: i32) -> (i32, i32) {
    %c0_i32 = arith.constant 0 : i32
    %c0_i32_0 = arith.constant 0 : i32
    %c0_i32_1 = arith.constant 0 : i32
    return %c0_i32, %c0_i32_0 : i32, i32
  }
  func.func @transform_4(%arg0: i32) -> (i32, i32) {
    %c0_i32 = arith.constant 0 : i32
    %c0_i32_0 = arith.constant 0 : i32
    %c0_i32_1 = arith.constant 0 : i32
    return %c0_i32, %c0_i32_0 : i32, i32
  }
  func.func @transform_5(%arg0: i32) -> (i32, i32) {
    %c0_i32 = arith.constant 0 : i32
    %c0_i32_0 = arith.constant 0 : i32
    %c0_i32_1 = arith.constant 0 : i32
    return %c0_i32, %c0_i32_0 : i32, i32
  }
  func.func @transform_6(%arg0: i32) -> (i32, i32) {
    %c0_i32 = arith.constant 0 : i32
    %c0_i32_0 = arith.constant 0 : i32
    %c0_i32_1 = arith.constant 0 : i32
    return %c0_i32, %c0_i32_0 : i32, i32
  }
  func.func @transform_7(%arg0: i32) -> (i32, i32) {
    %c0_i32 = arith.constant 0 : i32
    %c0_i32_0 = arith.constant 0 : i32
    return %arg0, %c0_i32 : i32, i32
  }
}

</mosaic_0001>

<llo_original>
// kernel: decoder_forward.1
$region0: #{decoder_forward.1}
  #allocation0 [shape = 'u32[]', space=smem, size = 0x4, offset = 0x4, fixed_abs, tag = 'smem constant byte address 0x4 - core index']
  #allocation1 [shape = 'u32[144,128]{1,0:T(1,128)}', space=vmem, size = 0x12000, scoped, tag = 'internal scratch']
  %s0 = inlined_call_operand.vmem [shape: bf16[8,256], index: 0, kind: input, shape index: {}]
  %s1 = inlined_call_operand.hbm [shape: bf16[256,512], index: 1, kind: input, shape index: {}]
  %s2 = inlined_call_operand.hbm [shape: f32[1,512], index: 2, kind: input, shape index: {}]
  %s3 = inlined_call_operand.hbm [shape: bf16[512,1024], index: 3, kind: input, shape index: {}]
  %s4 = inlined_call_operand.hbm [shape: f32[1,1024], index: 4, kind: input, shape index: {}]
  %s5 = inlined_call_operand.hbm [shape: bf16[1024,896], index: 5, kind: input, shape index: {}]
  %s6 = inlined_call_operand.hbm [shape: f32[1,896], index: 6, kind: input, shape index: {}]
  %s7 = inlined_call_operand.vmem [shape: bf16[8,896], index: 7, kind: output, shape index: {}]
  %s8 = sld [smem:[#allocation0]]
  $region62: #{decoder_forward.1} parent=0
    _
  %s10 = ssub.s32 1, %s8
  %s11 = scalar_select 0, %s10, %s8
  $region1: #{decoder_forward.1} parent=0
    #allocation2 [shape = 'u8[262144]{0}', space=vmem, size = 0x40000, scoped, tag = 'input window, operand 1, single buffered']
    #allocation3 [shape = 's32[1]{0}', space=sflag, size = 0x4, scoped, tag = 'scoped memory for decoder_forward.1']
    #allocation4 [shape = 'u8[2048]{0}', space=vmem, size = 0x800, scoped, tag = 'input window, operand 2, single buffered']
    #allocation5 [shape = 's32[1]{0}', space=sflag, size = 0x4, scoped, tag = 'scoped memory for decoder_forward.1']
    #allocation6 [shape = 'u8[1048576]{0}', space=vmem, size = 0x100000, scoped, tag = 'input window, operand 3, single buffered']
    #allocation7 [shape = 'u8[4096]{0}', space=vmem, size = 0x1000, scoped, tag = 'input window, operand 4, single buffered']
    #allocation8 [shape = 's32[1]{0}', space=sflag, size = 0x4, scoped, tag = 'scoped memory for decoder_forward.1']
    #allocation9 [shape = 'u8[1835008]{0}', space=vmem, size = 0x1c0000, scoped, tag = 'input window, operand 5, single buffered']
    #allocation10 [shape = 'u8[3584]{0}', space=vmem, size = 0x1000, scoped, tag = 'input window, operand 6, single buffered']
    #allocation11 [shape = 's32[1]{0}', space=sflag, size = 0x4, scoped, tag = 'scoped memory for decoder_forward.1']
    %12 = vsyncpa [#allocation3], 0
    %13 = vsyncpa [#allocation5], 0
    %14 = vsyncpa [#allocation8], 0
    %15 = vsyncpa [#allocation11], 0
    // Predicated region
    $region2: #{decoder_forward.1} parent=1 // pred_check
      _
    $region3: #{decoder_forward.1} parent=1 // pred_check_branch
      %17 = sbr.rel (0) target = $region5
    $region4: #{decoder_forward.1} parent=1 // pred_region
      _
    $region5: #{decoder_forward.1} parent=1 // pred_fallthru
      _
    // Predicated region
    $region6: #{decoder_forward.1} parent=1 // pred_check
      _
    $region7: #{decoder_forward.1} parent=1 // pred_check_branch
      %19 = sbr.rel (0) target = $region9
    $region8: #{decoder_forward.1} parent=1 // pred_region
      %s21 = ssub.s32 8192, 8192
      %22 = vsyncadd [#allocation3], %s21
      %s23 = sshll.u32 [#allocation2], 4
      %s24 = int_to_ptr.vmem [resolvable:$true] %s23
      %29 = dma.hbm_to_vmem [thread:$0]  %s1, 8192, %s24, [#allocation3], 256, 256, 16
    $region9: #{decoder_forward.1} parent=1 // pred_fallthru
      _
    // Predicated region
    $region10: #{decoder_forward.1} parent=1 // pred_check
      _
    $region11: #{decoder_forward.1} parent=1 // pred_check_branch
      %31 = sbr.rel (0) target = $region13
    $region12: #{decoder_forward.1} parent=1 // pred_region
      %s33 = ssub.s32 64, 64
      %34 = vsyncadd [#allocation5], %s33
      %s36 = sshll.u32 [#allocation4], 4
      %s37 = int_to_ptr.vmem [resolvable:$true] %s36
      %39 = dma.hbm_to_vmem [thread:$0]  %s2, 64, %s37, [#allocation5]
    $region13: #{decoder_forward.1} parent=1 // pred_fallthru
      _
    // Predicated region
    $region14: #{decoder_forward.1} parent=1 // pred_check
      _
    $region15: #{decoder_forward.1} parent=1 // pred_check_branch
      %41 = sbr.rel (0) target = $region17
    $region16: #{decoder_forward.1} parent=1 // pred_region
      %s43 = ssub.s32 32768, 32768
      %44 = vsyncadd [#allocation5], %s43
      %s45 = sshll.u32 [#allocation6], 4
      %s46 = int_to_ptr.vmem [resolvable:$true] %s45
      %51 = dma.hbm_to_vmem [thread:$0]  %s3, 32768, %s46, [#allocation5], 512, 512, 32
    $region17: #{decoder_forward.1} parent=1 // pred_fallthru
      _
    // Predicated region
    $region18: #{decoder_forward.1} parent=1 // pred_check
      _
    $region19: #{decoder_forward.1} parent=1 // pred_check_branch
      %53 = sbr.rel (0) target = $region21
    $region20: #{decoder_forward.1} parent=1 // pred_region
      %s55 = ssub.s32 128, 128
      %56 = vsyncadd [#allocation8], %s55
      %s58 = sshll.u32 [#allocation7], 4
      %s59 = int_to_ptr.vmem [resolvable:$true] %s58
      %61 = dma.hbm_to_vmem [thread:$0]  %s4, 128, %s59, [#allocation8]
    $region21: #{decoder_forward.1} parent=1 // pred_fallthru
      _
    // Predicated region
    $region22: #{decoder_forward.1} parent=1 // pred_check
      _
    $region23: #{decoder_forward.1} parent=1 // pred_check_branch
      %63 = sbr.rel (0) target = $region25
    $region24: #{decoder_forward.1} parent=1 // pred_region
      %s65 = ssub.s32 57344, 57344
      %66 = vsyncadd [#allocation8], %s65
      %s67 = sshll.u32 [#allocation9], 4
      %s68 = int_to_ptr.vmem [resolvable:$true] %s67
      %73 = dma.hbm_to_vmem [thread:$0]  %s5, 57344, %s68, [#allocation8], 448, 448, 28
    $region25: #{decoder_forward.1} parent=1 // pred_fallthru
      _
    // Predicated region
    $region26: #{decoder_forward.1} parent=1 // pred_check
      _
    $region27: #{decoder_forward.1} parent=1 // pred_check_branch
      %75 = sbr.rel (0) target = $region29
    $region28: #{decoder_forward.1} parent=1 // pred_region
      %s77 = ssub.s32 112, 112
      %78 = vsyncadd [#allocation11], %s77
      %s80 = sshll.u32 [#allocation10], 4
      %s81 = int_to_ptr.vmem [resolvable:$true] %s80
      %83 = dma.hbm_to_vmem [thread:$0]  %s6, 112, %s81, [#allocation11]
    $region29: #{decoder_forward.1} parent=1 // pred_fallthru
      _
    // Predicated region
    $region30: #{decoder_forward.1} parent=1 // pred_check
      _
    $region31: #{decoder_forward.1} parent=1 // pred_check_branch
      %85 = sbr.rel (0) target = $region33
    $region32: #{decoder_forward.1} parent=1 // pred_region
      %86 = dma.done [#allocation3], 8192
    $region33: #{decoder_forward.1} parent=1 // pred_fallthru
      _
    // Predicated region
    $region34: #{decoder_forward.1} parent=1 // pred_check
      _
    $region35: #{decoder_forward.1} parent=1 // pred_check_branch
      %88 = sbr.rel (0) target = $region37
    $region36: #{decoder_forward.1} parent=1 // pred_region
      %89 = dma.done [#allocation5], 64
    $region37: #{decoder_forward.1} parent=1 // pred_fallthru
      _
    // Predicated region
    $region38: #{decoder_forward.1} parent=1 // pred_check
      _
    $region39: #{decoder_forward.1} parent=1 // pred_check_branch
      %91 = sbr.rel (0) target = $region41
    $region40: #{decoder_forward.1} parent=1 // pred_region
      %92 = dma.done [#allocation5], 32768
    $region41: #{decoder_forward.1} parent=1 // pred_fallthru
      _
    // Predicated region
    $region42: #{decoder_forward.1} parent=1 // pred_check
      _
    $region43: #{decoder_forward.1} parent=1 // pred_check_branch
      %94 = sbr.rel (0) target = $region45
    $region44: #{decoder_forward.1} parent=1 // pred_region
      %95 = dma.done [#allocation8], 128
    $region45: #{decoder_forward.1} parent=1 // pred_fallthru
      _
    // Predicated region
    $region46: #{decoder_forward.1} parent=1 // pred_check
      _
    $region47: #{decoder_forward.1} parent=1 // pred_check_branch
      %97 = sbr.rel (0) target = $region49
    $region48: #{decoder_forward.1} parent=1 // pred_region
      %98 = dma.done [#allocation8], 57344
    $region49: #{decoder_forward.1} parent=1 // pred_fallthru
      _
    // Predicated region
    $region50: #{decoder_forward.1} parent=1 // pred_check
      _
    $region51: #{decoder_forward.1} parent=1 // pred_check_branch
      %100 = sbr.rel (0) target = $region53
    $region52: #{decoder_forward.1} parent=1 // pred_region
      %101 = dma.done [#allocation11], 112
    $region53: #{decoder_forward.1} parent=1 // pred_fallthru
      _
    %v103 = vld [vmem:[%s0] sm:$0xff]
    %v104 = vld [vmem:[#allocation2] sm:$0xff]
    %v105 = vld [vmem:[#allocation2 + $0x8] sm:$0xff]
    %v106 = vld [vmem:[#allocation2 + $0x10] sm:$0xff]
    %v107 = vld [vmem:[#allocation2 + $0x18] sm:$0xff]
    %v108 = vld [vmem:[#allocation2 + $0x20] sm:$0xff]
    %v109 = vld [vmem:[#allocation2 + $0x28] sm:$0xff]
    %v110 = vld [vmem:[#allocation2 + $0x30] sm:$0xff]
    %v111 = vld [vmem:[#allocation2 + $0x38] sm:$0xff]
    %v112 = vld [vmem:[#allocation2 + $0x40] sm:$0xff]
    %v113 = vld [vmem:[#allocation2 + $0x48] sm:$0xff]
    %v114 = vld [vmem:[#allocation2 + $0x50] sm:$0xff]
    %v115 = vld [vmem:[#allocation2 + $0x58] sm:$0xff]
    %v116 = vld [vmem:[#allocation2 + $0x60] sm:$0xff]
    %v117 = vld [vmem:[#allocation2 + $0x68] sm:$0xff]
    %v118 = vld [vmem:[#allocation2 + $0x70] sm:$0xff]
    %v119 = vld [vmem:[#allocation2 + $0x78] sm:$0xff]
    %v120 = vld [vmem:[#allocation2 + $0x80] sm:$0xff]
    %v121 = vld [vmem:[#allocation2 + $0x88] sm:$0xff]
    %v122 = vld [vmem:[#allocation2 + $0x90] sm:$0xff]
    %v123 = vld [vmem:[#allocation2 + $0x98] sm:$0xff]
    %v124 = vld [vmem:[#allocation2 + $0xa0] sm:$0xff]
    %v125 = vld [vmem:[#allocation2 + $0xa8] sm:$0xff]
    %v126 = vld [vmem:[#allocation2 + $0xb0] sm:$0xff]
    %v127 = vld [vmem:[#allocation2 + $0xb8] sm:$0xff]
    %v128 = vld [vmem:[#allocation2 + $0xc0] sm:$0xff]
    %v129 = vld [vmem:[#allocation2 + $0xc8] sm:$0xff]
    %v130 = vld [vmem:[#allocation2 + $0xd0] sm:$0xff]
    %v131 = vld [vmem:[#allocation2 + $0xd8] sm:$0xff]
    %v132 = vld [vmem:[#allocation2 + $0xe0] sm:$0xff]
    %v133 = vld [vmem:[#allocation2 + $0xe8] sm:$0xff]
    %v134 = vld [vmem:[#allocation2 + $0xf0] sm:$0xff]
    %v135 = vld [vmem:[#allocation2 + $0xf8] sm:$0xff]
    %v136 = vld [vmem:[#allocation2 + $0x100] sm:$0xff]
    %v137 = vld [vmem:[#allocation2 + $0x108] sm:$0xff]
    %v138 = vld [vmem:[#allocation2 + $0x110] sm:$0xff]
    %v139 = vld [vmem:[#allocation2 + $0x118] sm:$0xff]
    %v140 = vld [vmem:[#allocation2 + $0x120] sm:$0xff]
    %v141 = vld [vmem:[#allocation2 + $0x128] sm:$0xff]
    %v142 = vld [vmem:[#allocation2 + $0x130] sm:$0xff]
    %v143 = vld [vmem:[#allocation2 + $0x138] sm:$0xff]
    %v144 = vld [vmem:[#allocation2 + $0x140] sm:$0xff]
    %v145 = vld [vmem:[#allocation2 + $0x148] sm:$0xff]
    %v146 = vld [vmem:[#allocation2 + $0x150] sm:$0xff]
    %v147 = vld [vmem:[#allocation2 + $0x158] sm:$0xff]
    %v148 = vld [vmem:[#allocation2 + $0x160] sm:$0xff]
    %v149 = vld [vmem:[#allocation2 + $0x168] sm:$0xff]
    %v150 = vld [vmem:[#allocation2 + $0x170] sm:$0xff]
    %v151 = vld [vmem:[#allocation2 + $0x178] sm:$0xff]
    %v152 = vld [vmem:[#allocation2 + $0x180] sm:$0xff]
    %v153 = vld [vmem:[#allocation2 + $0x188] sm:$0xff]
    %v154 = vld [vmem:[#allocation2 + $0x190] sm:$0xff]
    %v155 = vld [vmem:[#allocation2 + $0x198] sm:$0xff]
    %v156 = vld [vmem:[#allocation2 + $0x1a0] sm:$0xff]
    %v157 = vld [vmem:[#allocation2 + $0x1a8] sm:$0xff]
    %v158 = vld [vmem:[#allocation2 + $0x1b0] sm:$0xff]
    %v159 = vld [vmem:[#allocation2 + $0x1b8] sm:$0xff]
    %v160 = vld [vmem:[#allocation2 + $0x1c0] sm:$0xff]
    %v161 = vld [vmem:[#allocation2 + $0x1c8] sm:$0xff]
    %v162 = vld [vmem:[#allocation2 + $0x1d0] sm:$0xff]
    %v163 = vld [vmem:[#allocation2 + $0x1d8] sm:$0xff]
    %v164 = vld [vmem:[#allocation2 + $0x1e0] sm:$0xff]
    %v165 = vld [vmem:[#allocation2 + $0x1e8] sm:$0xff]
    %v166 = vld [vmem:[#allocation2 + $0x1f0] sm:$0xff]
    %v167 = vld [vmem:[#allocation2 + $0x1f8] sm:$0xff]
    %v168 = vld [vmem:[#allocation4] sm:$0xf]
    %v170 = vlaneseq
    %v171 = vshrl.u32 %v170, 7
    %v172 = vsub.s32 0, %v171
    %v173 = vrot.slane %v168, %v172
    %v174 = vlaneseq
    %v175 = vshrl.u32 %v174, 7
    %v176 = vsub.s32 1, %v175
    %v177 = vrot.slane %v168, %v176
    %v178 = vlaneseq
    %v179 = vshrl.u32 %v178, 7
    %v180 = vsub.s32 2, %v179
    %v181 = vrot.slane %v168, %v180
    %v182 = vlaneseq
    %v183 = vshrl.u32 %v182, 7
    %v184 = vsub.s32 3, %v183
    %v185 = vrot.slane %v168, %v184
    %v191 = vunpack.c.l.b16 %v103
    %v192 = vunpack.c.h.b16 %v103
    %v193 = vpack.c.b16 %v191, %v191
    %v194 = vpack.c.b16 %v192, %v192
    %v261 = vunpack.c.l.b16 %v104
    %v262 = vunpack.c.h.b16 %v104
    %v263 = vunpack.c.l.b16 %v105
    %v264 = vunpack.c.h.b16 %v105
    %v265 = vunpack.c.l.b16 %v106
    %v266 = vunpack.c.h.b16 %v106
    %v267 = vunpack.c.l.b16 %v107
    %v268 = vunpack.c.h.b16 %v107
    %v269 = vunpack.c.l.b16 %v108
    %v270 = vunpack.c.h.b16 %v108
    %v271 = vunpack.c.l.b16 %v109
    %v272 = vunpack.c.h.b16 %v109
    %v273 = vunpack.c.l.b16 %v110
    %v274 = vunpack.c.h.b16 %v110
    %v275 = vunpack.c.l.b16 %v111
    %v276 = vunpack.c.h.b16 %v111
    %v277 = vunpack.c.l.b16 %v112
    %v278 = vunpack.c.h.b16 %v112
    %v279 = vunpack.c.l.b16 %v113
    %v280 = vunpack.c.h.b16 %v113
    %v281 = vunpack.c.l.b16 %v114
    %v282 = vunpack.c.h.b16 %v114
    %v283 = vunpack.c.l.b16 %v115
    %v284 = vunpack.c.h.b16 %v115
    %v285 = vunpack.c.l.b16 %v116
    %v286 = vunpack.c.h.b16 %v116
    %v287 = vunpack.c.l.b16 %v117
    %v288 = vunpack.c.h.b16 %v117
    %v289 = vunpack.c.l.b16 %v118
    %v290 = vunpack.c.h.b16 %v118
    %v291 = vunpack.c.l.b16 %v119
    %v292 = vunpack.c.h.b16 %v119
    %v293 = vunpack.c.l.b16 %v120
    %v294 = vunpack.c.h.b16 %v120
    %v295 = vunpack.c.l.b16 %v121
    %v296 = vunpack.c.h.b16 %v121
    %v297 = vunpack.c.l.b16 %v122
    %v298 = vunpack.c.h.b16 %v122
    %v299 = vunpack.c.l.b16 %v123
    %v300 = vunpack.c.h.b16 %v123
    %v301 = vunpack.c.l.b16 %v124
    %v302 = vunpack.c.h.b16 %v124
    %v303 = vunpack.c.l.b16 %v125
    %v304 = vunpack.c.h.b16 %v125
    %v305 = vunpack.c.l.b16 %v126
    %v306 = vunpack.c.h.b16 %v126
    %v307 = vunpack.c.l.b16 %v127
    %v308 = vunpack.c.h.b16 %v127
    %v309 = vunpack.c.l.b16 %v128
    %v310 = vunpack.c.h.b16 %v128
    %v311 = vunpack.c.l.b16 %v129
    %v312 = vunpack.c.h.b16 %v129
    %v313 = vunpack.c.l.b16 %v130
    %v314 = vunpack.c.h.b16 %v130
    %v315 = vunpack.c.l.b16 %v131
    %v316 = vunpack.c.h.b16 %v131
    %v317 = vunpack.c.l.b16 %v132
    %v318 = vunpack.c.h.b16 %v132
    %v319 = vunpack.c.l.b16 %v133
    %v320 = vunpack.c.h.b16 %v133
    %v321 = vunpack.c.l.b16 %v134
    %v322 = vunpack.c.h.b16 %v134
    %v323 = vunpack.c.l.b16 %v135
    %v324 = vunpack.c.h.b16 %v135
    %v325 = vunpack.c.l.b16 %v136
    %v326 = vunpack.c.h.b16 %v136
    %v327 = vunpack.c.l.b16 %v137
    %v328 = vunpack.c.h.b16 %v137
    %v329 = vunpack.c.l.b16 %v138
    %v330 = vunpack.c.h.b16 %v138
    %v331 = vunpack.c.l.b16 %v139
    %v332 = vunpack.c.h.b16 %v139
    %v333 = vunpack.c.l.b16 %v140
    %v334 = vunpack.c.h.b16 %v140
    %v335 = vunpack.c.l.b16 %v141
    %v336 = vunpack.c.h.b16 %v141
    %v337 = vunpack.c.l.b16 %v142
    %v338 = vunpack.c.h.b16 %v142
    %v339 = vunpack.c.l.b16 %v143
    %v340 = vunpack.c.h.b16 %v143
    %v341 = vunpack.c.l.b16 %v144
    %v342 = vunpack.c.h.b16 %v144
    %v343 = vunpack.c.l.b16 %v145
    %v344 = vunpack.c.h.b16 %v145
    %v345 = vunpack.c.l.b16 %v146
    %v346 = vunpack.c.h.b16 %v146
    %v347 = vunpack.c.l.b16 %v147
    %v348 = vunpack.c.h.b16 %v147
    %v349 = vunpack.c.l.b16 %v148
    %v350 = vunpack.c.h.b16 %v148
    %v351 = vunpack.c.l.b16 %v149
    %v352 = vunpack.c.h.b16 %v149
    %v353 = vunpack.c.l.b16 %v150
    %v354 = vunpack.c.h.b16 %v150
    %v355 = vunpack.c.l.b16 %v151
    %v356 = vunpack.c.h.b16 %v151
    %v357 = vunpack.c.l.b16 %v152
    %v358 = vunpack.c.h.b16 %v152
    %v359 = vunpack.c.l.b16 %v153
    %v360 = vunpack.c.h.b16 %v153
    %v361 = vunpack.c.l.b16 %v154
    %v362 = vunpack.c.h.b16 %v154
    %v363 = vunpack.c.l.b16 %v155
    %v364 = vunpack.c.h.b16 %v155
    %v365 = vunpack.c.l.b16 %v156
    %v366 = vunpack.c.h.b16 %v156
    %v367 = vunpack.c.l.b16 %v157
    %v368 = vunpack.c.h.b16 %v157
    %v369 = vunpack.c.l.b16 %v158
    %v370 = vunpack.c.h.b16 %v158
    %v371 = vunpack.c.l.b16 %v159
    %v372 = vunpack.c.h.b16 %v159
    %v373 = vunpack.c.l.b16 %v160
    %v374 = vunpack.c.h.b16 %v160
    %v375 = vunpack.c.l.b16 %v161
    %v376 = vunpack.c.h.b16 %v161
    %v377 = vunpack.c.l.b16 %v162
    %v378 = vunpack.c.h.b16 %v162
    %v379 = vunpack.c.l.b16 %v163
    %v380 = vunpack.c.h.b16 %v163
    %v381 = vunpack.c.l.b16 %v164
    %v382 = vunpack.c.h.b16 %v164
    %v383 = vunpack.c.l.b16 %v165
    %v384 = vunpack.c.h.b16 %v165
    %v385 = vunpack.c.l.b16 %v166
    %v386 = vunpack.c.h.b16 %v166
    %v387 = vunpack.c.l.b16 %v167
    %v388 = vunpack.c.h.b16 %v167
    %v389 = vpack.c.b16 %v265, %v261
    %v390 = vpack.c.b16 %v266, %v262
    %v391 = vpack.c.b16 %v267, %v263
    %v392 = vpack.c.b16 %v268, %v264
    %v393 = vpack.c.b16 %v273, %v269
    %v394 = vpack.c.b16 %v274, %v270
    %v395 = vpack.c.b16 %v275, %v271
    %v396 = vpack.c.b16 %v276, %v272
    %v397 = vpack.c.b16 %v281, %v277
    %v398 = vpack.c.b16 %v282, %v278
    %v399 = vpack.c.b16 %v283, %v279
    %v400 = vpack.c.b16 %v284, %v280
    %v401 = vpack.c.b16 %v289, %v285
    %v402 = vpack.c.b16 %v290, %v286
    %v403 = vpack.c.b16 %v291, %v287
    %v404 = vpack.c.b16 %v292, %v288
    %v405 = vpack.c.b16 %v297, %v293
    %v406 = vpack.c.b16 %v298, %v294
    %v407 = vpack.c.b16 %v299, %v295
    %v408 = vpack.c.b16 %v300, %v296
    %v409 = vpack.c.b16 %v305, %v301
    %v410 = vpack.c.b16 %v306, %v302
    %v411 = vpack.c.b16 %v307, %v303
    %v412 = vpack.c.b16 %v308, %v304
    %v413 = vpack.c.b16 %v313, %v309
    %v414 = vpack.c.b16 %v314, %v310
    %v415 = vpack.c.b16 %v315, %v311
    %v416 = vpack.c.b16 %v316, %v312
    %v417 = vpack.c.b16 %v321, %v317
    %v418 = vpack.c.b16 %v322, %v318
    %v419 = vpack.c.b16 %v323, %v319
    %v420 = vpack.c.b16 %v324, %v320
    %v421 = vpack.c.b16 %v329, %v325
    %v422 = vpack.c.b16 %v330, %v326
    %v423 = vpack.c.b16 %v331, %v327
    %v424 = vpack.c.b16 %v332, %v328
    %v425 = vpack.c.b16 %v337, %v333
    %v426 = vpack.c.b16 %v338, %v334
    %v427 = vpack.c.b16 %v339, %v335
    %v428 = vpack.c.b16 %v340, %v336
    %v429 = vpack.c.b16 %v345, %v341
    %v430 = vpack.c.b16 %v346, %v342
    %v431 = vpack.c.b16 %v347, %v343
    %v432 = vpack.c.b16 %v348, %v344
    %v433 = vpack.c.b16 %v353, %v349
    %v434 = vpack.c.b16 %v354, %v350
    %v435 = vpack.c.b16 %v355, %v351
    %v436 = vpack.c.b16 %v356, %v352
    %v437 = vpack.c.b16 %v361, %v357
    %v438 = vpack.c.b16 %v362, %v358
    %v439 = vpack.c.b16 %v363, %v359
    %v440 = vpack.c.b16 %v364, %v360
    %v441 = vpack.c.b16 %v369, %v365
    %v442 = vpack.c.b16 %v370, %v366
    %v443 = vpack.c.b16 %v371, %v367
    %v444 = vpack.c.b16 %v372, %v368
    %v445 = vpack.c.b16 %v377, %v373
    %v446 = vpack.c.b16 %v378, %v374
    %v447 = vpack.c.b16 %v379, %v375
    %v448 = vpack.c.b16 %v380, %v376
    %v449 = vpack.c.b16 %v385, %v381
    %v450 = vpack.c.b16 %v386, %v382
    %v451 = vpack.c.b16 %v387, %v383
    %v452 = vpack.c.b16 %v388, %v384
    %517 = vmatprep.subr.bf16.mxu0 %v390
    %518 = vmatpush1.bf16.msra.mxu0 %v389
    %519 = vmatprep.subr.bf16.mxu0 %v394
    %520 = vmatpush1.bf16.msra.mxu0 %v393
    %521 = vmatprep.subr.bf16.mxu0 %v398
    %522 = vmatpush1.bf16.msra.mxu0 %v397
    %523 = vmatprep.subr.bf16.mxu0 %v402
    %524 = vmatpush1.bf16.msra.mxu0 %v401
    %525 = vmatprep.subr.bf16.mxu0 %v406
    %526 = vmatpush1.bf16.msra.mxu0 %v405
    %527 = vmatprep.subr.bf16.mxu0 %v410
    %528 = vmatpush1.bf16.msra.mxu0 %v409
    %529 = vmatprep.subr.bf16.mxu0 %v414
    %530 = vmatpush1.bf16.msra.mxu0 %v413
    %531 = vmatprep.subr.bf16.mxu0 %v418
    %532 = vmatpush1.bf16.msra.mxu0 %v417
    %533 = vmatprep.subr.bf16.mxu0 %v422
    %534 = vmatpush1.bf16.msra.mxu0 %v421
    %535 = vmatprep.subr.bf16.mxu0 %v426
    %536 = vmatpush1.bf16.msra.mxu0 %v425
    %537 = vmatprep.subr.bf16.mxu0 %v430
    %538 = vmatpush1.bf16.msra.mxu0 %v429
    %539 = vmatprep.subr.bf16.mxu0 %v434
    %540 = vmatpush1.bf16.msra.mxu0 %v433
    %541 = vmatprep.subr.bf16.mxu0 %v438
    %542 = vmatpush1.bf16.msra.mxu0 %v437
    %543 = vmatprep.subr.bf16.mxu0 %v442
    %544 = vmatpush1.bf16.msra.mxu0 %v441
    %545 = vmatprep.subr.bf16.mxu0 %v446
    %546 = vmatpush1.bf16.msra.mxu0 %v445
    %547 = vmatprep.subr.bf16.mxu0 %v450
    %548 = vmatpush1.bf16.msra.mxu0 %v449
    %549 = vmatprep.mubr.bf16.mxu0 %v194
    %550 = vmatmul.mubr.bf16.gmra.mrb[0].mxu0 %v193
    %v551 = vpop.f32.mrb[0].mxu0
    %v552 = vadd.f32 %v173, %v551
    %v553 = vpop.f32.mrb[0].mxu0
    %v554 = vadd.f32 %v177, %v553
    %v555 = vpop.f32.mrb[0].mxu0
    %v556 = vpop.f32.mrb[0].mxu0
    %557 = vdwg.mxu0
    %558 = vmatprep.subr.bf16.mxu0 %v392
    %559 = vmatpush1.bf16.msra.mxu0 %v391
    %560 = vmatprep.subr.bf16.mxu0 %v396
    %561 = vmatpush1.bf16.msra.mxu0 %v395
    %562 = vmatprep.subr.bf16.mxu0 %v400
    %563 = vmatpush1.bf16.msra.mxu0 %v399
    %564 = vmatprep.subr.bf16.mxu0 %v404
    %565 = vmatpush1.bf16.msra.mxu0 %v403
    %566 = vmatprep.subr.bf16.mxu0 %v408
    %567 = vmatpush1.bf16.msra.mxu0 %v407
    %568 = vmatprep.subr.bf16.mxu0 %v412
    %569 = vmatpush1.bf16.msra.mxu0 %v411
    %570 = vmatprep.subr.bf16.mxu0 %v416
    %571 = vmatpush1.bf16.msra.mxu0 %v415
    %572 = vmatprep.subr.bf16.mxu0 %v420
    %573 = vmatpush1.bf16.msra.mxu0 %v419
    %574 = vmatprep.subr.bf16.mxu0 %v424
    %575 = vmatpush1.bf16.msra.mxu0 %v423
    %576 = vmatprep.subr.bf16.mxu0 %v428
    %577 = vmatpush1.bf16.msra.mxu0 %v427
    %578 = vmatprep.subr.bf16.mxu0 %v432
    %579 = vmatpush1.bf16.msra.mxu0 %v431
    %580 = vmatprep.subr.bf16.mxu0 %v436
    %581 = vmatpush1.bf16.msra.mxu0 %v435
    %582 = vmatprep.subr.bf16.mxu0 %v440
    %583 = vmatpush1.bf16.msra.mxu0 %v439
    %584 = vmatprep.subr.bf16.mxu0 %v444
    %585 = vmatpush1.bf16.msra.mxu0 %v443
    %586 = vmatprep.subr.bf16.mxu0 %v448
    %587 = vmatpush1.bf16.msra.mxu0 %v447
    %588 = vmatprep.subr.bf16.mxu0 %v452
    %589 = vmatpush1.bf16.msra.mxu0 %v451
    %590 = vmatprep.mubr.bf16.mxu0 %v194
    %591 = vmatmul.mubr.bf16.gmra.mrb[0].mxu0 %v193
    %v592 = vpop.f32.mrb[0].mxu0
    %v593 = vadd.f32 %v181, %v592
    %v594 = vpop.f32.mrb[0].mxu0
    %v595 = vadd.f32 %v185, %v594
    %v596 = vpop.f32.mrb[0].mxu0
    %v597 = vpop.f32.mrb[0].mxu0
    %598 = vdwg.mxu0
    %v599 = vmax.f32 %v552, 0.0
    %v600 = vmax.f32 %v554, 0.0
    %v601 = vmax.f32 %v593, 0.0
    %v602 = vmax.f32 %v595, 0.0
    %v603 = vpack.c.bf16 %v599, %v599
    %v604 = vpack.c.bf16 %v600, %v600
    %v605 = vpack.c.bf16 %v601, %v601
    %v606 = vpack.c.bf16 %v602, %v602
    %v607 = vld [vmem:[#allocation6] sm:$0xff]
    %v608 = vld [vmem:[#allocation6 + $0x8] sm:$0xff]
    %v609 = vld [vmem:[#allocation6 + $0x10] sm:$0xff]
    %v610 = vld [vmem:[#allocation6 + $0x18] sm:$0xff]
    %v611 = vld [vmem:[#allocation6 + $0x20] sm:$0xff]
    %v612 = vld [vmem:[#allocation6 + $0x28] sm:$0xff]
    %v613 = vld [vmem:[#allocation6 + $0x30] sm:$0xff]
    %v614 = vld [vmem:[#allocation6 + $0x38] sm:$0xff]
    %v615 = vld [vmem:[#allocation6 + $0x40] sm:$0xff]
    %v616 = vld [vmem:[#allocation6 + $0x48] sm:$0xff]
    %v617 = vld [vmem:[#allocation6 + $0x50] sm:$0xff]
    %v618 = vld [vmem:[#allocation6 + $0x58] sm:$0xff]
    %v619 = vld [vmem:[#allocation6 + $0x60] sm:$0xff]
    %v620 = vld [vmem:[#allocation6 + $0x68] sm:$0xff]
    %v621 = vld [vmem:[#allocation6 + $0x70] sm:$0xff]
    %v622 = vld [vmem:[#allocation6 + $0x78] sm:$0xff]
    %v623 = vld [vmem:[#allocation6 + $0x80] sm:$0xff]
    %v624 = vld [vmem:[#allocation6 + $0x88] sm:$0xff]
    %v625 = vld [vmem:[#allocation6 + $0x90] sm:$0xff]
    %v626 = vld [vmem:[#allocation6 + $0x98] sm:$0xff]
    %v627 = vld [vmem:[#allocation6 + $0xa0] sm:$0xff]
    %v628 = vld [vmem:[#allocation6 + $0xa8] sm:$0xff]
    %v629 = vld [vmem:[#allocation6 + $0xb0] sm:$0xff]
    %v630 = vld [vmem:[#allocation6 + $0xb8] sm:$0xff]
    %v631 = vld [vmem:[#allocation6 + $0xc0] sm:$0xff]
    %v632 = vld [vmem:[#allocation6 + $0xc8] sm:$0xff]
    %v633 = vld [vmem:[#allocation6 + $0xd0] sm:$0xff]
    %v634 = vld [vmem:[#allocation6 + $0xd8] sm:$0xff]
    %v635 = vld [vmem:[#allocation6 + $0xe0] sm:$0xff]
    %v636 = vld [vmem:[#allocation6 + $0xe8] sm:$0xff]
    %v637 = vld [vmem:[#allocation6 + $0xf0] sm:$0xff]
    %v638 = vld [vmem:[#allocation6 + $0xf8] sm:$0xff]
    %v639 = vld [vmem:[#allocation6 + $0x100] sm:$0xff]
    %v640 = vld [vmem:[#allocation6 + $0x108] sm:$0xff]
    %v641 = vld [vmem:[#allocation6 + $0x110] sm:$0xff]
    %v642 = vld [vmem:[#allocation6 + $0x118] sm:$0xff]
    %v643 = vld [vmem:[#allocation6 + $0x120] sm:$0xff]
    %v644 = vld [vmem:[#allocation6 + $0x128] sm:$0xff]
    %v645 = vld [vmem:[#allocation6 + $0x130] sm:$0xff]
    %v646 = vld [vmem:[#allocation6 + $0x138] sm:$0xff]
    %v647 = vld [vmem:[#allocation6 + $0x140] sm:$0xff]
    %v648 = vld [vmem:[#allocation6 + $0x148] sm:$0xff]
    %v649 = vld [vmem:[#allocation6 + $0x150] sm:$0xff]
    %v650 = vld [vmem:[#allocation6 + $0x158] sm:$0xff]
    %v651 = vld [vmem:[#allocation6 + $0x160] sm:$0xff]
    %v652 = vld [vmem:[#allocation6 + $0x168] sm:$0xff]
    %v653 = vld [vmem:[#allocation6 + $0x170] sm:$0xff]
    %v654 = vld [vmem:[#allocation6 + $0x178] sm:$0xff]
    %v655 = vld [vmem:[#allocation6 + $0x180] sm:$0xff]
    %v656 = vld [vmem:[#allocation6 + $0x188] sm:$0xff]
    %v657 = vld [vmem:[#allocation6 + $0x190] sm:$0xff]
    %v658 = vld [vmem:[#allocation6 + $0x198] sm:$0xff]
    %v659 = vld [vmem:[#allocation6 + $0x1a0] sm:$0xff]
    %v660 = vld [vmem:[#allocation6 + $0x1a8] sm:$0xff]
    %v661 = vld [vmem:[#allocation6 + $0x1b0] sm:$0xff]
    %v662 = vld [vmem:[#allocation6 + $0x1b8] sm:$0xff]
    %v663 = vld [vmem:[#allocation6 + $0x1c0] sm:$0xff]
    %v664 = vld [vmem:[#allocation6 + $0x1c8] sm:$0xff]
    %v665 = vld [vmem:[#allocation6 + $0x1d0] sm:$0xff]
    %v666 = vld [vmem:[#allocation6 + $0x1d8] sm:$0xff]
    %v667 = vld [vmem:[#allocation6 + $0x1e0] sm:$0xff]
    %v668 = vld [vmem:[#allocation6 + $0x1e8] sm:$0xff]
    %v669 = vld [vmem:[#allocation6 + $0x1f0] sm:$0xff]
    %v670 = vld [vmem:[#allocation6 + $0x1f8] sm:$0xff]
    %v671 = vld [vmem:[#allocation6 + $0x200] sm:$0xff]
    %v672 = vld [vmem:[#allocation6 + $0x208] sm:$0xff]
    %v673 = vld [vmem:[#allocation6 + $0x210] sm:$0xff]
    %v674 = vld [vmem:[#allocation6 + $0x218] sm:$0xff]
    %v675 = vld [vmem:[#allocation6 + $0x220] sm:$0xff]
    %v676 = vld [vmem:[#allocation6 + $0x228] sm:$0xff]
    %v677 = vld [vmem:[#allocation6 + $0x230] sm:$0xff]
    %v678 = vld [vmem:[#allocation6 + $0x238] sm:$0xff]
    %v679 = vld [vmem:[#allocation6 + $0x240] sm:$0xff]
    %v680 = vld [vmem:[#allocation6 + $0x248] sm:$0xff]
    %v681 = vld [vmem:[#allocation6 + $0x250] sm:$0xff]
    %v682 = vld [vmem:[#allocation6 + $0x258] sm:$0xff]
    %v683 = vld [vmem:[#allocation6 + $0x260] sm:$0xff]
    %v684 = vld [vmem:[#allocation6 + $0x268] sm:$0xff]
    %v685 = vld [vmem:[#allocation6 + $0x270] sm:$0xff]
    %v686 = vld [vmem:[#allocation6 + $0x278] sm:$0xff]
    %v687 = vld [vmem:[#allocation6 + $0x280] sm:$0xff]
    %v688 = vld [vmem:[#allocation6 + $0x288] sm:$0xff]
    %v689 = vld [vmem:[#allocation6 + $0x290] sm:$0xff]
    %v690 = vld [vmem:[#allocation6 + $0x298] sm:$0xff]
    %v691 = vld [vmem:[#allocation6 + $0x2a0] sm:$0xff]
    %v692 = vld [vmem:[#allocation6 + $0x2a8] sm:$0xff]
    %v693 = vld [vmem:[#allocation6 + $0x2b0] sm:$0xff]
    %v694 = vld [vmem:[#allocation6 + $0x2b8] sm:$0xff]
    %v695 = vld [vmem:[#allocation6 + $0x2c0] sm:$0xff]
    %v696 = vld [vmem:[#allocation6 + $0x2c8] sm:$0xff]
    %v697 = vld [vmem:[#allocation6 + $0x2d0] sm:$0xff]
    %v698 = vld [vmem:[#allocation6 + $0x2d8] sm:$0xff]
    %v699 = vld [vmem:[#allocation6 + $0x2e0] sm:$0xff]
    %v700 = vld [vmem:[#allocation6 + $0x2e8] sm:$0xff]
    %v701 = vld [vmem:[#allocation6 + $0x2f0] sm:$0xff]
    %v702 = vld [vmem:[#allocation6 + $0x2f8] sm:$0xff]
    %v703 = vld [vmem:[#allocation6 + $0x300] sm:$0xff]
    %v704 = vld [vmem:[#allocation6 + $0x308] sm:$0xff]
    %v705 = vld [vmem:[#allocation6 + $0x310] sm:$0xff]
    %v706 = vld [vmem:[#allocation6 + $0x318] sm:$0xff]
    %v707 = vld [vmem:[#allocation6 + $0x320] sm:$0xff]
    %v708 = vld [vmem:[#allocation6 + $0x328] sm:$0xff]
    %v709 = vld [vmem:[#allocation6 + $0x330] sm:$0xff]
    %v710 = vld [vmem:[#allocation6 + $0x338] sm:$0xff]
    %v711 = vld [vmem:[#allocation6 + $0x340] sm:$0xff]
    %v712 = vld [vmem:[#allocation6 + $0x348] sm:$0xff]
    %v713 = vld [vmem:[#allocation6 + $0x350] sm:$0xff]
    %v714 = vld [vmem:[#allocation6 + $0x358] sm:$0xff]
    %v715 = vld [vmem:[#allocation6 + $0x360] sm:$0xff]
    %v716 = vld [vmem:[#allocation6 + $0x368] sm:$0xff]
    %v717 = vld [vmem:[#allocation6 + $0x370] sm:$0xff]
    %v718 = vld [vmem:[#allocation6 + $0x378] sm:$0xff]
    %v719 = vld [vmem:[#allocation6 + $0x380] sm:$0xff]
    %v720 = vld [vmem:[#allocation6 + $0x388] sm:$0xff]
    %v721 = vld [vmem:[#allocation6 + $0x390] sm:$0xff]
    %v722 = vld [vmem:[#allocation6 + $0x398] sm:$0xff]
    %v723 = vld [vmem:[#allocation6 + $0x3a0] sm:$0xff]
    %v724 = vld [vmem:[#allocation6 + $0x3a8] sm:$0xff]
    %v725 = vld [vmem:[#allocation6 + $0x3b0] sm:$0xff]
    %v726 = vld [vmem:[#allocation6 + $0x3b8] sm:$0xff]
    %v727 = vld [vmem:[#allocation6 + $0x3c0] sm:$0xff]
    %v728 = vld [vmem:[#allocation6 + $0x3c8] sm:$0xff]
    %v729 = vld [vmem:[#allocation6 + $0x3d0] sm:$0xff]
    %v730 = vld [vmem:[#allocation6 + $0x3d8] sm:$0xff]
    %v731 = vld [vmem:[#allocation6 + $0x3e0] sm:$0xff]
    %v732 = vld [vmem:[#allocation6 + $0x3e8] sm:$0xff]
    %v733 = vld [vmem:[#allocation6 + $0x3f0] sm:$0xff]
    %v734 = vld [vmem:[#allocation6 + $0x3f8] sm:$0xff]
    %v735 = vld [vmem:[#allocation6 + $0x400] sm:$0xff]
    %v736 = vld [vmem:[#allocation6 + $0x408] sm:$0xff]
    %v737 = vld [vmem:[#allocation6 + $0x410] sm:$0xff]
    %v738 = vld [vmem:[#allocation6 + $0x418] sm:$0xff]
    %v739 = vld [vmem:[#allocation6 + $0x420] sm:$0xff]
    %v740 = vld [vmem:[#allocation6 + $0x428] sm:$0xff]
    %v741 = vld [vmem:[#allocation6 + $0x430] sm:$0xff]
    %v742 = vld [vmem:[#allocation6 + $0x438] sm:$0xff]
    %v743 = vld [vmem:[#allocation6 + $0x440] sm:$0xff]
    %v744 = vld [vmem:[#allocation6 + $0x448] sm:$0xff]
    %v745 = vld [vmem:[#allocation6 + $0x450] sm:$0xff]
    %v746 = vld [vmem:[#allocation6 + $0x458] sm:$0xff]
    %v747 = vld [vmem:[#allocation6 + $0x460] sm:$0xff]
    %v748 = vld [vmem:[#allocation6 + $0x468] sm:$0xff]
    %v749 = vld [vmem:[#allocation6 + $0x470] sm:$0xff]
    %v750 = vld [vmem:[#allocation6 + $0x478] sm:$0xff]
    %v751 = vld [vmem:[#allocation6 + $0x480] sm:$0xff]
    %v752 = vld [vmem:[#allocation6 + $0x488] sm:$0xff]
    %v753 = vld [vmem:[#allocation6 + $0x490] sm:$0xff]
    %v754 = vld [vmem:[#allocation6 + $0x498] sm:$0xff]
    %v755 = vld [vmem:[#allocation6 + $0x4a0] sm:$0xff]
    %v756 = vld [vmem:[#allocation6 + $0x4a8] sm:$0xff]
    %v757 = vld [vmem:[#allocation6 + $0x4b0] sm:$0xff]
    %v758 = vld [vmem:[#allocation6 + $0x4b8] sm:$0xff]
    %v759 = vld [vmem:[#allocation6 + $0x4c0] sm:$0xff]
    %v760 = vld [vmem:[#allocation6 + $0x4c8] sm:$0xff]
    %v761 = vld [vmem:[#allocation6 + $0x4d0] sm:$0xff]
    %v762 = vld [vmem:[#allocation6 + $0x4d8] sm:$0xff]
    %v763 = vld [vmem:[#allocation6 + $0x4e0] sm:$0xff]
    %v764 = vld [vmem:[#allocation6 + $0x4e8] sm:$0xff]
    %v765 = vld [vmem:[#allocation6 + $0x4f0] sm:$0xff]
    %v766 = vld [vmem:[#allocation6 + $0x4f8] sm:$0xff]
    %v767 = vld [vmem:[#allocation6 + $0x500] sm:$0xff]
    %v768 = vld [vmem:[#allocation6 + $0x508] sm:$0xff]
    %v769 = vld [vmem:[#allocation6 + $0x510] sm:$0xff]
    %v770 = vld [vmem:[#allocation6 + $0x518] sm:$0xff]
    %v771 = vld [vmem:[#allocation6 + $0x520] sm:$0xff]
    %v772 = vld [vmem:[#allocation6 + $0x528] sm:$0xff]
    %v773 = vld [vmem:[#allocation6 + $0x530] sm:$0xff]
    %v774 = vld [vmem:[#allocation6 + $0x538] sm:$0xff]
    %v775 = vld [vmem:[#allocation6 + $0x540] sm:$0xff]
    %v776 = vld [vmem:[#allocation6 + $0x548] sm:$0xff]
    %v777 = vld [vmem:[#allocation6 + $0x550] sm:$0xff]
    %v778 = vld [vmem:[#allocation6 + $0x558] sm:$0xff]
    %v779 = vld [vmem:[#allocation6 + $0x560] sm:$0xff]
    %v780 = vld [vmem:[#allocation6 + $0x568] sm:$0xff]
    %v781 = vld [vmem:[#allocation6 + $0x570] sm:$0xff]
    %v782 = vld [vmem:[#allocation6 + $0x578] sm:$0xff]
    %v783 = vld [vmem:[#allocation6 + $0x580] sm:$0xff]
    %v784 = vld [vmem:[#allocation6 + $0x588] sm:$0xff]
    %v785 = vld [vmem:[#allocation6 + $0x590] sm:$0xff]
    %v786 = vld [vmem:[#allocation6 + $0x598] sm:$0xff]
    %v787 = vld [vmem:[#allocation6 + $0x5a0] sm:$0xff]
    %v788 = vld [vmem:[#allocation6 + $0x5a8] sm:$0xff]
    %v789 = vld [vmem:[#allocation6 + $0x5b0] sm:$0xff]
    %v790 = vld [vmem:[#allocation6 + $0x5b8] sm:$0xff]
    %v791 = vld [vmem:[#allocation6 + $0x5c0] sm:$0xff]
    %v792 = vld [vmem:[#allocation6 + $0x5c8] sm:$0xff]
    %v793 = vld [vmem:[#allocation6 + $0x5d0] sm:$0xff]
    %v794 = vld [vmem:[#allocation6 + $0x5d8] sm:$0xff]
    %v795 = vld [vmem:[#allocation6 + $0x5e0] sm:$0xff]
    %v796 = vld [vmem:[#allocation6 + $0x5e8] sm:$0xff]
    %v797 = vld [vmem:[#allocation6 + $0x5f0] sm:$0xff]
    %v798 = vld [vmem:[#allocation6 + $0x5f8] sm:$0xff]
    %v799 = vld [vmem:[#allocation6 + $0x600] sm:$0xff]
    %v800 = vld [vmem:[#allocation6 + $0x608] sm:$0xff]
    %v801 = vld [vmem:[#allocation6 + $0x610] sm:$0xff]
    %v802 = vld [vmem:[#allocation6 + $0x618] sm:$0xff]
    %v803 = vld [vmem:[#allocation6 + $0x620] sm:$0xff]
    %v804 = vld [vmem:[#allocation6 + $0x628] sm:$0xff]
    %v805 = vld [vmem:[#allocation6 + $0x630] sm:$0xff]
    %v806 = vld [vmem:[#allocation6 + $0x638] sm:$0xff]
    %v807 = vld [vmem:[#allocation6 + $0x640] sm:$0xff]
    %v808 = vld [vmem:[#allocation6 + $0x648] sm:$0xff]
    %v809 = vld [vmem:[#allocation6 + $0x650] sm:$0xff]
    %v810 = vld [vmem:[#allocation6 + $0x658] sm:$0xff]
    %v811 = vld [vmem:[#allocation6 + $0x660] sm:$0xff]
    %v812 = vld [vmem:[#allocation6 + $0x668] sm:$0xff]
    %v813 = vld [vmem:[#allocation6 + $0x670] sm:$0xff]
    %v814 = vld [vmem:[#allocation6 + $0x678] sm:$0xff]
    %v815 = vld [vmem:[#allocation6 + $0x680] sm:$0xff]
    %v816 = vld [vmem:[#allocation6 + $0x688] sm:$0xff]
    %v817 = vld [vmem:[#allocation6 + $0x690] sm:$0xff]
    %v818 = vld [vmem:[#allocation6 + $0x698] sm:$0xff]
    %v819 = vld [vmem:[#allocation6 + $0x6a0] sm:$0xff]
    %v820 = vld [vmem:[#allocation6 + $0x6a8] sm:$0xff]
    %v821 = vld [vmem:[#allocation6 + $0x6b0] sm:$0xff]
    %v822 = vld [vmem:[#allocation6 + $0x6b8] sm:$0xff]
    %v823 = vld [vmem:[#allocation6 + $0x6c0] sm:$0xff]
    %v824 = vld [vmem:[#allocation6 + $0x6c8] sm:$0xff]
    %v825 = vld [vmem:[#allocation6 + $0x6d0] sm:$0xff]
    %v826 = vld [vmem:[#allocation6 + $0x6d8] sm:$0xff]
    %v827 = vld [vmem:[#allocation6 + $0x6e0] sm:$0xff]
    %v828 = vld [vmem:[#allocation6 + $0x6e8] sm:$0xff]
    %v829 = vld [vmem:[#allocation6 + $0x6f0] sm:$0xff]
    %v830 = vld [vmem:[#allocation6 + $0x6f8] sm:$0xff]
    %v831 = vld [vmem:[#allocation6 + $0x700] sm:$0xff]
    %v832 = vld [vmem:[#allocation6 + $0x708] sm:$0xff]
    %v833 = vld [vmem:[#allocation6 + $0x710] sm:$0xff]
    %v834 = vld [vmem:[#allocation6 + $0x718] sm:$0xff]
    %v835 = vld [vmem:[#allocation6 + $0x720] sm:$0xff]
    %v836 = vld [vmem:[#allocation6 + $0x728] sm:$0xff]
    %v837 = vld [vmem:[#allocation6 + $0x730] sm:$0xff]
    %v838 = vld [vmem:[#allocation6 + $0x738] sm:$0xff]
    %v839 = vld [vmem:[#allocation6 + $0x740] sm:$0xff]
    %v840 = vld [vmem:[#allocation6 + $0x748] sm:$0xff]
    %v841 = vld [vmem:[#allocation6 + $0x750] sm:$0xff]
    %v842 = vld [vmem:[#allocation6 + $0x758] sm:$0xff]
    %v843 = vld [vmem:[#allocation6 + $0x760] sm:$0xff]
    %v844 = vld [vmem:[#allocation6 + $0x768] sm:$0xff]
    %v845 = vld [vmem:[#allocation6 + $0x770] sm:$0xff]
    %v846 = vld [vmem:[#allocation6 + $0x778] sm:$0xff]
    %v847 = vld [vmem:[#allocation6 + $0x780] sm:$0xff]
    %v848 = vld [vmem:[#allocation6 + $0x788] sm:$0xff]
    %v849 = vld [vmem:[#allocation6 + $0x790] sm:$0xff]
    %v850 = vld [vmem:[#allocation6 + $0x798] sm:$0xff]
    %v851 = vld [vmem:[#allocation6 + $0x7a0] sm:$0xff]
    %v852 = vld [vmem:[#allocation6 + $0x7a8] sm:$0xff]
    %v853 = vld [vmem:[#allocation6 + $0x7b0] sm:$0xff]
    %v854 = vld [vmem:[#allocation6 + $0x7b8] sm:$0xff]
    %v855 = vld [vmem:[#allocation6 + $0x7c0] sm:$0xff]
    %v856 = vld [vmem:[#allocation6 + $0x7c8] sm:$0xff]
    %v857 = vld [vmem:[#allocation6 + $0x7d0] sm:$0xff]
    %v858 = vld [vmem:[#allocation6 + $0x7d8] sm:$0xff]
    %v859 = vld [vmem:[#allocation6 + $0x7e0] sm:$0xff]
    %v860 = vld [vmem:[#allocation6 + $0x7e8] sm:$0xff]
    %v861 = vld [vmem:[#allocation6 + $0x7f0] sm:$0xff]
    %v862 = vld [vmem:[#allocation6 + $0x7f8] sm:$0xff]
    %v863 = vld [vmem:[#allocation7] sm:$0xff]
    %v865 = vlaneseq
    %v866 = vshrl.u32 %v865, 7
    %v867 = vsub.s32 0, %v866
    %v868 = vrot.slane %v863, %v867
    %v869 = vlaneseq
    %v870 = vshrl.u32 %v869, 7
    %v871 = vsub.s32 1, %v870
    %v872 = vrot.slane %v863, %v871
    %v873 = vlaneseq
    %v874 = vshrl.u32 %v873, 7
    %v875 = vsub.s32 2, %v874
    %v876 = vrot.slane %v863, %v875
    %v877 = vlaneseq
    %v878 = vshrl.u32 %v877, 7
    %v879 = vsub.s32 3, %v878
    %v880 = vrot.slane %v863, %v879
    %v881 = vlaneseq
    %v882 = vshrl.u32 %v881, 7
    %v883 = vsub.s32 4, %v882
    %v884 = vrot.slane %v863, %v883
    %v885 = vlaneseq
    %v886 = vshrl.u32 %v885, 7
    %v887 = vsub.s32 5, %v886
    %v888 = vrot.slane %v863, %v887
    %v889 = vlaneseq
    %v890 = vshrl.u32 %v889, 7
    %v891 = vsub.s32 6, %v890
    %v892 = vrot.slane %v863, %v891
    %v893 = vlaneseq
    %v894 = vshrl.u32 %v893, 7
    %v895 = vsub.s32 7, %v894
    %v896 = vrot.slane %v863, %v895
    %v1161 = vunpack.c.l.b16 %v607
    %v1162 = vunpack.c.h.b16 %v607
    %v1163 = vunpack.c.l.b16 %v608
    %v1164 = vunpack.c.h.b16 %v608
    %v1165 = vunpack.c.l.b16 %v609
    %v1166 = vunpack.c.h.b16 %v609
    %v1167 = vunpack.c.l.b16 %v610
    %v1168 = vunpack.c.h.b16 %v610
    %v1169 = vunpack.c.l.b16 %v611
    %v1170 = vunpack.c.h.b16 %v611
    %v1171 = vunpack.c.l.b16 %v612
    %v1172 = vunpack.c.h.b16 %v612
    %v1173 = vunpack.c.l.b16 %v613
    %v1174 = vunpack.c.h.b16 %v613
    %v1175 = vunpack.c.l.b16 %v614
    %v1176 = vunpack.c.h.b16 %v614
    %v1177 = vunpack.c.l.b16 %v615
    %v1178 = vunpack.c.h.b16 %v615
    %v1179 = vunpack.c.l.b16 %v616
    %v1180 = vunpack.c.h.b16 %v616
    %v1181 = vunpack.c.l.b16 %v617
    %v1182 = vunpack.c.h.b16 %v617
    %v1183 = vunpack.c.l.b16 %v618
    %v1184 = vunpack.c.h.b16 %v618
    %v1185 = vunpack.c.l.b16 %v619
    %v1186 = vunpack.c.h.b16 %v619
    %v1187 = vunpack.c.l.b16 %v620
    %v1188 = vunpack.c.h.b16 %v620
    %v1189 = vunpack.c.l.b16 %v621
    %v1190 = vunpack.c.h.b16 %v621
    %v1191 = vunpack.c.l.b16 %v622
    %v1192 = vunpack.c.h.b16 %v622
    %v1193 = vunpack.c.l.b16 %v623
    %v1194 = vunpack.c.h.b16 %v623
    %v1195 = vunpack.c.l.b16 %v624
    %v1196 = vunpack.c.h.b16 %v624
    %v1197 = vunpack.c.l.b16 %v625
    %v1198 = vunpack.c.h.b16 %v625
    %v1199 = vunpack.c.l.b16 %v626
    %v1200 = vunpack.c.h.b16 %v626
    %v1201 = vunpack.c.l.b16 %v627
    %v1202 = vunpack.c.h.b16 %v627
    %v1203 = vunpack.c.l.b16 %v628
    %v1204 = vunpack.c.h.b16 %v628
    %v1205 = vunpack.c.l.b16 %v629
    %v1206 = vunpack.c.h.b16 %v629
    %v1207 = vunpack.c.l.b16 %v630
    %v1208 = vunpack.c.h.b16 %v630
    %v1209 = vunpack.c.l.b16 %v631
    %v1210 = vunpack.c.h.b16 %v631
    %v1211 = vunpack.c.l.b16 %v632
    %v1212 = vunpack.c.h.b16 %v632
    %v1213 = vunpack.c.l.b16 %v633
    %v1214 = vunpack.c.h.b16 %v633
    %v1215 = vunpack.c.l.b16 %v634
    %v1216 = vunpack.c.h.b16 %v634
    %v1217 = vunpack.c.l.b16 %v635
    %v1218 = vunpack.c.h.b16 %v635
    %v1219 = vunpack.c.l.b16 %v636
    %v1220 = vunpack.c.h.b16 %v636
    %v1221 = vunpack.c.l.b16 %v637
    %v1222 = vunpack.c.h.b16 %v637
    %v1223 = vunpack.c.l.b16 %v638
    %v1224 = vunpack.c.h.b16 %v638
    %v1225 = vunpack.c.l.b16 %v639
    %v1226 = vunpack.c.h.b16 %v639
    %v1227 = vunpack.c.l.b16 %v640
    %v1228 = vunpack.c.h.b16 %v640
    %v1229 = vunpack.c.l.b16 %v641
    %v1230 = vunpack.c.h.b16 %v641
    %v1231 = vunpack.c.l.b16 %v642
    %v1232 = vunpack.c.h.b16 %v642
    %v1233 = vunpack.c.l.b16 %v643
    %v1234 = vunpack.c.h.b16 %v643
    %v1235 = vunpack.c.l.b16 %v644
    %v1236 = vunpack.c.h.b16 %v644
    %v1237 = vunpack.c.l.b16 %v645
    %v1238 = vunpack.c.h.b16 %v645
    %v1239 = vunpack.c.l.b16 %v646
    %v1240 = vunpack.c.h.b16 %v646
    %v1241 = vunpack.c.l.b16 %v647
    %v1242 = vunpack.c.h.b16 %v647
    %v1243 = vunpack.c.l.b16 %v648
    %v1244 = vunpack.c.h.b16 %v648
    %v1245 = vunpack.c.l.b16 %v649
    %v1246 = vunpack.c.h.b16 %v649
    %v1247 = vunpack.c.l.b16 %v650
    %v1248 = vunpack.c.h.b16 %v650
    %v1249 = vunpack.c.l.b16 %v651
    %v1250 = vunpack.c.h.b16 %v651
    %v1251 = vunpack.c.l.b16 %v652
    %v1252 = vunpack.c.h.b16 %v652
    %v1253 = vunpack.c.l.b16 %v653
    %v1254 = vunpack.c.h.b16 %v653
    %v1255 = vunpack.c.l.b16 %v654
    %v1256 = vunpack.c.h.b16 %v654
    %v1257 = vunpack.c.l.b16 %v655
    %v1258 = vunpack.c.h.b16 %v655
    %v1259 = vunpack.c.l.b16 %v656
    %v1260 = vunpack.c.h.b16 %v656
    %v1261 = vunpack.c.l.b16 %v657
    %v1262 = vunpack.c.h.b16 %v657
    %v1263 = vunpack.c.l.b16 %v658
    %v1264 = vunpack.c.h.b16 %v658
    %v1265 = vunpack.c.l.b16 %v659
    %v1266 = vunpack.c.h.b16 %v659
    %v1267 = vunpack.c.l.b16 %v660
    %v1268 = vunpack.c.h.b16 %v660
    %v1269 = vunpack.c.l.b16 %v661
    %v1270 = vunpack.c.h.b16 %v661
    %v1271 = vunpack.c.l.b16 %v662
    %v1272 = vunpack.c.h.b16 %v662
    %v1273 = vunpack.c.l.b16 %v663
    %v1274 = vunpack.c.h.b16 %v663
    %v1275 = vunpack.c.l.b16 %v664
    %v1276 = vunpack.c.h.b16 %v664
    %v1277 = vunpack.c.l.b16 %v665
    %v1278 = vunpack.c.h.b16 %v665
    %v1279 = vunpack.c.l.b16 %v666
    %v1280 = vunpack.c.h.b16 %v666
    %v1281 = vunpack.c.l.b16 %v667
    %v1282 = vunpack.c.h.b16 %v667
    %v1283 = vunpack.c.l.b16 %v668
    %v1284 = vunpack.c.h.b16 %v668
    %v1285 = vunpack.c.l.b16 %v669
    %v1286 = vunpack.c.h.b16 %v669
    %v1287 = vunpack.c.l.b16 %v670
    %v1288 = vunpack.c.h.b16 %v670
    %v1289 = vunpack.c.l.b16 %v671
    %v1290 = vunpack.c.h.b16 %v671
    %v1291 = vunpack.c.l.b16 %v672
    %v1292 = vunpack.c.h.b16 %v672
    %v1293 = vunpack.c.l.b16 %v673
    %v1294 = vunpack.c.h.b16 %v673
    %v1295 = vunpack.c.l.b16 %v674
    %v1296 = vunpack.c.h.b16 %v674
    %v1297 = vunpack.c.l.b16 %v675
    %v1298 = vunpack.c.h.b16 %v675
    %v1299 = vunpack.c.l.b16 %v676
    %v1300 = vunpack.c.h.b16 %v676
    %v1301 = vunpack.c.l.b16 %v677
    %v1302 = vunpack.c.h.b16 %v677
    %v1303 = vunpack.c.l.b16 %v678
    %v1304 = vunpack.c.h.b16 %v678
    %v1305 = vunpack.c.l.b16 %v679
    %v1306 = vunpack.c.h.b16 %v679
    %v1307 = vunpack.c.l.b16 %v680
    %v1308 = vunpack.c.h.b16 %v680
    %v1309 = vunpack.c.l.b16 %v681
    %v1310 = vunpack.c.h.b16 %v681
    %v1311 = vunpack.c.l.b16 %v682
    %v1312 = vunpack.c.h.b16 %v682
    %v1313 = vunpack.c.l.b16 %v683
    %v1314 = vunpack.c.h.b16 %v683
    %v1315 = vunpack.c.l.b16 %v684
    %v1316 = vunpack.c.h.b16 %v684
    %v1317 = vunpack.c.l.b16 %v685
    %v1318 = vunpack.c.h.b16 %v685
    %v1319 = vunpack.c.l.b16 %v686
    %v1320 = vunpack.c.h.b16 %v686
    %v1321 = vunpack.c.l.b16 %v687
    %v1322 = vunpack.c.h.b16 %v687
    %v1323 = vunpack.c.l.b16 %v688
    %v1324 = vunpack.c.h.b16 %v688
    %v1325 = vunpack.c.l.b16 %v689
    %v1326 = vunpack.c.h.b16 %v689
    %v1327 = vunpack.c.l.b16 %v690
    %v1328 = vunpack.c.h.b16 %v690
    %v1329 = vunpack.c.l.b16 %v691
    %v1330 = vunpack.c.h.b16 %v691
    %v1331 = vunpack.c.l.b16 %v692
    %v1332 = vunpack.c.h.b16 %v692
    %v1333 = vunpack.c.l.b16 %v693
    %v1334 = vunpack.c.h.b16 %v693
    %v1335 = vunpack.c.l.b16 %v694
    %v1336 = vunpack.c.h.b16 %v694
    %v1337 = vunpack.c.l.b16 %v695
    %v1338 = vunpack.c.h.b16 %v695
    %v1339 = vunpack.c.l.b16 %v696
    %v1340 = vunpack.c.h.b16 %v696
    %v1341 = vunpack.c.l.b16 %v697
    %v1342 = vunpack.c.h.b16 %v697
    %v1343 = vunpack.c.l.b16 %v698
    %v1344 = vunpack.c.h.b16 %v698
    %v1345 = vunpack.c.l.b16 %v699
    %v1346 = vunpack.c.h.b16 %v699
    %v1347 = vunpack.c.l.b16 %v700
    %v1348 = vunpack.c.h.b16 %v700
    %v1349 = vunpack.c.l.b16 %v701
    %v1350 = vunpack.c.h.b16 %v701
    %v1351 = vunpack.c.l.b16 %v702
    %v1352 = vunpack.c.h.b16 %v702
    %v1353 = vunpack.c.l.b16 %v703
    %v1354 = vunpack.c.h.b16 %v703
    %v1355 = vunpack.c.l.b16 %v704
    %v1356 = vunpack.c.h.b16 %v704
    %v1357 = vunpack.c.l.b16 %v705
    %v1358 = vunpack.c.h.b16 %v705
    %v1359 = vunpack.c.l.b16 %v706
    %v1360 = vunpack.c.h.b16 %v706
    %v1361 = vunpack.c.l.b16 %v707
    %v1362 = vunpack.c.h.b16 %v707
    %v1363 = vunpack.c.l.b16 %v708
    %v1364 = vunpack.c.h.b16 %v708
    %v1365 = vunpack.c.l.b16 %v709
    %v1366 = vunpack.c.h.b16 %v709
    %v1367 = vunpack.c.l.b16 %v710
    %v1368 = vunpack.c.h.b16 %v710
    %v1369 = vunpack.c.l.b16 %v711
    %v1370 = vunpack.c.h.b16 %v711
    %v1371 = vunpack.c.l.b16 %v712
    %v1372 = vunpack.c.h.b16 %v712
    %v1373 = vunpack.c.l.b16 %v713
    %v1374 = vunpack.c.h.b16 %v713
    %v1375 = vunpack.c.l.b16 %v714
    %v1376 = vunpack.c.h.b16 %v714
    %v1377 = vunpack.c.l.b16 %v715
    %v1378 = vunpack.c.h.b16 %v715
    %v1379 = vunpack.c.l.b16 %v716
    %v1380 = vunpack.c.h.b16 %v716
    %v1381 = vunpack.c.l.b16 %v717
    %v1382 = vunpack.c.h.b16 %v717
    %v1383 = vunpack.c.l.b16 %v718
    %v1384 = vunpack.c.h.b16 %v718
    %v1385 = vunpack.c.l.b16 %v719
    %v1386 = vunpack.c.h.b16 %v719
    %v1387 = vunpack.c.l.b16 %v720
    %v1388 = vunpack.c.h.b16 %v720
    %v1389 = vunpack.c.l.b16 %v721
    %v1390 = vunpack.c.h.b16 %v721
    %v1391 = vunpack.c.l.b16 %v722
    %v1392 = vunpack.c.h.b16 %v722
    %v1393 = vunpack.c.l.b16 %v723
    %v1394 = vunpack.c.h.b16 %v723
    %v1395 = vunpack.c.l.b16 %v724
    %v1396 = vunpack.c.h.b16 %v724
    %v1397 = vunpack.c.l.b16 %v725
    %v1398 = vunpack.c.h.b16 %v725
    %v1399 = vunpack.c.l.b16 %v726
    %v1400 = vunpack.c.h.b16 %v726
    %v1401 = vunpack.c.l.b16 %v727
    %v1402 = vunpack.c.h.b16 %v727
    %v1403 = vunpack.c.l.b16 %v728
    %v1404 = vunpack.c.h.b16 %v728
    %v1405 = vunpack.c.l.b16 %v729
    %v1406 = vunpack.c.h.b16 %v729
    %v1407 = vunpack.c.l.b16 %v730
    %v1408 = vunpack.c.h.b16 %v730
    %v1409 = vunpack.c.l.b16 %v731
    %v1410 = vunpack.c.h.b16 %v731
    %v1411 = vunpack.c.l.b16 %v732
    %v1412 = vunpack.c.h.b16 %v732
    %v1413 = vunpack.c.l.b16 %v733
    %v1414 = vunpack.c.h.b16 %v733
    %v1415 = vunpack.c.l.b16 %v734
    %v1416 = vunpack.c.h.b16 %v734
    %v1417 = vunpack.c.l.b16 %v735
    %v1418 = vunpack.c.h.b16 %v735
    %v1419 = vunpack.c.l.b16 %v736
    %v1420 = vunpack.c.h.b16 %v736
    %v1421 = vunpack.c.l.b16 %v737
    %v1422 = vunpack.c.h.b16 %v737
    %v1423 = vunpack.c.l.b16 %v738
    %v1424 = vunpack.c.h.b16 %v738
    %v1425 = vunpack.c.l.b16 %v739
    %v1426 = vunpack.c.h.b16 %v739
    %v1427 = vunpack.c.l.b16 %v740
    %v1428 = vunpack.c.h.b16 %v740
    %v1429 = vunpack.c.l.b16 %v741
    %v1430 = vunpack.c.h.b16 %v741
    %v1431 = vunpack.c.l.b16 %v742
    %v1432 = vunpack.c.h.b16 %v742
    %v1433 = vunpack.c.l.b16 %v743
    %v1434 = vunpack.c.h.b16 %v743
    %v1435 = vunpack.c.l.b16 %v744
    %v1436 = vunpack.c.h.b16 %v744
    %v1437 = vunpack.c.l.b16 %v745
    %v1438 = vunpack.c.h.b16 %v745
    %v1439 = vunpack.c.l.b16 %v746
    %v1440 = vunpack.c.h.b16 %v746
    %v1441 = vunpack.c.l.b16 %v747
    %v1442 = vunpack.c.h.b16 %v747
    %v1443 = vunpack.c.l.b16 %v748
    %v1444 = vunpack.c.h.b16 %v748
    %v1445 = vunpack.c.l.b16 %v749
    %v1446 = vunpack.c.h.b16 %v749
    %v1447 = vunpack.c.l.b16 %v750
    %v1448 = vunpack.c.h.b16 %v750
    %v1449 = vunpack.c.l.b16 %v751
    %v1450 = vunpack.c.h.b16 %v751
    %v1451 = vunpack.c.l.b16 %v752
    %v1452 = vunpack.c.h.b16 %v752
    %v1453 = vunpack.c.l.b16 %v753
    %v1454 = vunpack.c.h.b16 %v753
    %v1455 = vunpack.c.l.b16 %v754
    %v1456 = vunpack.c.h.b16 %v754
    %v1457 = vunpack.c.l.b16 %v755
    %v1458 = vunpack.c.h.b16 %v755
    %v1459 = vunpack.c.l.b16 %v756
    %v1460 = vunpack.c.h.b16 %v756
    %v1461 = vunpack.c.l.b16 %v757
    %v1462 = vunpack.c.h.b16 %v757
    %v1463 = vunpack.c.l.b16 %v758
    %v1464 = vunpack.c.h.b16 %v758
    %v1465 = vunpack.c.l.b16 %v759
    %v1466 = vunpack.c.h.b16 %v759
    %v1467 = vunpack.c.l.b16 %v760
    %v1468 = vunpack.c.h.b16 %v760
    %v1469 = vunpack.c.l.b16 %v761
    %v1470 = vunpack.c.h.b16 %v761
    %v1471 = vunpack.c.l.b16 %v762
    %v1472 = vunpack.c.h.b16 %v762
    %v1473 = vunpack.c.l.b16 %v763
    %v1474 = vunpack.c.h.b16 %v763
    %v1475 = vunpack.c.l.b16 %v764
    %v1476 = vunpack.c.h.b16 %v764
    %v1477 = vunpack.c.l.b16 %v765
    %v1478 = vunpack.c.h.b16 %v765
    %v1479 = vunpack.c.l.b16 %v766
    %v1480 = vunpack.c.h.b16 %v766
    %v1481 = vunpack.c.l.b16 %v767
    %v1482 = vunpack.c.h.b16 %v767
    %v1483 = vunpack.c.l.b16 %v768
    %v1484 = vunpack.c.h.b16 %v768
    %v1485 = vunpack.c.l.b16 %v769
    %v1486 = vunpack.c.h.b16 %v769
    %v1487 = vunpack.c.l.b16 %v770
    %v1488 = vunpack.c.h.b16 %v770
    %v1489 = vunpack.c.l.b16 %v771
    %v1490 = vunpack.c.h.b16 %v771
    %v1491 = vunpack.c.l.b16 %v772
    %v1492 = vunpack.c.h.b16 %v772
    %v1493 = vunpack.c.l.b16 %v773
    %v1494 = vunpack.c.h.b16 %v773
    %v1495 = vunpack.c.l.b16 %v774
    %v1496 = vunpack.c.h.b16 %v774
    %v1497 = vunpack.c.l.b16 %v775
    %v1498 = vunpack.c.h.b16 %v775
    %v1499 = vunpack.c.l.b16 %v776
    %v1500 = vunpack.c.h.b16 %v776
    %v1501 = vunpack.c.l.b16 %v777
    %v1502 = vunpack.c.h.b16 %v777
    %v1503 = vunpack.c.l.b16 %v778
    %v1504 = vunpack.c.h.b16 %v778
    %v1505 = vunpack.c.l.b16 %v779
    %v1506 = vunpack.c.h.b16 %v779
    %v1507 = vunpack.c.l.b16 %v780
    %v1508 = vunpack.c.h.b16 %v780
    %v1509 = vunpack.c.l.b16 %v781
    %v1510 = vunpack.c.h.b16 %v781
    %v1511 = vunpack.c.l.b16 %v782
    %v1512 = vunpack.c.h.b16 %v782
    %v1513 = vunpack.c.l.b16 %v783
    %v1514 = vunpack.c.h.b16 %v783
    %v1515 = vunpack.c.l.b16 %v784
    %v1516 = vunpack.c.h.b16 %v784
    %v1517 = vunpack.c.l.b16 %v785
    %v1518 = vunpack.c.h.b16 %v785
    %v1519 = vunpack.c.l.b16 %v786
    %v1520 = vunpack.c.h.b16 %v786
    %v1521 = vunpack.c.l.b16 %v787
    %v1522 = vunpack.c.h.b16 %v787
    %v1523 = vunpack.c.l.b16 %v788
    %v1524 = vunpack.c.h.b16 %v788
    %v1525 = vunpack.c.l.b16 %v789
    %v1526 = vunpack.c.h.b16 %v789
    %v1527 = vunpack.c.l.b16 %v790
    %v1528 = vunpack.c.h.b16 %v790
    %v1529 = vunpack.c.l.b16 %v791
    %v1530 = vunpack.c.h.b16 %v791
    %v1531 = vunpack.c.l.b16 %v792
    %v1532 = vunpack.c.h.b16 %v792
    %v1533 = vunpack.c.l.b16 %v793
    %v1534 = vunpack.c.h.b16 %v793
    %v1535 = vunpack.c.l.b16 %v794
    %v1536 = vunpack.c.h.b16 %v794
    %v1537 = vunpack.c.l.b16 %v795
    %v1538 = vunpack.c.h.b16 %v795
    %v1539 = vunpack.c.l.b16 %v796
    %v1540 = vunpack.c.h.b16 %v796
    %v1541 = vunpack.c.l.b16 %v797
    %v1542 = vunpack.c.h.b16 %v797
    %v1543 = vunpack.c.l.b16 %v798
    %v1544 = vunpack.c.h.b16 %v798
    %v1545 = vunpack.c.l.b16 %v799
    %v1546 = vunpack.c.h.b16 %v799
    %v1547 = vunpack.c.l.b16 %v800
    %v1548 = vunpack.c.h.b16 %v800
    %v1549 = vunpack.c.l.b16 %v801
    %v1550 = vunpack.c.h.b16 %v801
    %v1551 = vunpack.c.l.b16 %v802
    %v1552 = vunpack.c.h.b16 %v802
    %v1553 = vunpack.c.l.b16 %v803
    %v1554 = vunpack.c.h.b16 %v803
    %v1555 = vunpack.c.l.b16 %v804
    %v1556 = vunpack.c.h.b16 %v804
    %v1557 = vunpack.c.l.b16 %v805
    %v1558 = vunpack.c.h.b16 %v805
    %v1559 = vunpack.c.l.b16 %v806
    %v1560 = vunpack.c.h.b16 %v806
    %v1561 = vunpack.c.l.b16 %v807
    %v1562 = vunpack.c.h.b16 %v807
    %v1563 = vunpack.c.l.b16 %v808
    %v1564 = vunpack.c.h.b16 %v808
    %v1565 = vunpack.c.l.b16 %v809
    %v1566 = vunpack.c.h.b16 %v809
    %v1567 = vunpack.c.l.b16 %v810
    %v1568 = vunpack.c.h.b16 %v810
    %v1569 = vunpack.c.l.b16 %v811
    %v1570 = vunpack.c.h.b16 %v811
    %v1571 = vunpack.c.l.b16 %v812
    %v1572 = vunpack.c.h.b16 %v812
    %v1573 = vunpack.c.l.b16 %v813
    %v1574 = vunpack.c.h.b16 %v813
    %v1575 = vunpack.c.l.b16 %v814
    %v1576 = vunpack.c.h.b16 %v814
    %v1577 = vunpack.c.l.b16 %v815
    %v1578 = vunpack.c.h.b16 %v815
    %v1579 = vunpack.c.l.b16 %v816
    %v1580 = vunpack.c.h.b16 %v816
    %v1581 = vunpack.c.l.b16 %v817
    %v1582 = vunpack.c.h.b16 %v817
    %v1583 = vunpack.c.l.b16 %v818
    %v1584 = vunpack.c.h.b16 %v818
    %v1585 = vunpack.c.l.b16 %v819
    %v1586 = vunpack.c.h.b16 %v819
    %v1587 = vunpack.c.l.b16 %v820
    %v1588 = vunpack.c.h.b16 %v820
    %v1589 = vunpack.c.l.b16 %v821
    %v1590 = vunpack.c.h.b16 %v821
    %v1591 = vunpack.c.l.b16 %v822
    %v1592 = vunpack.c.h.b16 %v822
    %v1593 = vunpack.c.l.b16 %v823
    %v1594 = vunpack.c.h.b16 %v823
    %v1595 = vunpack.c.l.b16 %v824
    %v1596 = vunpack.c.h.b16 %v824
    %v1597 = vunpack.c.l.b16 %v825
    %v1598 = vunpack.c.h.b16 %v825
    %v1599 = vunpack.c.l.b16 %v826
    %v1600 = vunpack.c.h.b16 %v826
    %v1601 = vunpack.c.l.b16 %v827
    %v1602 = vunpack.c.h.b16 %v827
    %v1603 = vunpack.c.l.b16 %v828
    %v1604 = vunpack.c.h.b16 %v828
    %v1605 = vunpack.c.l.b16 %v829
    %v1606 = vunpack.c.h.b16 %v829
    %v1607 = vunpack.c.l.b16 %v830
    %v1608 = vunpack.c.h.b16 %v830
    %v1609 = vunpack.c.l.b16 %v831
    %v1610 = vunpack.c.h.b16 %v831
    %v1611 = vunpack.c.l.b16 %v832
    %v1612 = vunpack.c.h.b16 %v832
    %v1613 = vunpack.c.l.b16 %v833
    %v1614 = vunpack.c.h.b16 %v833
    %v1615 = vunpack.c.l.b16 %v834
    %v1616 = vunpack.c.h.b16 %v834
    %v1617 = vunpack.c.l.b16 %v835
    %v1618 = vunpack.c.h.b16 %v835
    %v1619 = vunpack.c.l.b16 %v836
    %v1620 = vunpack.c.h.b16 %v836
    %v1621 = vunpack.c.l.b16 %v837
    %v1622 = vunpack.c.h.b16 %v837
    %v1623 = vunpack.c.l.b16 %v838
    %v1624 = vunpack.c.h.b16 %v838
    %v1625 = vunpack.c.l.b16 %v839
    %v1626 = vunpack.c.h.b16 %v839
    %v1627 = vunpack.c.l.b16 %v840
    %v1628 = vunpack.c.h.b16 %v840
    %v1629 = vunpack.c.l.b16 %v841
    %v1630 = vunpack.c.h.b16 %v841
    %v1631 = vunpack.c.l.b16 %v842
    %v1632 = vunpack.c.h.b16 %v842
    %v1633 = vunpack.c.l.b16 %v843
    %v1634 = vunpack.c.h.b16 %v843
    %v1635 = vunpack.c.l.b16 %v844
    %v1636 = vunpack.c.h.b16 %v844
    %v1637 = vunpack.c.l.b16 %v845
    %v1638 = vunpack.c.h.b16 %v845
    %v1639 = vunpack.c.l.b16 %v846
    %v1640 = vunpack.c.h.b16 %v846
    %v1641 = vunpack.c.l.b16 %v847
    %v1642 = vunpack.c.h.b16 %v847
    %v1643 = vunpack.c.l.b16 %v848
    %v1644 = vunpack.c.h.b16 %v848
    %v1645 = vunpack.c.l.b16 %v849
    %v1646 = vunpack.c.h.b16 %v849
    %v1647 = vunpack.c.l.b16 %v850
    %v1648 = vunpack.c.h.b16 %v850
    %v1649 = vunpack.c.l.b16 %v851
    %v1650 = vunpack.c.h.b16 %v851
    %v1651 = vunpack.c.l.b16 %v852
    %v1652 = vunpack.c.h.b16 %v852
    %v1653 = vunpack.c.l.b16 %v853
    %v1654 = vunpack.c.h.b16 %v853
    %v1655 = vunpack.c.l.b16 %v854
    %v1656 = vunpack.c.h.b16 %v854
    %v1657 = vunpack.c.l.b16 %v855
    %v1658 = vunpack.c.h.b16 %v855
    %v1659 = vunpack.c.l.b16 %v856
    %v1660 = vunpack.c.h.b16 %v856
    %v1661 = vunpack.c.l.b16 %v857
    %v1662 = vunpack.c.h.b16 %v857
    %v1663 = vunpack.c.l.b16 %v858
    %v1664 = vunpack.c.h.b16 %v858
    %v1665 = vunpack.c.l.b16 %v859
    %v1666 = vunpack.c.h.b16 %v859
    %v1667 = vunpack.c.l.b16 %v860
    %v1668 = vunpack.c.h.b16 %v860
    %v1669 = vunpack.c.l.b16 %v861
    %v1670 = vunpack.c.h.b16 %v861
    %v1671 = vunpack.c.l.b16 %v862
    %v1672 = vunpack.c.h.b16 %v862
    %v1673 = vpack.c.b16 %v1169, %v1161
    %v1674 = vpack.c.b16 %v1170, %v1162
    %v1675 = vpack.c.b16 %v1171, %v1163
    %v1676 = vpack.c.b16 %v1172, %v1164
    %v1677 = vpack.c.b16 %v1173, %v1165
    %v1678 = vpack.c.b16 %v1174, %v1166
    %v1679 = vpack.c.b16 %v1175, %v1167
    %v1680 = vpack.c.b16 %v1176, %v1168
    %v1681 = vpack.c.b16 %v1185, %v1177
    %v1682 = vpack.c.b16 %v1186, %v1178
    %v1683 = vpack.c.b16 %v1187, %v1179
    %v1684 = vpack.c.b16 %v1188, %v1180
    %v1685 = vpack.c.b16 %v1189, %v1181
    %v1686 = vpack.c.b16 %v1190, %v1182
    %v1687 = vpack.c.b16 %v1191, %v1183
    %v1688 = vpack.c.b16 %v1192, %v1184
    %v1689 = vpack.c.b16 %v1201, %v1193
    %v1690 = vpack.c.b16 %v1202, %v1194
    %v1691 = vpack.c.b16 %v1203, %v1195
    %v1692 = vpack.c.b16 %v1204, %v1196
    %v1693 = vpack.c.b16 %v1205, %v1197
    %v1694 = vpack.c.b16 %v1206, %v1198
    %v1695 = vpack.c.b16 %v1207, %v1199
    %v1696 = vpack.c.b16 %v1208, %v1200
    %v1697 = vpack.c.b16 %v1217, %v1209
    %v1698 = vpack.c.b16 %v1218, %v1210
    %v1699 = vpack.c.b16 %v1219, %v1211
    %v1700 = vpack.c.b16 %v1220, %v1212
    %v1701 = vpack.c.b16 %v1221, %v1213
    %v1702 = vpack.c.b16 %v1222, %v1214
    %v1703 = vpack.c.b16 %v1223, %v1215
    %v1704 = vpack.c.b16 %v1224, %v1216
    %v1705 = vpack.c.b16 %v1233, %v1225
    %v1706 = vpack.c.b16 %v1234, %v1226
    %v1707 = vpack.c.b16 %v1235, %v1227
    %v1708 = vpack.c.b16 %v1236, %v1228
    %v1709 = vpack.c.b16 %v1237, %v1229
    %v1710 = vpack.c.b16 %v1238, %v1230
    %v1711 = vpack.c.b16 %v1239, %v1231
    %v1712 = vpack.c.b16 %v1240, %v1232
    %v1713 = vpack.c.b16 %v1249, %v1241
    %v1714 = vpack.c.b16 %v1250, %v1242
    %v1715 = vpack.c.b16 %v1251, %v1243
    %v1716 = vpack.c.b16 %v1252, %v1244
    %v1717 = vpack.c.b16 %v1253, %v1245
    %v1718 = vpack.c.b16 %v1254, %v1246
    %v1719 = vpack.c.b16 %v1255, %v1247
    %v1720 = vpack.c.b16 %v1256, %v1248
    %v1721 = vpack.c.b16 %v1265, %v1257
    %v1722 = vpack.c.b16 %v1266, %v1258
    %v1723 = vpack.c.b16 %v1267, %v1259
    %v1724 = vpack.c.b16 %v1268, %v1260
    %v1725 = vpack.c.b16 %v1269, %v1261
    %v1726 = vpack.c.b16 %v1270, %v1262
    %v1727 = vpack.c.b16 %v1271, %v1263
    %v1728 = vpack.c.b16 %v1272, %v1264
    %v1729 = vpack.c.b16 %v1281, %v1273
    %v1730 = vpack.c.b16 %v1282, %v1274
    %v1731 = vpack.c.b16 %v1283, %v1275
    %v1732 = vpack.c.b16 %v1284, %v1276
    %v1733 = vpack.c.b16 %v1285, %v1277
    %v1734 = vpack.c.b16 %v1286, %v1278
    %v1735 = vpack.c.b16 %v1287, %v1279
    %v1736 = vpack.c.b16 %v1288, %v1280
    %v1737 = vpack.c.b16 %v1297, %v1289
    %v1738 = vpack.c.b16 %v1298, %v1290
    %v1739 = vpack.c.b16 %v1299, %v1291
    %v1740 = vpack.c.b16 %v1300, %v1292
    %v1741 = vpack.c.b16 %v1301, %v1293
    %v1742 = vpack.c.b16 %v1302, %v1294
    %v1743 = vpack.c.b16 %v1303, %v1295
    %v1744 = vpack.c.b16 %v1304, %v1296
    %v1745 = vpack.c.b16 %v1313, %v1305
    %v1746 = vpack.c.b16 %v1314, %v1306
    %v1747 = vpack.c.b16 %v1315, %v1307
    %v1748 = vpack.c.b16 %v1316, %v1308
    %v1749 = vpack.c.b16 %v1317, %v1309
    %v1750 = vpack.c.b16 %v1318, %v1310
    %v1751 = vpack.c.b16 %v1319, %v1311
    %v1752 = vpack.c.b16 %v1320, %v1312
    %v1753 = vpack.c.b16 %v1329, %v1321
    %v1754 = vpack.c.b16 %v1330, %v1322
    %v1755 = vpack.c.b16 %v1331, %v1323
    %v1756 = vpack.c.b16 %v1332, %v1324
    %v1757 = vpack.c.b16 %v1333, %v1325
    %v1758 = vpack.c.b16 %v1334, %v1326
    %v1759 = vpack.c.b16 %v1335, %v1327
    %v1760 = vpack.c.b16 %v1336, %v1328
    %v1761 = vpack.c.b16 %v1345, %v1337
    %v1762 = vpack.c.b16 %v1346, %v1338
    %v1763 = vpack.c.b16 %v1347, %v1339
    %v1764 = vpack.c.b16 %v1348, %v1340
    %v1765 = vpack.c.b16 %v1349, %v1341
    %v1766 = vpack.c.b16 %v1350, %v1342
    %v1767 = vpack.c.b16 %v1351, %v1343
    %v1768 = vpack.c.b16 %v1352, %v1344
    %v1769 = vpack.c.b16 %v1361, %v1353
    %v1770 = vpack.c.b16 %v1362, %v1354
    %v1771 = vpack.c.b16 %v1363, %v1355
    %v1772 = vpack.c.b16 %v1364, %v1356
    %v1773 = vpack.c.b16 %v1365, %v1357
    %v1774 = vpack.c.b16 %v1366, %v1358
    %v1775 = vpack.c.b16 %v1367, %v1359
    %v1776 = vpack.c.b16 %v1368, %v1360
    %v1777 = vpack.c.b16 %v1377, %v1369
    %v1778 = vpack.c.b16 %v1378, %v1370
    %v1779 = vpack.c.b16 %v1379, %v1371
    %v1780 = vpack.c.b16 %v1380, %v1372
    %v1781 = vpack.c.b16 %v1381, %v1373
    %v1782 = vpack.c.b16 %v1382, %v1374
    %v1783 = vpack.c.b16 %v1383, %v1375
    %v1784 = vpack.c.b16 %v1384, %v1376
    %v1785 = vpack.c.b16 %v1393, %v1385
    %v1786 = vpack.c.b16 %v1394, %v1386
    %v1787 = vpack.c.b16 %v1395, %v1387
    %v1788 = vpack.c.b16 %v1396, %v1388
    %v1789 = vpack.c.b16 %v1397, %v1389
    %v1790 = vpack.c.b16 %v1398, %v1390
    %v1791 = vpack.c.b16 %v1399, %v1391
    %v1792 = vpack.c.b16 %v1400, %v1392
    %v1793 = vpack.c.b16 %v1409, %v1401
    %v1794 = vpack.c.b16 %v1410, %v1402
    %v1795 = vpack.c.b16 %v1411, %v1403
    %v1796 = vpack.c.b16 %v1412, %v1404
    %v1797 = vpack.c.b16 %v1413, %v1405
    %v1798 = vpack.c.b16 %v1414, %v1406
    %v1799 = vpack.c.b16 %v1415, %v1407
    %v1800 = vpack.c.b16 %v1416, %v1408
    %v1801 = vpack.c.b16 %v1425, %v1417
    %v1802 = vpack.c.b16 %v1426, %v1418
    %v1803 = vpack.c.b16 %v1427, %v1419
    %v1804 = vpack.c.b16 %v1428, %v1420
    %v1805 = vpack.c.b16 %v1429, %v1421
    %v1806 = vpack.c.b16 %v1430, %v1422
    %v1807 = vpack.c.b16 %v1431, %v1423
    %v1808 = vpack.c.b16 %v1432, %v1424
    %v1809 = vpack.c.b16 %v1441, %v1433
    %v1810 = vpack.c.b16 %v1442, %v1434
    %v1811 = vpack.c.b16 %v1443, %v1435
    %v1812 = vpack.c.b16 %v1444, %v1436
    %v1813 = vpack.c.b16 %v1445, %v1437
    %v1814 = vpack.c.b16 %v1446, %v1438
    %v1815 = vpack.c.b16 %v1447, %v1439
    %v1816 = vpack.c.b16 %v1448, %v1440
    %v1817 = vpack.c.b16 %v1457, %v1449
    %v1818 = vpack.c.b16 %v1458, %v1450
    %v1819 = vpack.c.b16 %v1459, %v1451
    %v1820 = vpack.c.b16 %v1460, %v1452
    %v1821 = vpack.c.b16 %v1461, %v1453
    %v1822 = vpack.c.b16 %v1462, %v1454
    %v1823 = vpack.c.b16 %v1463, %v1455
    %v1824 = vpack.c.b16 %v1464, %v1456
    %v1825 = vpack.c.b16 %v1473, %v1465
    %v1826 = vpack.c.b16 %v1474, %v1466
    %v1827 = vpack.c.b16 %v1475, %v1467
    %v1828 = vpack.c.b16 %v1476, %v1468
    %v1829 = vpack.c.b16 %v1477, %v1469
    %v1830 = vpack.c.b16 %v1478, %v1470
    %v1831 = vpack.c.b16 %v1479, %v1471
    %v1832 = vpack.c.b16 %v1480, %v1472
    %v1833 = vpack.c.b16 %v1489, %v1481
    %v1834 = vpack.c.b16 %v1490, %v1482
    %v1835 = vpack.c.b16 %v1491, %v1483
    %v1836 = vpack.c.b16 %v1492, %v1484
    %v1837 = vpack.c.b16 %v1493, %v1485
    %v1838 = vpack.c.b16 %v1494, %v1486
    %v1839 = vpack.c.b16 %v1495, %v1487
    %v1840 = vpack.c.b16 %v1496, %v1488
    %v1841 = vpack.c.b16 %v1505, %v1497
    %v1842 = vpack.c.b16 %v1506, %v1498
    %v1843 = vpack.c.b16 %v1507, %v1499
    %v1844 = vpack.c.b16 %v1508, %v1500
    %v1845 = vpack.c.b16 %v1509, %v1501
    %v1846 = vpack.c.b16 %v1510, %v1502
    %v1847 = vpack.c.b16 %v1511, %v1503
    %v1848 = vpack.c.b16 %v1512, %v1504
    %v1849 = vpack.c.b16 %v1521, %v1513
    %v1850 = vpack.c.b16 %v1522, %v1514
    %v1851 = vpack.c.b16 %v1523, %v1515
    %v1852 = vpack.c.b16 %v1524, %v1516
    %v1853 = vpack.c.b16 %v1525, %v1517
    %v1854 = vpack.c.b16 %v1526, %v1518
    %v1855 = vpack.c.b16 %v1527, %v1519
    %v1856 = vpack.c.b16 %v1528, %v1520
    %v1857 = vpack.c.b16 %v1537, %v1529
    %v1858 = vpack.c.b16 %v1538, %v1530
    %v1859 = vpack.c.b16 %v1539, %v1531
    %v1860 = vpack.c.b16 %v1540, %v1532
    %v1861 = vpack.c.b16 %v1541, %v1533
    %v1862 = vpack.c.b16 %v1542, %v1534
    %v1863 = vpack.c.b16 %v1543, %v1535
    %v1864 = vpack.c.b16 %v1544, %v1536
    %v1865 = vpack.c.b16 %v1553, %v1545
    %v1866 = vpack.c.b16 %v1554, %v1546
    %v1867 = vpack.c.b16 %v1555, %v1547
    %v1868 = vpack.c.b16 %v1556, %v1548
    %v1869 = vpack.c.b16 %v1557, %v1549
    %v1870 = vpack.c.b16 %v1558, %v1550
    %v1871 = vpack.c.b16 %v1559, %v1551
    %v1872 = vpack.c.b16 %v1560, %v1552
    %v1873 = vpack.c.b16 %v1569, %v1561
    %v1874 = vpack.c.b16 %v1570, %v1562
    %v1875 = vpack.c.b16 %v1571, %v1563
    %v1876 = vpack.c.b16 %v1572, %v1564
    %v1877 = vpack.c.b16 %v1573, %v1565
    %v1878 = vpack.c.b16 %v1574, %v1566
    %v1879 = vpack.c.b16 %v1575, %v1567
    %v1880 = vpack.c.b16 %v1576, %v1568
    %v1881 = vpack.c.b16 %v1585, %v1577
    %v1882 = vpack.c.b16 %v1586, %v1578
    %v1883 = vpack.c.b16 %v1587, %v1579
    %v1884 = vpack.c.b16 %v1588, %v1580
    %v1885 = vpack.c.b16 %v1589, %v1581
    %v1886 = vpack.c.b16 %v1590, %v1582
    %v1887 = vpack.c.b16 %v1591, %v1583
    %v1888 = vpack.c.b16 %v1592, %v1584
    %v1889 = vpack.c.b16 %v1601, %v1593
    %v1890 = vpack.c.b16 %v1602, %v1594
    %v1891 = vpack.c.b16 %v1603, %v1595
    %v1892 = vpack.c.b16 %v1604, %v1596
    %v1893 = vpack.c.b16 %v1605, %v1597
    %v1894 = vpack.c.b16 %v1606, %v1598
    %v1895 = vpack.c.b16 %v1607, %v1599
    %v1896 = vpack.c.b16 %v1608, %v1600
    %v1897 = vpack.c.b16 %v1617, %v1609
    %v1898 = vpack.c.b16 %v1618, %v1610
    %v1899 = vpack.c.b16 %v1619, %v1611
    %v1900 = vpack.c.b16 %v1620, %v1612
    %v1901 = vpack.c.b16 %v1621, %v1613
    %v1902 = vpack.c.b16 %v1622, %v1614
    %v1903 = vpack.c.b16 %v1623, %v1615
    %v1904 = vpack.c.b16 %v1624, %v1616
    %v1905 = vpack.c.b16 %v1633, %v1625
    %v1906 = vpack.c.b16 %v1634, %v1626
    %v1907 = vpack.c.b16 %v1635, %v1627
    %v1908 = vpack.c.b16 %v1636, %v1628
    %v1909 = vpack.c.b16 %v1637, %v1629
    %v1910 = vpack.c.b16 %v1638, %v1630
    %v1911 = vpack.c.b16 %v1639, %v1631
    %v1912 = vpack.c.b16 %v1640, %v1632
    %v1913 = vpack.c.b16 %v1649, %v1641
    %v1914 = vpack.c.b16 %v1650, %v1642
    %v1915 = vpack.c.b16 %v1651, %v1643
    %v1916 = vpack.c.b16 %v1652, %v1644
    %v1917 = vpack.c.b16 %v1653, %v1645
    %v1918 = vpack.c.b16 %v1654, %v1646
    %v1919 = vpack.c.b16 %v1655, %v1647
    %v1920 = vpack.c.b16 %v1656, %v1648
    %v1921 = vpack.c.b16 %v1665, %v1657
    %v1922 = vpack.c.b16 %v1666, %v1658
    %v1923 = vpack.c.b16 %v1667, %v1659
    %v1924 = vpack.c.b16 %v1668, %v1660
    %v1925 = vpack.c.b16 %v1669, %v1661
    %v1926 = vpack.c.b16 %v1670, %v1662
    %v1927 = vpack.c.b16 %v1671, %v1663
    %v1928 = vpack.c.b16 %v1672, %v1664
    %2185 = vmatprep.subr.bf16.mxu0 %v1674
    %2186 = vmatpush1.bf16.msra.mxu0 %v1673
    %2187 = vmatprep.subr.bf16.mxu0 %v1682
    %2188 = vmatpush1.bf16.msra.mxu0 %v1681
    %2189 = vmatprep.subr.bf16.mxu0 %v1690
    %2190 = vmatpush1.bf16.msra.mxu0 %v1689
    %2191 = vmatprep.subr.bf16.mxu0 %v1698
    %2192 = vmatpush1.bf16.msra.mxu0 %v1697
    %2193 = vmatprep.subr.bf16.mxu0 %v1706
    %2194 = vmatpush1.bf16.msra.mxu0 %v1705
    %2195 = vmatprep.subr.bf16.mxu0 %v1714
    %2196 = vmatpush1.bf16.msra.mxu0 %v1713
    %2197 = vmatprep.subr.bf16.mxu0 %v1722
    %2198 = vmatpush1.bf16.msra.mxu0 %v1721
    %2199 = vmatprep.subr.bf16.mxu0 %v1730
    %2200 = vmatpush1.bf16.msra.mxu0 %v1729
    %2201 = vmatprep.subr.bf16.mxu0 %v1738
    %2202 = vmatpush1.bf16.msra.mxu0 %v1737
    %2203 = vmatprep.subr.bf16.mxu0 %v1746
    %2204 = vmatpush1.bf16.msra.mxu0 %v1745
    %2205 = vmatprep.subr.bf16.mxu0 %v1754
    %2206 = vmatpush1.bf16.msra.mxu0 %v1753
    %2207 = vmatprep.subr.bf16.mxu0 %v1762
    %2208 = vmatpush1.bf16.msra.mxu0 %v1761
    %2209 = vmatprep.subr.bf16.mxu0 %v1770
    %2210 = vmatpush1.bf16.msra.mxu0 %v1769
    %2211 = vmatprep.subr.bf16.mxu0 %v1778
    %2212 = vmatpush1.bf16.msra.mxu0 %v1777
    %2213 = vmatprep.subr.bf16.mxu0 %v1786
    %2214 = vmatpush1.bf16.msra.mxu0 %v1785
    %2215 = vmatprep.subr.bf16.mxu0 %v1794
    %2216 = vmatpush1.bf16.msra.mxu0 %v1793
    %2217 = vmatprep.mubr.bf16.mxu0 %v604
    %2218 = vmatmul.mubr.bf16.gmra.mrb[0].mxu0 %v603
    %v2219 = vpop.f32.mrb[0].mxu0
    %v2220 = vadd.f32 %v868, %v2219
    %v2221 = vpop.f32.mrb[0].mxu0
    %v2222 = vadd.f32 %v872, %v2221
    %v2223 = vpop.f32.mrb[0].mxu0
    %v2224 = vpop.f32.mrb[0].mxu0
    %2225 = vdwg.mxu0
    %2226 = vmatprep.subr.bf16.mxu0 %v1802
    %2227 = vmatpush1.bf16.msra.mxu0 %v1801
    %2228 = vmatprep.subr.bf16.mxu0 %v1810
    %2229 = vmatpush1.bf16.msra.mxu0 %v1809
    %2230 = vmatprep.subr.bf16.mxu0 %v1818
    %2231 = vmatpush1.bf16.msra.mxu0 %v1817
    %2232 = vmatprep.subr.bf16.mxu0 %v1826
    %2233 = vmatpush1.bf16.msra.mxu0 %v1825
    %2234 = vmatprep.subr.bf16.mxu0 %v1834
    %2235 = vmatpush1.bf16.msra.mxu0 %v1833
    %2236 = vmatprep.subr.bf16.mxu0 %v1842
    %2237 = vmatpush1.bf16.msra.mxu0 %v1841
    %2238 = vmatprep.subr.bf16.mxu0 %v1850
    %2239 = vmatpush1.bf16.msra.mxu0 %v1849
    %2240 = vmatprep.subr.bf16.mxu0 %v1858
    %2241 = vmatpush1.bf16.msra.mxu0 %v1857
    %2242 = vmatprep.subr.bf16.mxu0 %v1866
    %2243 = vmatpush1.bf16.msra.mxu0 %v1865
    %2244 = vmatprep.subr.bf16.mxu0 %v1874
    %2245 = vmatpush1.bf16.msra.mxu0 %v1873
    %2246 = vmatprep.subr.bf16.mxu0 %v1882
    %2247 = vmatpush1.bf16.msra.mxu0 %v1881
    %2248 = vmatprep.subr.bf16.mxu0 %v1890
    %2249 = vmatpush1.bf16.msra.mxu0 %v1889
    %2250 = vmatprep.subr.bf16.mxu0 %v1898
    %2251 = vmatpush1.bf16.msra.mxu0 %v1897
    %2252 = vmatprep.subr.bf16.mxu0 %v1906
    %2253 = vmatpush1.bf16.msra.mxu0 %v1905
    %2254 = vmatprep.subr.bf16.mxu0 %v1914
    %2255 = vmatpush1.bf16.msra.mxu0 %v1913
    %2256 = vmatprep.subr.bf16.mxu0 %v1922
    %2257 = vmatpush1.bf16.msra.mxu0 %v1921
    %2258 = vmatprep.mubr.bf16.mxu0 %v606
    %2259 = vmatmul.mubr.bf16.gmra.mrb[0].mxu0 %v605
    %v2260 = vpop.f32.mrb[0].mxu0
    %v2261 = vadd.f32 %v2220, %v2260
    %v2262 = vpop.f32.mrb[0].mxu0
    %v2263 = vadd.f32 %v2222, %v2262
    %v2264 = vpop.f32.mrb[0].mxu0
    %v2265 = vpop.f32.mrb[0].mxu0
    %2266 = vdwg.mxu0
    %2267 = vmatprep.subr.bf16.mxu0 %v1676
    %2268 = vmatpush1.bf16.msra.mxu0 %v1675
    %2269 = vmatprep.subr.bf16.mxu0 %v1684
    %2270 = vmatpush1.bf16.msra.mxu0 %v1683
    %2271 = vmatprep.subr.bf16.mxu0 %v1692
    %2272 = vmatpush1.bf16.msra.mxu0 %v1691
    %2273 = vmatprep.subr.bf16.mxu0 %v1700
    %2274 = vmatpush1.bf16.msra.mxu0 %v1699
    %2275 = vmatprep.subr.bf16.mxu0 %v1708
    %2276 = vmatpush1.bf16.msra.mxu0 %v1707
    %2277 = vmatprep.subr.bf16.mxu0 %v1716
    %2278 = vmatpush1.bf16.msra.mxu0 %v1715
    %2279 = vmatprep.subr.bf16.mxu0 %v1724
    %2280 = vmatpush1.bf16.msra.mxu0 %v1723
    %2281 = vmatprep.subr.bf16.mxu0 %v1732
    %2282 = vmatpush1.bf16.msra.mxu0 %v1731
    %2283 = vmatprep.subr.bf16.mxu0 %v1740
    %2284 = vmatpush1.bf16.msra.mxu0 %v1739
    %2285 = vmatprep.subr.bf16.mxu0 %v1748
    %2286 = vmatpush1.bf16.msra.mxu0 %v1747
    %2287 = vmatprep.subr.bf16.mxu0 %v1756
    %2288 = vmatpush1.bf16.msra.mxu0 %v1755
    %2289 = vmatprep.subr.bf16.mxu0 %v1764
    %2290 = vmatpush1.bf16.msra.mxu0 %v1763
    %2291 = vmatprep.subr.bf16.mxu0 %v1772
    %2292 = vmatpush1.bf16.msra.mxu0 %v1771
    %2293 = vmatprep.subr.bf16.mxu0 %v1780
    %2294 = vmatpush1.bf16.msra.mxu0 %v1779
    %2295 = vmatprep.subr.bf16.mxu0 %v1788
    %2296 = vmatpush1.bf16.msra.mxu0 %v1787
    %2297 = vmatprep.subr.bf16.mxu0 %v1796
    %2298 = vmatpush1.bf16.msra.mxu0 %v1795
    %2299 = vmatprep.mubr.bf16.mxu0 %v604
    %2300 = vmatmul.mubr.bf16.gmra.mrb[0].mxu0 %v603
    %v2301 = vpop.f32.mrb[0].mxu0
    %v2302 = vadd.f32 %v876, %v2301
    %v2303 = vpop.f32.mrb[0].mxu0
    %v2304 = vadd.f32 %v880, %v2303
    %v2305 = vpop.f32.mrb[0].mxu0
    %v2306 = vpop.f32.mrb[0].mxu0
    %2307 = vdwg.mxu0
    %2308 = vmatprep.subr.bf16.mxu0 %v1804
    %2309 = vmatpush1.bf16.msra.mxu0 %v1803
    %2310 = vmatprep.subr.bf16.mxu0 %v1812
    %2311 = vmatpush1.bf16.msra.mxu0 %v1811
    %2312 = vmatprep.subr.bf16.mxu0 %v1820
    %2313 = vmatpush1.bf16.msra.mxu0 %v1819
    %2314 = vmatprep.subr.bf16.mxu0 %v1828
    %2315 = vmatpush1.bf16.msra.mxu0 %v1827
    %2316 = vmatprep.subr.bf16.mxu0 %v1836
    %2317 = vmatpush1.bf16.msra.mxu0 %v1835
    %2318 = vmatprep.subr.bf16.mxu0 %v1844
    %2319 = vmatpush1.bf16.msra.mxu0 %v1843
    %2320 = vmatprep.subr.bf16.mxu0 %v1852
    %2321 = vmatpush1.bf16.msra.mxu0 %v1851
    %2322 = vmatprep.subr.bf16.mxu0 %v1860
    %2323 = vmatpush1.bf16.msra.mxu0 %v1859
    %2324 = vmatprep.subr.bf16.mxu0 %v1868
    %2325 = vmatpush1.bf16.msra.mxu0 %v1867
    %2326 = vmatprep.subr.bf16.mxu0 %v1876
    %2327 = vmatpush1.bf16.msra.mxu0 %v1875
    %2328 = vmatprep.subr.bf16.mxu0 %v1884
    %2329 = vmatpush1.bf16.msra.mxu0 %v1883
    %2330 = vmatprep.subr.bf16.mxu0 %v1892
    %2331 = vmatpush1.bf16.msra.mxu0 %v1891
    %2332 = vmatprep.subr.bf16.mxu0 %v1900
    %2333 = vmatpush1.bf16.msra.mxu0 %v1899
    %2334 = vmatprep.subr.bf16.mxu0 %v1908
    %2335 = vmatpush1.bf16.msra.mxu0 %v1907
    %2336 = vmatprep.subr.bf16.mxu0 %v1916
    %2337 = vmatpush1.bf16.msra.mxu0 %v1915
    %2338 = vmatprep.subr.bf16.mxu0 %v1924
    %2339 = vmatpush1.bf16.msra.mxu0 %v1923
    %2340 = vmatprep.mubr.bf16.mxu0 %v606
    %2341 = vmatmul.mubr.bf16.gmra.mrb[0].mxu0 %v605
    %v2342 = vpop.f32.mrb[0].mxu0
    %v2343 = vadd.f32 %v2302, %v2342
    %v2344 = vpop.f32.mrb[0].mxu0
    %v2345 = vadd.f32 %v2304, %v2344
    %v2346 = vpop.f32.mrb[0].mxu0
    %v2347 = vpop.f32.mrb[0].mxu0
    %2348 = vdwg.mxu0
    %2349 = vmatprep.subr.bf16.mxu0 %v1678
    %2350 = vmatpush1.bf16.msra.mxu0 %v1677
    %2351 = vmatprep.subr.bf16.mxu0 %v1686
    %2352 = vmatpush1.bf16.msra.mxu0 %v1685
    %2353 = vmatprep.subr.bf16.mxu0 %v1694
    %2354 = vmatpush1.bf16.msra.mxu0 %v1693
    %2355 = vmatprep.subr.bf16.mxu0 %v1702
    %2356 = vmatpush1.bf16.msra.mxu0 %v1701
    %2357 = vmatprep.subr.bf16.mxu0 %v1710
    %2358 = vmatpush1.bf16.msra.mxu0 %v1709
    %2359 = vmatprep.subr.bf16.mxu0 %v1718
    %2360 = vmatpush1.bf16.msra.mxu0 %v1717
    %2361 = vmatprep.subr.bf16.mxu0 %v1726
    %2362 = vmatpush1.bf16.msra.mxu0 %v1725
    %2363 = vmatprep.subr.bf16.mxu0 %v1734
    %2364 = vmatpush1.bf16.msra.mxu0 %v1733
    %2365 = vmatprep.subr.bf16.mxu0 %v1742
    %2366 = vmatpush1.bf16.msra.mxu0 %v1741
    %2367 = vmatprep.subr.bf16.mxu0 %v1750
    %2368 = vmatpush1.bf16.msra.mxu0 %v1749
    %2369 = vmatprep.subr.bf16.mxu0 %v1758
    %2370 = vmatpush1.bf16.msra.mxu0 %v1757
    %2371 = vmatprep.subr.bf16.mxu0 %v1766
    %2372 = vmatpush1.bf16.msra.mxu0 %v1765
    %2373 = vmatprep.subr.bf16.mxu0 %v1774
    %2374 = vmatpush1.bf16.msra.mxu0 %v1773
    %2375 = vmatprep.subr.bf16.mxu0 %v1782
    %2376 = vmatpush1.bf16.msra.mxu0 %v1781
    %2377 = vmatprep.subr.bf16.mxu0 %v1790
    %2378 = vmatpush1.bf16.msra.mxu0 %v1789
    %2379 = vmatprep.subr.bf16.mxu0 %v1798
    %2380 = vmatpush1.bf16.msra.mxu0 %v1797
    %2381 = vmatprep.mubr.bf16.mxu0 %v604
    %2382 = vmatmul.mubr.bf16.gmra.mrb[0].mxu0 %v603
    %v2383 = vpop.f32.mrb[0].mxu0
    %v2384 = vadd.f32 %v884, %v2383
    %v2385 = vpop.f32.mrb[0].mxu0
    %v2386 = vadd.f32 %v888, %v2385
    %v2387 = vpop.f32.mrb[0].mxu0
    %v2388 = vpop.f32.mrb[0].mxu0
    %2389 = vdwg.mxu0
    %2390 = vmatprep.subr.bf16.mxu0 %v1806
    %2391 = vmatpush1.bf16.msra.mxu0 %v1805
    %2392 = vmatprep.subr.bf16.mxu0 %v1814
    %2393 = vmatpush1.bf16.msra.mxu0 %v1813
    %2394 = vmatprep.subr.bf16.mxu0 %v1822
    %2395 = vmatpush1.bf16.msra.mxu0 %v1821
    %2396 = vmatprep.subr.bf16.mxu0 %v1830
    %2397 = vmatpush1.bf16.msra.mxu0 %v1829
    %2398 = vmatprep.subr.bf16.mxu0 %v1838
    %2399 = vmatpush1.bf16.msra.mxu0 %v1837
    %2400 = vmatprep.subr.bf16.mxu0 %v1846
    %2401 = vmatpush1.bf16.msra.mxu0 %v1845
    %2402 = vmatprep.subr.bf16.mxu0 %v1854
    %2403 = vmatpush1.bf16.msra.mxu0 %v1853
    %2404 = vmatprep.subr.bf16.mxu0 %v1862
    %2405 = vmatpush1.bf16.msra.mxu0 %v1861
    %2406 = vmatprep.subr.bf16.mxu0 %v1870
    %2407 = vmatpush1.bf16.msra.mxu0 %v1869
    %2408 = vmatprep.subr.bf16.mxu0 %v1878
    %2409 = vmatpush1.bf16.msra.mxu0 %v1877
    %2410 = vmatprep.subr.bf16.mxu0 %v1886
    %2411 = vmatpush1.bf16.msra.mxu0 %v1885
    %2412 = vmatprep.subr.bf16.mxu0 %v1894
    %2413 = vmatpush1.bf16.msra.mxu0 %v1893
    %2414 = vmatprep.subr.bf16.mxu0 %v1902
    %2415 = vmatpush1.bf16.msra.mxu0 %v1901
    %2416 = vmatprep.subr.bf16.mxu0 %v1910
    %2417 = vmatpush1.bf16.msra.mxu0 %v1909
    %2418 = vmatprep.subr.bf16.mxu0 %v1918
    %2419 = vmatpush1.bf16.msra.mxu0 %v1917
    %2420 = vmatprep.subr.bf16.mxu0 %v1926
    %2421 = vmatpush1.bf16.msra.mxu0 %v1925
    %2422 = vmatprep.mubr.bf16.mxu0 %v606
    %2423 = vmatmul.mubr.bf16.gmra.mrb[0].mxu0 %v605
    %v2424 = vpop.f32.mrb[0].mxu0
    %v2425 = vadd.f32 %v2384, %v2424
    %v2426 = vpop.f32.mrb[0].mxu0
    %v2427 = vadd.f32 %v2386, %v2426
    %v2428 = vpop.f32.mrb[0].mxu0
    %v2429 = vpop.f32.mrb[0].mxu0
    %2430 = vdwg.mxu0
    %2431 = vmatprep.subr.bf16.mxu0 %v1680
    %2432 = vmatpush1.bf16.msra.mxu0 %v1679
    %2433 = vmatprep.subr.bf16.mxu0 %v1688
    %2434 = vmatpush1.bf16.msra.mxu0 %v1687
    %2435 = vmatprep.subr.bf16.mxu0 %v1696
    %2436 = vmatpush1.bf16.msra.mxu0 %v1695
    %2437 = vmatprep.subr.bf16.mxu0 %v1704
    %2438 = vmatpush1.bf16.msra.mxu0 %v1703
    %2439 = vmatprep.subr.bf16.mxu0 %v1712
    %2440 = vmatpush1.bf16.msra.mxu0 %v1711
    %2441 = vmatprep.subr.bf16.mxu0 %v1720
    %2442 = vmatpush1.bf16.msra.mxu0 %v1719
    %2443 = vmatprep.subr.bf16.mxu0 %v1728
    %2444 = vmatpush1.bf16.msra.mxu0 %v1727
    %2445 = vmatprep.subr.bf16.mxu0 %v1736
    %2446 = vmatpush1.bf16.msra.mxu0 %v1735
    %2447 = vmatprep.subr.bf16.mxu0 %v1744
    %2448 = vmatpush1.bf16.msra.mxu0 %v1743
    %2449 = vmatprep.subr.bf16.mxu0 %v1752
    %2450 = vmatpush1.bf16.msra.mxu0 %v1751
    %2451 = vmatprep.subr.bf16.mxu0 %v1760
    %2452 = vmatpush1.bf16.msra.mxu0 %v1759
    %2453 = vmatprep.subr.bf16.mxu0 %v1768
    %2454 = vmatpush1.bf16.msra.mxu0 %v1767
    %2455 = vmatprep.subr.bf16.mxu0 %v1776
    %2456 = vmatpush1.bf16.msra.mxu0 %v1775
    %2457 = vmatprep.subr.bf16.mxu0 %v1784
    %2458 = vmatpush1.bf16.msra.mxu0 %v1783
    %2459 = vmatprep.subr.bf16.mxu0 %v1792
    %2460 = vmatpush1.bf16.msra.mxu0 %v1791
    %2461 = vmatprep.subr.bf16.mxu0 %v1800
    %2462 = vmatpush1.bf16.msra.mxu0 %v1799
    %2463 = vmatprep.mubr.bf16.mxu0 %v604
    %2464 = vmatmul.mubr.bf16.gmra.mrb[0].mxu0 %v603
    %v2465 = vpop.f32.mrb[0].mxu0
    %v2466 = vadd.f32 %v892, %v2465
    %v2467 = vpop.f32.mrb[0].mxu0
    %v2468 = vadd.f32 %v896, %v2467
    %v2469 = vpop.f32.mrb[0].mxu0
    %v2470 = vpop.f32.mrb[0].mxu0
    %2471 = vdwg.mxu0
    %2472 = vmatprep.subr.bf16.mxu0 %v1808
    %2473 = vmatpush1.bf16.msra.mxu0 %v1807
    %2474 = vmatprep.subr.bf16.mxu0 %v1816
    %2475 = vmatpush1.bf16.msra.mxu0 %v1815
    %2476 = vmatprep.subr.bf16.mxu0 %v1824
    %2477 = vmatpush1.bf16.msra.mxu0 %v1823
    %2478 = vmatprep.subr.bf16.mxu0 %v1832
    %2479 = vmatpush1.bf16.msra.mxu0 %v1831
    %2480 = vmatprep.subr.bf16.mxu0 %v1840
    %2481 = vmatpush1.bf16.msra.mxu0 %v1839
    %2482 = vmatprep.subr.bf16.mxu0 %v1848
    %2483 = vmatpush1.bf16.msra.mxu0 %v1847
    %2484 = vmatprep.subr.bf16.mxu0 %v1856
    %2485 = vmatpush1.bf16.msra.mxu0 %v1855
    %2486 = vmatprep.subr.bf16.mxu0 %v1864
    %2487 = vmatpush1.bf16.msra.mxu0 %v1863
    %2488 = vmatprep.subr.bf16.mxu0 %v1872
    %2489 = vmatpush1.bf16.msra.mxu0 %v1871
    %2490 = vmatprep.subr.bf16.mxu0 %v1880
    %2491 = vmatpush1.bf16.msra.mxu0 %v1879
    %2492 = vmatprep.subr.bf16.mxu0 %v1888
    %2493 = vmatpush1.bf16.msra.mxu0 %v1887
    %2494 = vmatprep.subr.bf16.mxu0 %v1896
    %2495 = vmatpush1.bf16.msra.mxu0 %v1895
    %2496 = vmatprep.subr.bf16.mxu0 %v1904
    %2497 = vmatpush1.bf16.msra.mxu0 %v1903
    %2498 = vmatprep.subr.bf16.mxu0 %v1912
    %2499 = vmatpush1.bf16.msra.mxu0 %v1911
    %2500 = vmatprep.subr.bf16.mxu0 %v1920
    %2501 = vmatpush1.bf16.msra.mxu0 %v1919
    %2502 = vmatprep.subr.bf16.mxu0 %v1928
    %2503 = vmatpush1.bf16.msra.mxu0 %v1927
    %2504 = vmatprep.mubr.bf16.mxu0 %v606
    %2505 = vmatmul.mubr.bf16.gmra.mrb[0].mxu0 %v605
    %v2506 = vpop.f32.mrb[0].mxu0
    %v2507 = vadd.f32 %v2466, %v2506
    %v2508 = vpop.f32.mrb[0].mxu0
    %v2509 = vadd.f32 %v2468, %v2508
    %v2510 = vpop.f32.mrb[0].mxu0
    %v2511 = vpop.f32.mrb[0].mxu0
    %2512 = vdwg.mxu0
    %v2513 = vmax.f32 %v2261, 0.0
    %v2514 = vmax.f32 %v2263, 0.0
    %v2515 = vmax.f32 %v2343, 0.0
    %v2516 = vmax.f32 %v2345, 0.0
    %v2517 = vmax.f32 %v2425, 0.0
    %v2518 = vmax.f32 %v2427, 0.0
    %v2519 = vmax.f32 %v2507, 0.0
    %v2520 = vmax.f32 %v2509, 0.0
    %v2521 = vpack.c.bf16 %v2513, %v2513
    %v2522 = vpack.c.bf16 %v2514, %v2514
    %v2523 = vpack.c.bf16 %v2515, %v2515
    %v2524 = vpack.c.bf16 %v2516, %v2516
    %v2525 = vpack.c.bf16 %v2517, %v2517
    %v2526 = vpack.c.bf16 %v2518, %v2518
    %v2527 = vpack.c.bf16 %v2519, %v2519
    %v2528 = vpack.c.bf16 %v2520, %v2520
    %v2529 = vld [vmem:[#allocation9] sm:$0xff]
    %v2530 = vld [vmem:[#allocation9 + $0x8] sm:$0xff]
    %v2531 = vld [vmem:[#allocation9 + $0x10] sm:$0xff]
    %v2532 = vld [vmem:[#allocation9 + $0x18] sm:$0xf]
    %v2533 = vld [vmem:[#allocation9 + $0x1c] sm:$0xff]
    %v2534 = vld [vmem:[#allocation9 + $0x24] sm:$0xff]
    %v2535 = vld [vmem:[#allocation9 + $0x2c] sm:$0xff]
    %v2536 = vld [vmem:[#allocation9 + $0x34] sm:$0xf]
    %v2537 = vld [vmem:[#allocation9 + $0x38] sm:$0xff]
    %v2538 = vld [vmem:[#allocation9 + $0x40] sm:$0xff]
    %v2539 = vld [vmem:[#allocation9 + $0x48] sm:$0xff]
    %v2540 = vld [vmem:[#allocation9 + $0x50] sm:$0xf]
    %v2541 = vld [vmem:[#allocation9 + $0x54] sm:$0xff]
    %v2542 = vld [vmem:[#allocation9 + $0x5c] sm:$0xff]
    %v2543 = vld [vmem:[#allocation9 + $0x64] sm:$0xff]
    %v2544 = vld [vmem:[#allocation9 + $0x6c] sm:$0xf]
    %v2545 = vld [vmem:[#allocation9 + $0x70] sm:$0xff]
    %v2546 = vld [vmem:[#allocation9 + $0x78] sm:$0xff]
    %v2547 = vld [vmem:[#allocation9 + $0x80] sm:$0xff]
    %v2548 = vld [vmem:[#allocation9 + $0x88] sm:$0xf]
    %v2549 = vld [vmem:[#allocation9 + $0x8c] sm:$0xff]
    %v2550 = vld [vmem:[#allocation9 + $0x94] sm:$0xff]
    %v2551 = vld [vmem:[#allocation9 + $0x9c] sm:$0xff]
    %v2552 = vld [vmem:[#allocation9 + $0xa4] sm:$0xf]
    %v2553 = vld [vmem:[#allocation9 + $0xa8] sm:$0xff]
    %v2554 = vld [vmem:[#allocation9 + $0xb0] sm:$0xff]
    %v2555 = vld [vmem:[#allocation9 + $0xb8] sm:$0xff]
    %v2556 = vld [vmem:[#allocation9 + $0xc0] sm:$0xf]
    %v2557 = vld [vmem:[#allocation9 + $0xc4] sm:$0xff]
    %v2558 = vld [vmem:[#allocation9 + $0xcc] sm:$0xff]
    %v2559 = vld [vmem:[#allocation9 + $0xd4] sm:$0xff]
    %v2560 = vld [vmem:[#allocation9 + $0xdc] sm:$0xf]
    %v2561 = vld [vmem:[#allocation9 + $0xe0] sm:$0xff]
    %v2562 = vld [vmem:[#allocation9 + $0xe8] sm:$0xff]
    %v2563 = vld [vmem:[#allocation9 + $0xf0] sm:$0xff]
    %v2564 = vld [vmem:[#allocation9 + $0xf8] sm:$0xf]
    %v2565 = vld [vmem:[#allocation9 + $0xfc] sm:$0xff]
    %v2566 = vld [vmem:[#allocation9 + $0x104] sm:$0xff]
    %v2567 = vld [vmem:[#allocation9 + $0x10c] sm:$0xff]
    %v2568 = vld [vmem:[#allocation9 + $0x114] sm:$0xf]
    %v2569 = vld [vmem:[#allocation9 + $0x118] sm:$0xff]
    %v2570 = vld [vmem:[#allocation9 + $0x120] sm:$0xff]
    %v2571 = vld [vmem:[#allocation9 + $0x128] sm:$0xff]
    %v2572 = vld [vmem:[#allocation9 + $0x130] sm:$0xf]
    %v2573 = vld [vmem:[#allocation9 + $0x134] sm:$0xff]
    %v2574 = vld [vmem:[#allocation9 + $0x13c] sm:$0xff]
    %v2575 = vld [vmem:[#allocation9 + $0x144] sm:$0xff]
    %v2576 = vld [vmem:[#allocation9 + $0x14c] sm:$0xf]
    %v2577 = vld [vmem:[#allocation9 + $0x150] sm:$0xff]
    %v2578 = vld [vmem:[#allocation9 + $0x158] sm:$0xff]
    %v2579 = vld [vmem:[#allocation9 + $0x160] sm:$0xff]
    %v2580 = vld [vmem:[#allocation9 + $0x168] sm:$0xf]
    %v2581 = vld [vmem:[#allocation9 + $0x16c] sm:$0xff]
    %v2582 = vld [vmem:[#allocation9 + $0x174] sm:$0xff]
    %v2583 = vld [vmem:[#allocation9 + $0x17c] sm:$0xff]
    %v2584 = vld [vmem:[#allocation9 + $0x184] sm:$0xf]
    %v2585 = vld [vmem:[#allocation9 + $0x188] sm:$0xff]
    %v2586 = vld [vmem:[#allocation9 + $0x190] sm:$0xff]
    %v2587 = vld [vmem:[#allocation9 + $0x198] sm:$0xff]
    %v2588 = vld [vmem:[#allocation9 + $0x1a0] sm:$0xf]
    %v2589 = vld [vmem:[#allocation9 + $0x1a4] sm:$0xff]
    %v2590 = vld [vmem:[#allocation9 + $0x1ac] sm:$0xff]
    %v2591 = vld [vmem:[#allocation9 + $0x1b4] sm:$0xff]
    %v2592 = vld [vmem:[#allocation9 + $0x1bc] sm:$0xf]
    %v2593 = vld [vmem:[#allocation9 + $0x1c0] sm:$0xff]
    %v2594 = vld [vmem:[#allocation9 + $0x1c8] sm:$0xff]
    %v2595 = vld [vmem:[#allocation9 + $0x1d0] sm:$0xff]
    %v2596 = vld [vmem:[#allocation9 + $0x1d8] sm:$0xf]
    %v2597 = vld [vmem:[#allocation9 + $0x1dc] sm:$0xff]
    %v2598 = vld [vmem:[#allocation9 + $0x1e4] sm:$0xff]
    %v2599 = vld [vmem:[#allocation9 + $0x1ec] sm:$0xff]
    %v2600 = vld [vmem:[#allocation9 + $0x1f4] sm:$0xf]
    %v2601 = vld [vmem:[#allocation9 + $0x1f8] sm:$0xff]
    %v2602 = vld [vmem:[#allocation9 + $0x200] sm:$0xff]
    %v2603 = vld [vmem:[#allocation9 + $0x208] sm:$0xff]
    %v2604 = vld [vmem:[#allocation9 + $0x210] sm:$0xf]
    %v2605 = vld [vmem:[#allocation9 + $0x214] sm:$0xff]
    %v2606 = vld [vmem:[#allocation9 + $0x21c] sm:$0xff]
    %v2607 = vld [vmem:[#allocation9 + $0x224] sm:$0xff]
    %v2608 = vld [vmem:[#allocation9 + $0x22c] sm:$0xf]
    %v2609 = vld [vmem:[#allocation9 + $0x230] sm:$0xff]
    %v2610 = vld [vmem:[#allocation9 + $0x238] sm:$0xff]
    %v2611 = vld [vmem:[#allocation9 + $0x240] sm:$0xff]
    %v2612 = vld [vmem:[#allocation9 + $0x248] sm:$0xf]
    %v2613 = vld [vmem:[#allocation9 + $0x24c] sm:$0xff]
    %v2614 = vld [vmem:[#allocation9 + $0x254] sm:$0xff]
    %v2615 = vld [vmem:[#allocation9 + $0x25c] sm:$0xff]
    %v2616 = vld [vmem:[#allocation9 + $0x264] sm:$0xf]
    %v2617 = vld [vmem:[#allocation9 + $0x268] sm:$0xff]
    %v2618 = vld [vmem:[#allocation9 + $0x270] sm:$0xff]
    %v2619 = vld [vmem:[#allocation9 + $0x278] sm:$0xff]
    %v2620 = vld [vmem:[#allocation9 + $0x280] sm:$0xf]
    %v2621 = vld [vmem:[#allocation9 + $0x284] sm:$0xff]
    %v2622 = vld [vmem:[#allocation9 + $0x28c] sm:$0xff]
    %v2623 = vld [vmem:[#allocation9 + $0x294] sm:$0xff]
    %v2624 = vld [vmem:[#allocation9 + $0x29c] sm:$0xf]
    %v2625 = vld [vmem:[#allocation9 + $0x2a0] sm:$0xff]
    %v2626 = vld [vmem:[#allocation9 + $0x2a8] sm:$0xff]
    %v2627 = vld [vmem:[#allocation9 + $0x2b0] sm:$0xff]
    %v2628 = vld [vmem:[#allocation9 + $0x2b8] sm:$0xf]
    %v2629 = vld [vmem:[#allocation9 + $0x2bc] sm:$0xff]
    %v2630 = vld [vmem:[#allocation9 + $0x2c4] sm:$0xff]
    %v2631 = vld [vmem:[#allocation9 + $0x2cc] sm:$0xff]
    %v2632 = vld [vmem:[#allocation9 + $0x2d4] sm:$0xf]
    %v2633 = vld [vmem:[#allocation9 + $0x2d8] sm:$0xff]
    %v2634 = vld [vmem:[#allocation9 + $0x2e0] sm:$0xff]
    %v2635 = vld [vmem:[#allocation9 + $0x2e8] sm:$0xff]
    %v2636 = vld [vmem:[#allocation9 + $0x2f0] sm:$0xf]
    %v2637 = vld [vmem:[#allocation9 + $0x2f4] sm:$0xff]
    %v2638 = vld [vmem:[#allocation9 + $0x2fc] sm:$0xff]
    %v2639 = vld [vmem:[#allocation9 + $0x304] sm:$0xff]
    %v2640 = vld [vmem:[#allocation9 + $0x30c] sm:$0xf]
    %v2641 = vld [vmem:[#allocation9 + $0x310] sm:$0xff]
    %v2642 = vld [vmem:[#allocation9 + $0x318] sm:$0xff]
    %v2643 = vld [vmem:[#allocation9 + $0x320] sm:$0xff]
    %v2644 = vld [vmem:[#allocation9 + $0x328] sm:$0xf]
    %v2645 = vld [vmem:[#allocation9 + $0x32c] sm:$0xff]
    %v2646 = vld [vmem:[#allocation9 + $0x334] sm:$0xff]
    %v2647 = vld [vmem:[#allocation9 + $0x33c] sm:$0xff]
    %v2648 = vld [vmem:[#allocation9 + $0x344] sm:$0xf]
    %v2649 = vld [vmem:[#allocation9 + $0x348] sm:$0xff]
    %v2650 = vld [vmem:[#allocation9 + $0x350] sm:$0xff]
    %v2651 = vld [vmem:[#allocation9 + $0x358] sm:$0xff]
    %v2652 = vld [vmem:[#allocation9 + $0x360] sm:$0xf]
    %v2653 = vld [vmem:[#allocation9 + $0x364] sm:$0xff]
    %v2654 = vld [vmem:[#allocation9 + $0x36c] sm:$0xff]
    %v2655 = vld [vmem:[#allocation9 + $0x374] sm:$0xff]
    %v2656 = vld [vmem:[#allocation9 + $0x37c] sm:$0xf]
    %v2657 = vld [vmem:[#allocation9 + $0x380] sm:$0xff]
    %v2658 = vld [vmem:[#allocation9 + $0x388] sm:$0xff]
    %v2659 = vld [vmem:[#allocation9 + $0x390] sm:$0xff]
    %v2660 = vld [vmem:[#allocation9 + $0x398] sm:$0xf]
    %v2661 = vld [vmem:[#allocation9 + $0x39c] sm:$0xff]
    %v2662 = vld [vmem:[#allocation9 + $0x3a4] sm:$0xff]
    %v2663 = vld [vmem:[#allocation9 + $0x3ac] sm:$0xff]
    %v2664 = vld [vmem:[#allocation9 + $0x3b4] sm:$0xf]
    %v2665 = vld [vmem:[#allocation9 + $0x3b8] sm:$0xff]
    %v2666 = vld [vmem:[#allocation9 + $0x3c0] sm:$0xff]
    %v2667 = vld [vmem:[#allocation9 + $0x3c8] sm:$0xff]
    %v2668 = vld [vmem:[#allocation9 + $0x3d0] sm:$0xf]
    %v2669 = vld [vmem:[#allocation9 + $0x3d4] sm:$0xff]
    %v2670 = vld [vmem:[#allocation9 + $0x3dc] sm:$0xff]
    %v2671 = vld [vmem:[#allocation9 + $0x3e4] sm:$0xff]
    %v2672 = vld [vmem:[#allocation9 + $0x3ec] sm:$0xf]
    %v2673 = vld [vmem:[#allocation9 + $0x3f0] sm:$0xff]
    %v2674 = vld [vmem:[#allocation9 + $0x3f8] sm:$0xff]
    %v2675 = vld [vmem:[#allocation9 + $0x400] sm:$0xff]
    %v2676 = vld [vmem:[#allocation9 + $0x408] sm:$0xf]
    %v2677 = vld [vmem:[#allocation9 + $0x40c] sm:$0xff]
    %v2678 = vld [vmem:[#allocation9 + $0x414] sm:$0xff]
    %v2679 = vld [vmem:[#allocation9 + $0x41c] sm:$0xff]
    %v2680 = vld [vmem:[#allocation9 + $0x424] sm:$0xf]
    %v2681 = vld [vmem:[#allocation9 + $0x428] sm:$0xff]
    %v2682 = vld [vmem:[#allocation9 + $0x430] sm:$0xff]
    %v2683 = vld [vmem:[#allocation9 + $0x438] sm:$0xff]
    %v2684 = vld [vmem:[#allocation9 + $0x440] sm:$0xf]
    %v2685 = vld [vmem:[#allocation9 + $0x444] sm:$0xff]
    %v2686 = vld [vmem:[#allocation9 + $0x44c] sm:$0xff]
    %v2687 = vld [vmem:[#allocation9 + $0x454] sm:$0xff]
    %v2688 = vld [vmem:[#allocation9 + $0x45c] sm:$0xf]
    %v2689 = vld [vmem:[#allocation9 + $0x460] sm:$0xff]
    %v2690 = vld [vmem:[#allocation9 + $0x468] sm:$0xff]
    %v2691 = vld [vmem:[#allocation9 + $0x470] sm:$0xff]
    %v2692 = vld [vmem:[#allocation9 + $0x478] sm:$0xf]
    %v2693 = vld [vmem:[#allocation9 + $0x47c] sm:$0xff]
    %v2694 = vld [vmem:[#allocation9 + $0x484] sm:$0xff]
    %v2695 = vld [vmem:[#allocation9 + $0x48c] sm:$0xff]
    %v2696 = vld [vmem:[#allocation9 + $0x494] sm:$0xf]
    %v2697 = vld [vmem:[#allocation9 + $0x498] sm:$0xff]
    %v2698 = vld [vmem:[#allocation9 + $0x4a0] sm:$0xff]
    %v2699 = vld [vmem:[#allocation9 + $0x4a8] sm:$0xff]
    %v2700 = vld [vmem:[#allocation9 + $0x4b0] sm:$0xf]
    %v2701 = vld [vmem:[#allocation9 + $0x4b4] sm:$0xff]
    %v2702 = vld [vmem:[#allocation9 + $0x4bc] sm:$0xff]
    %v2703 = vld [vmem:[#allocation9 + $0x4c4] sm:$0xff]
    %v2704 = vld [vmem:[#allocation9 + $0x4cc] sm:$0xf]
    %v2705 = vld [vmem:[#allocation9 + $0x4d0] sm:$0xff]
    %v2706 = vld [vmem:[#allocation9 + $0x4d8] sm:$0xff]
    %v2707 = vld [vmem:[#allocation9 + $0x4e0] sm:$0xff]
    %v2708 = vld [vmem:[#allocation9 + $0x4e8] sm:$0xf]
    %v2709 = vld [vmem:[#allocation9 + $0x4ec] sm:$0xff]
    %v2710 = vld [vmem:[#allocation9 + $0x4f4] sm:$0xff]
    %v2711 = vld [vmem:[#allocation9 + $0x4fc] sm:$0xff]
    %v2712 = vld [vmem:[#allocation9 + $0x504] sm:$0xf]
    %v2713 = vld [vmem:[#allocation9 + $0x508] sm:$0xff]
    %v2714 = vld [vmem:[#allocation9 + $0x510] sm:$0xff]
    %v2715 = vld [vmem:[#allocation9 + $0x518] sm:$0xff]
    %v2716 = vld [vmem:[#allocation9 + $0x520] sm:$0xf]
    %v2717 = vld [vmem:[#allocation9 + $0x524] sm:$0xff]
    %v2718 = vld [vmem:[#allocation9 + $0x52c] sm:$0xff]
    %v2719 = vld [vmem:[#allocation9 + $0x534] sm:$0xff]
    %v2720 = vld [vmem:[#allocation9 + $0x53c] sm:$0xf]
    %v2721 = vld [vmem:[#allocation9 + $0x540] sm:$0xff]
    %v2722 = vld [vmem:[#allocation9 + $0x548] sm:$0xff]
    %v2723 = vld [vmem:[#allocation9 + $0x550] sm:$0xff]
    %v2724 = vld [vmem:[#allocation9 + $0x558] sm:$0xf]
    %v2725 = vld [vmem:[#allocation9 + $0x55c] sm:$0xff]
    %v2726 = vld [vmem:[#allocation9 + $0x564] sm:$0xff]
    %v2727 = vld [vmem:[#allocation9 + $0x56c] sm:$0xff]
    %v2728 = vld [vmem:[#allocation9 + $0x574] sm:$0xf]
    %v2729 = vld [vmem:[#allocation9 + $0x578] sm:$0xff]
    %v2730 = vld [vmem:[#allocation9 + $0x580] sm:$0xff]
    %v2731 = vld [vmem:[#allocation9 + $0x588] sm:$0xff]
    %v2732 = vld [vmem:[#allocation9 + $0x590] sm:$0xf]
    %v2733 = vld [vmem:[#allocation9 + $0x594] sm:$0xff]
    %v2734 = vld [vmem:[#allocation9 + $0x59c] sm:$0xff]
    %v2735 = vld [vmem:[#allocation9 + $0x5a4] sm:$0xff]
    %v2736 = vld [vmem:[#allocation9 + $0x5ac] sm:$0xf]
    %v2737 = vld [vmem:[#allocation9 + $0x5b0] sm:$0xff]
    %v2738 = vld [vmem:[#allocation9 + $0x5b8] sm:$0xff]
    %v2739 = vld [vmem:[#allocation9 + $0x5c0] sm:$0xff]
    %v2740 = vld [vmem:[#allocation9 + $0x5c8] sm:$0xf]
    %v2741 = vld [vmem:[#allocation9 + $0x5cc] sm:$0xff]
    %v2742 = vld [vmem:[#allocation9 + $0x5d4] sm:$0xff]
    %v2743 = vld [vmem:[#allocation9 + $0x5dc] sm:$0xff]
    %v2744 = vld [vmem:[#allocation9 + $0x5e4] sm:$0xf]
    %v2745 = vld [vmem:[#allocation9 + $0x5e8] sm:$0xff]
    %v2746 = vld [vmem:[#allocation9 + $0x5f0] sm:$0xff]
    %v2747 = vld [vmem:[#allocation9 + $0x5f8] sm:$0xff]
    %v2748 = vld [vmem:[#allocation9 + $0x600] sm:$0xf]
    %v2749 = vld [vmem:[#allocation9 + $0x604] sm:$0xff]
    %v2750 = vld [vmem:[#allocation9 + $0x60c] sm:$0xff]
    %v2751 = vld [vmem:[#allocation9 + $0x614] sm:$0xff]
    %v2752 = vld [vmem:[#allocation9 + $0x61c] sm:$0xf]
    %v2753 = vld [vmem:[#allocation9 + $0x620] sm:$0xff]
    %v2754 = vld [vmem:[#allocation9 + $0x628] sm:$0xff]
    %v2755 = vld [vmem:[#allocation9 + $0x630] sm:$0xff]
    %v2756 = vld [vmem:[#allocation9 + $0x638] sm:$0xf]
    %v2757 = vld [vmem:[#allocation9 + $0x63c] sm:$0xff]
    %v2758 = vld [vmem:[#allocation9 + $0x644] sm:$0xff]
    %v2759 = vld [vmem:[#allocation9 + $0x64c] sm:$0xff]
    %v2760 = vld [vmem:[#allocation9 + $0x654] sm:$0xf]
    %v2761 = vld [vmem:[#allocation9 + $0x658] sm:$0xff]
    %v2762 = vld [vmem:[#allocation9 + $0x660] sm:$0xff]
    %v2763 = vld [vmem:[#allocation9 + $0x668] sm:$0xff]
    %v2764 = vld [vmem:[#allocation9 + $0x670] sm:$0xf]
    %v2765 = vld [vmem:[#allocation9 + $0x674] sm:$0xff]
    %v2766 = vld [vmem:[#allocation9 + $0x67c] sm:$0xff]
    %v2767 = vld [vmem:[#allocation9 + $0x684] sm:$0xff]
    %v2768 = vld [vmem:[#allocation9 + $0x68c] sm:$0xf]
    %v2769 = vld [vmem:[#allocation9 + $0x690] sm:$0xff]
    %v2770 = vld [vmem:[#allocation9 + $0x698] sm:$0xff]
    %v2771 = vld [vmem:[#allocation9 + $0x6a0] sm:$0xff]
    %v2772 = vld [vmem:[#allocation9 + $0x6a8] sm:$0xf]
    %v2773 = vld [vmem:[#allocation9 + $0x6ac] sm:$0xff]
    %v2774 = vld [vmem:[#allocation9 + $0x6b4] sm:$0xff]
    %v2775 = vld [vmem:[#allocation9 + $0x6bc] sm:$0xff]
    %v2776 = vld [vmem:[#allocation9 + $0x6c4] sm:$0xf]
    %v2777 = vld [vmem:[#allocation9 + $0x6c8] sm:$0xff]
    %v2778 = vld [vmem:[#allocation9 + $0x6d0] sm:$0xff]
    %v2779 = vld [vmem:[#allocation9 + $0x6d8] sm:$0xff]
    %v2780 = vld [vmem:[#allocation9 + $0x6e0] sm:$0xf]
    %v2781 = vld [vmem:[#allocation9 + $0x6e4] sm:$0xff]
    %v2782 = vld [vmem:[#allocation9 + $0x6ec] sm:$0xff]
    %v2783 = vld [vmem:[#allocation9 + $0x6f4] sm:$0xff]
    %v2784 = vld [vmem:[#allocation9 + $0x6fc] sm:$0xf]
    %v2785 = vld [vmem:[#allocation9 + $0x700] sm:$0xff]
    %v2786 = vld [vmem:[#allocation9 + $0x708] sm:$0xff]
    %v2787 = vld [vmem:[#allocation9 + $0x710] sm:$0xff]
    %v2788 = vld [vmem:[#allocation9 + $0x718] sm:$0xf]
    %v2789 = vld [vmem:[#allocation9 + $0x71c] sm:$0xff]
    %v2790 = vld [vmem:[#allocation9 + $0x724] sm:$0xff]
    %v2791 = vld [vmem:[#allocation9 + $0x72c] sm:$0xff]
    %v2792 = vld [vmem:[#allocation9 + $0x734] sm:$0xf]
    %v2793 = vld [vmem:[#allocation9 + $0x738] sm:$0xff]
    %v2794 = vld [vmem:[#allocation9 + $0x740] sm:$0xff]
    %v2795 = vld [vmem:[#allocation9 + $0x748] sm:$0xff]
    %v2796 = vld [vmem:[#allocation9 + $0x750] sm:$0xf]
    %v2797 = vld [vmem:[#allocation9 + $0x754] sm:$0xff]
    %v2798 = vld [vmem:[#allocation9 + $0x75c] sm:$0xff]
    %v2799 = vld [vmem:[#allocation9 + $0x764] sm:$0xff]
    %v2800 = vld [vmem:[#allocation9 + $0x76c] sm:$0xf]
    %v2801 = vld [vmem:[#allocation9 + $0x770] sm:$0xff]
    %v2802 = vld [vmem:[#allocation9 + $0x778] sm:$0xff]
    %v2803 = vld [vmem:[#allocation9 + $0x780] sm:$0xff]
    %v2804 = vld [vmem:[#allocation9 + $0x788] sm:$0xf]
    %v2805 = vld [vmem:[#allocation9 + $0x78c] sm:$0xff]
    %v2806 = vld [vmem:[#allocation9 + $0x794] sm:$0xff]
    %v2807 = vld [vmem:[#allocation9 + $0x79c] sm:$0xff]
    %v2808 = vld [vmem:[#allocation9 + $0x7a4] sm:$0xf]
    %v2809 = vld [vmem:[#allocation9 + $0x7a8] sm:$0xff]
    %v2810 = vld [vmem:[#allocation9 + $0x7b0] sm:$0xff]
    %v2811 = vld [vmem:[#allocation9 + $0x7b8] sm:$0xff]
    %v2812 = vld [vmem:[#allocation9 + $0x7c0] sm:$0xf]
    %v2813 = vld [vmem:[#allocation9 + $0x7c4] sm:$0xff]
    %v2814 = vld [vmem:[#allocation9 + $0x7cc] sm:$0xff]
    %v2815 = vld [vmem:[#allocation9 + $0x7d4] sm:$0xff]
    %v2816 = vld [vmem:[#allocation9 + $0x7dc] sm:$0xf]
    %v2817 = vld [vmem:[#allocation9 + $0x7e0] sm:$0xff]
    %v2818 = vld [vmem:[#allocation9 + $0x7e8] sm:$0xff]
    %v2819 = vld [vmem:[#allocation9 + $0x7f0] sm:$0xff]
    %v2820 = vld [vmem:[#allocation9 + $0x7f8] sm:$0xf]
    %v2821 = vld [vmem:[#allocation9 + $0x7fc] sm:$0xff]
    %v2822 = vld [vmem:[#allocation9 + $0x804] sm:$0xff]
    %v2823 = vld [vmem:[#allocation9 + $0x80c] sm:$0xff]
    %v2824 = vld [vmem:[#allocation9 + $0x814] sm:$0xf]
    %v2825 = vld [vmem:[#allocation9 + $0x818] sm:$0xff]
    %v2826 = vld [vmem:[#allocation9 + $0x820] sm:$0xff]
    %v2827 = vld [vmem:[#allocation9 + $0x828] sm:$0xff]
    %v2828 = vld [vmem:[#allocation9 + $0x830] sm:$0xf]
    %v2829 = vld [vmem:[#allocation9 + $0x834] sm:$0xff]
    %v2830 = vld [vmem:[#allocation9 + $0x83c] sm:$0xff]
    %v2831 = vld [vmem:[#allocation9 + $0x844] sm:$0xff]
    %v2832 = vld [vmem:[#allocation9 + $0x84c] sm:$0xf]
    %v2833 = vld [vmem:[#allocation9 + $0x850] sm:$0xff]
    %v2834 = vld [vmem:[#allocation9 + $0x858] sm:$0xff]
    %v2835 = vld [vmem:[#allocation9 + $0x860] sm:$0xff]
    %v2836 = vld [vmem:[#allocation9 + $0x868] sm:$0xf]
    %v2837 = vld [vmem:[#allocation9 + $0x86c] sm:$0xff]
    %v2838 = vld [vmem:[#allocation9 + $0x874] sm:$0xff]
    %v2839 = vld [vmem:[#allocation9 + $0x87c] sm:$0xff]
    %v2840 = vld [vmem:[#allocation9 + $0x884] sm:$0xf]
    %v2841 = vld [vmem:[#allocation9 + $0x888] sm:$0xff]
    %v2842 = vld [vmem:[#allocation9 + $0x890] sm:$0xff]
    %v2843 = vld [vmem:[#allocation9 + $0x898] sm:$0xff]
    %v2844 = vld [vmem:[#allocation9 + $0x8a0] sm:$0xf]
    %v2845 = vld [vmem:[#allocation9 + $0x8a4] sm:$0xff]
    %v2846 = vld [vmem:[#allocation9 + $0x8ac] sm:$0xff]
    %v2847 = vld [vmem:[#allocation9 + $0x8b4] sm:$0xff]
    %v2848 = vld [vmem:[#allocation9 + $0x8bc] sm:$0xf]
    %v2849 = vld [vmem:[#allocation9 + $0x8c0] sm:$0xff]
    %v2850 = vld [vmem:[#allocation9 + $0x8c8] sm:$0xff]
    %v2851 = vld [vmem:[#allocation9 + $0x8d0] sm:$0xff]
    %v2852 = vld [vmem:[#allocation9 + $0x8d8] sm:$0xf]
    %v2853 = vld [vmem:[#allocation9 + $0x8dc] sm:$0xff]
    %v2854 = vld [vmem:[#allocation9 + $0x8e4] sm:$0xff]
    %v2855 = vld [vmem:[#allocation9 + $0x8ec] sm:$0xff]
    %v2856 = vld [vmem:[#allocation9 + $0x8f4] sm:$0xf]
    %v2857 = vld [vmem:[#allocation9 + $0x8f8] sm:$0xff]
    %v2858 = vld [vmem:[#allocation9 + $0x900] sm:$0xff]
    %v2859 = vld [vmem:[#allocation9 + $0x908] sm:$0xff]
    %v2860 = vld [vmem:[#allocation9 + $0x910] sm:$0xf]
    %v2861 = vld [vmem:[#allocation9 + $0x914] sm:$0xff]
    %v2862 = vld [vmem:[#allocation9 + $0x91c] sm:$0xff]
    %v2863 = vld [vmem:[#allocation9 + $0x924] sm:$0xff]
    %v2864 = vld [vmem:[#allocation9 + $0x92c] sm:$0xf]
    %v2865 = vld [vmem:[#allocation9 + $0x930] sm:$0xff]
    %v2866 = vld [vmem:[#allocation9 + $0x938] sm:$0xff]
    %v2867 = vld [vmem:[#allocation9 + $0x940] sm:$0xff]
    %v2868 = vld [vmem:[#allocation9 + $0x948] sm:$0xf]
    %v2869 = vld [vmem:[#allocation9 + $0x94c] sm:$0xff]
    %v2870 = vld [vmem:[#allocation9 + $0x954] sm:$0xff]
    %v2871 = vld [vmem:[#allocation9 + $0x95c] sm:$0xff]
    %v2872 = vld [vmem:[#allocation9 + $0x964] sm:$0xf]
    %v2873 = vld [vmem:[#allocation9 + $0x968] sm:$0xff]
    %v2874 = vld [vmem:[#allocation9 + $0x970] sm:$0xff]
    %v2875 = vld [vmem:[#allocation9 + $0x978] sm:$0xff]
    %v2876 = vld [vmem:[#allocation9 + $0x980] sm:$0xf]
    %v2877 = vld [vmem:[#allocation9 + $0x984] sm:$0xff]
    %v2878 = vld [vmem:[#allocation9 + $0x98c] sm:$0xff]
    %v2879 = vld [vmem:[#allocation9 + $0x994] sm:$0xff]
    %v2880 = vld [vmem:[#allocation9 + $0x99c] sm:$0xf]
    %v2881 = vld [vmem:[#allocation9 + $0x9a0] sm:$0xff]
    %v2882 = vld [vmem:[#allocation9 + $0x9a8] sm:$0xff]
    %v2883 = vld [vmem:[#allocation9 + $0x9b0] sm:$0xff]
    %v2884 = vld [vmem:[#allocation9 + $0x9b8] sm:$0xf]
    %v2885 = vld [vmem:[#allocation9 + $0x9bc] sm:$0xff]
    %v2886 = vld [vmem:[#allocation9 + $0x9c4] sm:$0xff]
    %v2887 = vld [vmem:[#allocation9 + $0x9cc] sm:$0xff]
    %v2888 = vld [vmem:[#allocation9 + $0x9d4] sm:$0xf]
    %v2889 = vld [vmem:[#allocation9 + $0x9d8] sm:$0xff]
    %v2890 = vld [vmem:[#allocation9 + $0x9e0] sm:$0xff]
    %v2891 = vld [vmem:[#allocation9 + $0x9e8] sm:$0xff]
    %v2892 = vld [vmem:[#allocation9 + $0x9f0] sm:$0xf]
    %v2893 = vld [vmem:[#allocation9 + $0x9f4] sm:$0xff]
    %v2894 = vld [vmem:[#allocation9 + $0x9fc] sm:$0xff]
    %v2895 = vld [vmem:[#allocation9 + $0xa04] sm:$0xff]
    %v2896 = vld [vmem:[#allocation9 + $0xa0c] sm:$0xf]
    %v2897 = vld [vmem:[#allocation9 + $0xa10] sm:$0xff]
    %v2898 = vld [vmem:[#allocation9 + $0xa18] sm:$0xff]
    %v2899 = vld [vmem:[#allocation9 + $0xa20] sm:$0xff]
    %v2900 = vld [vmem:[#allocation9 + $0xa28] sm:$0xf]
    %v2901 = vld [vmem:[#allocation9 + $0xa2c] sm:$0xff]
    %v2902 = vld [vmem:[#allocation9 + $0xa34] sm:$0xff]
    %v2903 = vld [vmem:[#allocation9 + $0xa3c] sm:$0xff]
    %v2904 = vld [vmem:[#allocation9 + $0xa44] sm:$0xf]
    %v2905 = vld [vmem:[#allocation9 + $0xa48] sm:$0xff]
    %v2906 = vld [vmem:[#allocation9 + $0xa50] sm:$0xff]
    %v2907 = vld [vmem:[#allocation9 + $0xa58] sm:$0xff]
    %v2908 = vld [vmem:[#allocation9 + $0xa60] sm:$0xf]
    %v2909 = vld [vmem:[#allocation9 + $0xa64] sm:$0xff]
    %v2910 = vld [vmem:[#allocation9 + $0xa6c] sm:$0xff]
    %v2911 = vld [vmem:[#allocation9 + $0xa74] sm:$0xff]
    %v2912 = vld [vmem:[#allocation9 + $0xa7c] sm:$0xf]
    %v2913 = vld [vmem:[#allocation9 + $0xa80] sm:$0xff]
    %v2914 = vld [vmem:[#allocation9 + $0xa88] sm:$0xff]
    %v2915 = vld [vmem:[#allocation9 + $0xa90] sm:$0xff]
    %v2916 = vld [vmem:[#allocation9 + $0xa98] sm:$0xf]
    %v2917 = vld [vmem:[#allocation9 + $0xa9c] sm:$0xff]
    %v2918 = vld [vmem:[#allocation9 + $0xaa4] sm:$0xff]
    %v2919 = vld [vmem:[#allocation9 + $0xaac] sm:$0xff]
    %v2920 = vld [vmem:[#allocation9 + $0xab4] sm:$0xf]
    %v2921 = vld [vmem:[#allocation9 + $0xab8] sm:$0xff]
    %v2922 = vld [vmem:[#allocation9 + $0xac0] sm:$0xff]
    %v2923 = vld [vmem:[#allocation9 + $0xac8] sm:$0xff]
    %v2924 = vld [vmem:[#allocation9 + $0xad0] sm:$0xf]
    %v2925 = vld [vmem:[#allocation9 + $0xad4] sm:$0xff]
    %v2926 = vld [vmem:[#allocation9 + $0xadc] sm:$0xff]
    %v2927 = vld [vmem:[#allocation9 + $0xae4] sm:$0xff]
    %v2928 = vld [vmem:[#allocation9 + $0xaec] sm:$0xf]
    %v2929 = vld [vmem:[#allocation9 + $0xaf0] sm:$0xff]
    %v2930 = vld [vmem:[#allocation9 + $0xaf8] sm:$0xff]
    %v2931 = vld [vmem:[#allocation9 + $0xb00] sm:$0xff]
    %v2932 = vld [vmem:[#allocation9 + $0xb08] sm:$0xf]
    %v2933 = vld [vmem:[#allocation9 + $0xb0c] sm:$0xff]
    %v2934 = vld [vmem:[#allocation9 + $0xb14] sm:$0xff]
    %v2935 = vld [vmem:[#allocation9 + $0xb1c] sm:$0xff]
    %v2936 = vld [vmem:[#allocation9 + $0xb24] sm:$0xf]
    %v2937 = vld [vmem:[#allocation9 + $0xb28] sm:$0xff]
    %v2938 = vld [vmem:[#allocation9 + $0xb30] sm:$0xff]
    %v2939 = vld [vmem:[#allocation9 + $0xb38] sm:$0xff]
    %v2940 = vld [vmem:[#allocation9 + $0xb40] sm:$0xf]
    %v2941 = vld [vmem:[#allocation9 + $0xb44] sm:$0xff]
    %v2942 = vld [vmem:[#allocation9 + $0xb4c] sm:$0xff]
    %v2943 = vld [vmem:[#allocation9 + $0xb54] sm:$0xff]
    %v2944 = vld [vmem:[#allocation9 + $0xb5c] sm:$0xf]
    %v2945 = vld [vmem:[#allocation9 + $0xb60] sm:$0xff]
    %v2946 = vld [vmem:[#allocation9 + $0xb68] sm:$0xff]
    %v2947 = vld [vmem:[#allocation9 + $0xb70] sm:$0xff]
    %v2948 = vld [vmem:[#allocation9 + $0xb78] sm:$0xf]
    %v2949 = vld [vmem:[#allocation9 + $0xb7c] sm:$0xff]
    %v2950 = vld [vmem:[#allocation9 + $0xb84] sm:$0xff]
    %v2951 = vld [vmem:[#allocation9 + $0xb8c] sm:$0xff]
    %v2952 = vld [vmem:[#allocation9 + $0xb94] sm:$0xf]
    %v2953 = vld [vmem:[#allocation9 + $0xb98] sm:$0xff]
    %v2954 = vld [vmem:[#allocation9 + $0xba0] sm:$0xff]
    %v2955 = vld [vmem:[#allocation9 + $0xba8] sm:$0xff]
    %v2956 = vld [vmem:[#allocation9 + $0xbb0] sm:$0xf]
    %v2957 = vld [vmem:[#allocation9 + $0xbb4] sm:$0xff]
    %v2958 = vld [vmem:[#allocation9 + $0xbbc] sm:$0xff]
    %v2959 = vld [vmem:[#allocation9 + $0xbc4] sm:$0xff]
    %v2960 = vld [vmem:[#allocation9 + $0xbcc] sm:$0xf]
    %v2961 = vld [vmem:[#allocation9 + $0xbd0] sm:$0xff]
    %v2962 = vld [vmem:[#allocation9 + $0xbd8] sm:$0xff]
    %v2963 = vld [vmem:[#allocation9 + $0xbe0] sm:$0xff]
    %v2964 = vld [vmem:[#allocation9 + $0xbe8] sm:$0xf]
    %v2965 = vld [vmem:[#allocation9 + $0xbec] sm:$0xff]
    %v2966 = vld [vmem:[#allocation9 + $0xbf4] sm:$0xff]
    %v2967 = vld [vmem:[#allocation9 + $0xbfc] sm:$0xff]
    %v2968 = vld [vmem:[#allocation9 + $0xc04] sm:$0xf]
    %v2969 = vld [vmem:[#allocation9 + $0xc08] sm:$0xff]
    %v2970 = vld [vmem:[#allocation9 + $0xc10] sm:$0xff]
    %v2971 = vld [vmem:[#allocation9 + $0xc18] sm:$0xff]
    %v2972 = vld [vmem:[#allocation9 + $0xc20] sm:$0xf]
    %v2973 = vld [vmem:[#allocation9 + $0xc24] sm:$0xff]
    %v2974 = vld [vmem:[#allocation9 + $0xc2c] sm:$0xff]
    %v2975 = vld [vmem:[#allocation9 + $0xc34] sm:$0xff]
    %v2976 = vld [vmem:[#allocation9 + $0xc3c] sm:$0xf]
    %v2977 = vld [vmem:[#allocation9 + $0xc40] sm:$0xff]
    %v2978 = vld [vmem:[#allocation9 + $0xc48] sm:$0xff]
    %v2979 = vld [vmem:[#allocation9 + $0xc50] sm:$0xff]
    %v2980 = vld [vmem:[#allocation9 + $0xc58] sm:$0xf]
    %v2981 = vld [vmem:[#allocation9 + $0xc5c] sm:$0xff]
    %v2982 = vld [vmem:[#allocation9 + $0xc64] sm:$0xff]
    %v2983 = vld [vmem:[#allocation9 + $0xc6c] sm:$0xff]
    %v2984 = vld [vmem:[#allocation9 + $0xc74] sm:$0xf]
    %v2985 = vld [vmem:[#allocation9 + $0xc78] sm:$0xff]
    %v2986 = vld [vmem:[#allocation9 + $0xc80] sm:$0xff]
    %v2987 = vld [vmem:[#allocation9 + $0xc88] sm:$0xff]
    %v2988 = vld [vmem:[#allocation9 + $0xc90] sm:$0xf]
    %v2989 = vld [vmem:[#allocation9 + $0xc94] sm:$0xff]
    %v2990 = vld [vmem:[#allocation9 + $0xc9c] sm:$0xff]
    %v2991 = vld [vmem:[#allocation9 + $0xca4] sm:$0xff]
    %v2992 = vld [vmem:[#allocation9 + $0xcac] sm:$0xf]
    %v2993 = vld [vmem:[#allocation9 + $0xcb0] sm:$0xff]
    %v2994 = vld [vmem:[#allocation9 + $0xcb8] sm:$0xff]
    %v2995 = vld [vmem:[#allocation9 + $0xcc0] sm:$0xff]
    %v2996 = vld [vmem:[#allocation9 + $0xcc8] sm:$0xf]
    %v2997 = vld [vmem:[#allocation9 + $0xccc] sm:$0xff]
    %v2998 = vld [vmem:[#allocation9 + $0xcd4] sm:$0xff]
    %v2999 = vld [vmem:[#allocation9 + $0xcdc] sm:$0xff]
    %v3000 = vld [vmem:[#allocation9 + $0xce4] sm:$0xf]
    %v3001 = vld [vmem:[#allocation9 + $0xce8] sm:$0xff]
    %v3002 = vld [vmem:[#allocation9 + $0xcf0] sm:$0xff]
    %v3003 = vld [vmem:[#allocation9 + $0xcf8] sm:$0xff]
    %v3004 = vld [vmem:[#allocation9 + $0xd00] sm:$0xf]
    %v3005 = vld [vmem:[#allocation9 + $0xd04] sm:$0xff]
    %v3006 = vld [vmem:[#allocation9 + $0xd0c] sm:$0xff]
    %v3007 = vld [vmem:[#allocation9 + $0xd14] sm:$0xff]
    %v3008 = vld [vmem:[#allocation9 + $0xd1c] sm:$0xf]
    %v3009 = vld [vmem:[#allocation9 + $0xd20] sm:$0xff]
    %v3010 = vld [vmem:[#allocation9 + $0xd28] sm:$0xff]
    %v3011 = vld [vmem:[#allocation9 + $0xd30] sm:$0xff]
    %v3012 = vld [vmem:[#allocation9 + $0xd38] sm:$0xf]
    %v3013 = vld [vmem:[#allocation9 + $0xd3c] sm:$0xff]
    %v3014 = vld [vmem:[#allocation9 + $0xd44] sm:$0xff]
    %v3015 = vld [vmem:[#allocation9 + $0xd4c] sm:$0xff]
    %v3016 = vld [vmem:[#allocation9 + $0xd54] sm:$0xf]
    %v3017 = vld [vmem:[#allocation9 + $0xd58] sm:$0xff]
    %v3018 = vld [vmem:[#allocation9 + $0xd60] sm:$0xff]
    %v3019 = vld [vmem:[#allocation9 + $0xd68] sm:$0xff]
    %v3020 = vld [vmem:[#allocation9 + $0xd70] sm:$0xf]
    %v3021 = vld [vmem:[#allocation9 + $0xd74] sm:$0xff]
    %v3022 = vld [vmem:[#allocation9 + $0xd7c] sm:$0xff]
    %v3023 = vld [vmem:[#allocation9 + $0xd84] sm:$0xff]
    %v3024 = vld [vmem:[#allocation9 + $0xd8c] sm:$0xf]
    %v3025 = vld [vmem:[#allocation9 + $0xd90] sm:$0xff]
    %v3026 = vld [vmem:[#allocation9 + $0xd98] sm:$0xff]
    %v3027 = vld [vmem:[#allocation9 + $0xda0] sm:$0xff]
    %v3028 = vld [vmem:[#allocation9 + $0xda8] sm:$0xf]
    %v3029 = vld [vmem:[#allocation9 + $0xdac] sm:$0xff]
    %v3030 = vld [vmem:[#allocation9 + $0xdb4] sm:$0xff]
    %v3031 = vld [vmem:[#allocation9 + $0xdbc] sm:$0xff]
    %v3032 = vld [vmem:[#allocation9 + $0xdc4] sm:$0xf]
    %v3033 = vld [vmem:[#allocation9 + $0xdc8] sm:$0xff]
    %v3034 = vld [vmem:[#allocation9 + $0xdd0] sm:$0xff]
    %v3035 = vld [vmem:[#allocation9 + $0xdd8] sm:$0xff]
    %v3036 = vld [vmem:[#allocation9 + $0xde0] sm:$0xf]
    %v3037 = vld [vmem:[#allocation9 + $0xde4] sm:$0xff]
    %v3038 = vld [vmem:[#allocation9 + $0xdec] sm:$0xff]
    %v3039 = vld [vmem:[#allocation9 + $0xdf4] sm:$0xff]
    %v3040 = vld [vmem:[#allocation9 + $0xdfc] sm:$0xf]
    %v3041 = vld [vmem:[#allocation10] sm:$0xff]
    %v3043 = vlaneseq
    %v3044 = vshrl.u32 %v3043, 7
    %v3045 = vsub.s32 0, %v3044
    %v3046 = vrot.slane %v3041, %v3045
    %v3047 = vlaneseq
    %v3048 = vshrl.u32 %v3047, 7
    %v3049 = vsub.s32 1, %v3048
    %v3050 = vrot.slane %v3041, %v3049
    %v3051 = vlaneseq
    %v3052 = vshrl.u32 %v3051, 7
    %v3053 = vsub.s32 2, %v3052
    %v3054 = vrot.slane %v3041, %v3053
    %v3055 = vlaneseq
    %v3056 = vshrl.u32 %v3055, 7
    %v3057 = vsub.s32 3, %v3056
    %v3058 = vrot.slane %v3041, %v3057
    %v3059 = vlaneseq
    %v3060 = vshrl.u32 %v3059, 7
    %v3061 = vsub.s32 4, %v3060
    %v3062 = vrot.slane %v3041, %v3061
    %v3063 = vlaneseq
    %v3064 = vshrl.u32 %v3063, 7
    %v3065 = vsub.s32 5, %v3064
    %v3066 = vrot.slane %v3041, %v3065
    %v3067 = vlaneseq
    %v3068 = vshrl.u32 %v3067, 7
    %v3069 = vsub.s32 6, %v3068
    %v3070 = vrot.slane %v3041, %v3069
    %v3590 = vunpack.c.l.b16 %v2529
    %v3591 = vunpack.c.h.b16 %v2529
    %v3592 = vunpack.c.l.b16 %v2530
    %v3593 = vunpack.c.h.b16 %v2530
    %v3594 = vunpack.c.l.b16 %v2531
    %v3595 = vunpack.c.h.b16 %v2531
    %v3596 = vunpack.c.l.b16 %v2532
    %v3597 = vunpack.c.l.b16 %v2533
    %v3598 = vunpack.c.h.b16 %v2533
    %v3599 = vunpack.c.l.b16 %v2534
    %v3600 = vunpack.c.h.b16 %v2534
    %v3601 = vunpack.c.l.b16 %v2535
    %v3602 = vunpack.c.h.b16 %v2535
    %v3603 = vunpack.c.l.b16 %v2536
    %v3604 = vunpack.c.l.b16 %v2537
    %v3605 = vunpack.c.h.b16 %v2537
    %v3606 = vunpack.c.l.b16 %v2538
    %v3607 = vunpack.c.h.b16 %v2538
    %v3608 = vunpack.c.l.b16 %v2539
    %v3609 = vunpack.c.h.b16 %v2539
    %v3610 = vunpack.c.l.b16 %v2540
    %v3611 = vunpack.c.l.b16 %v2541
    %v3612 = vunpack.c.h.b16 %v2541
    %v3613 = vunpack.c.l.b16 %v2542
    %v3614 = vunpack.c.h.b16 %v2542
    %v3615 = vunpack.c.l.b16 %v2543
    %v3616 = vunpack.c.h.b16 %v2543
    %v3617 = vunpack.c.l.b16 %v2544
    %v3618 = vunpack.c.l.b16 %v2545
    %v3619 = vunpack.c.h.b16 %v2545
    %v3620 = vunpack.c.l.b16 %v2546
    %v3621 = vunpack.c.h.b16 %v2546
    %v3622 = vunpack.c.l.b16 %v2547
    %v3623 = vunpack.c.h.b16 %v2547
    %v3624 = vunpack.c.l.b16 %v2548
    %v3625 = vunpack.c.l.b16 %v2549
    %v3626 = vunpack.c.h.b16 %v2549
    %v3627 = vunpack.c.l.b16 %v2550
    %v3628 = vunpack.c.h.b16 %v2550
    %v3629 = vunpack.c.l.b16 %v2551
    %v3630 = vunpack.c.h.b16 %v2551
    %v3631 = vunpack.c.l.b16 %v2552
    %v3632 = vunpack.c.l.b16 %v2553
    %v3633 = vunpack.c.h.b16 %v2553
    %v3634 = vunpack.c.l.b16 %v2554
    %v3635 = vunpack.c.h.b16 %v2554
    %v3636 = vunpack.c.l.b16 %v2555
    %v3637 = vunpack.c.h.b16 %v2555
    %v3638 = vunpack.c.l.b16 %v2556
    %v3639 = vunpack.c.l.b16 %v2557
    %v3640 = vunpack.c.h.b16 %v2557
    %v3641 = vunpack.c.l.b16 %v2558
    %v3642 = vunpack.c.h.b16 %v2558
    %v3643 = vunpack.c.l.b16 %v2559
    %v3644 = vunpack.c.h.b16 %v2559
    %v3645 = vunpack.c.l.b16 %v2560
    %v3646 = vunpack.c.l.b16 %v2561
    %v3647 = vunpack.c.h.b16 %v2561
    %v3648 = vunpack.c.l.b16 %v2562
    %v3649 = vunpack.c.h.b16 %v2562
    %v3650 = vunpack.c.l.b16 %v2563
    %v3651 = vunpack.c.h.b16 %v2563
    %v3652 = vunpack.c.l.b16 %v2564
    %v3653 = vunpack.c.l.b16 %v2565
    %v3654 = vunpack.c.h.b16 %v2565
    %v3655 = vunpack.c.l.b16 %v2566
    %v3656 = vunpack.c.h.b16 %v2566
    %v3657 = vunpack.c.l.b16 %v2567
    %v3658 = vunpack.c.h.b16 %v2567
    %v3659 = vunpack.c.l.b16 %v2568
    %v3660 = vunpack.c.l.b16 %v2569
    %v3661 = vunpack.c.h.b16 %v2569
    %v3662 = vunpack.c.l.b16 %v2570
    %v3663 = vunpack.c.h.b16 %v2570
    %v3664 = vunpack.c.l.b16 %v2571
    %v3665 = vunpack.c.h.b16 %v2571
    %v3666 = vunpack.c.l.b16 %v2572
    %v3667 = vunpack.c.l.b16 %v2573
    %v3668 = vunpack.c.h.b16 %v2573
    %v3669 = vunpack.c.l.b16 %v2574
    %v3670 = vunpack.c.h.b16 %v2574
    %v3671 = vunpack.c.l.b16 %v2575
    %v3672 = vunpack.c.h.b16 %v2575
    %v3673 = vunpack.c.l.b16 %v2576
    %v3674 = vunpack.c.l.b16 %v2577
    %v3675 = vunpack.c.h.b16 %v2577
    %v3676 = vunpack.c.l.b16 %v2578
    %v3677 = vunpack.c.h.b16 %v2578
    %v3678 = vunpack.c.l.b16 %v2579
    %v3679 = vunpack.c.h.b16 %v2579
    %v3680 = vunpack.c.l.b16 %v2580
    %v3681 = vunpack.c.l.b16 %v2581
    %v3682 = vunpack.c.h.b16 %v2581
    %v3683 = vunpack.c.l.b16 %v2582
    %v3684 = vunpack.c.h.b16 %v2582
    %v3685 = vunpack.c.l.b16 %v2583
    %v3686 = vunpack.c.h.b16 %v2583
    %v3687 = vunpack.c.l.b16 %v2584
    %v3688 = vunpack.c.l.b16 %v2585
    %v3689 = vunpack.c.h.b16 %v2585
    %v3690 = vunpack.c.l.b16 %v2586
    %v3691 = vunpack.c.h.b16 %v2586
    %v3692 = vunpack.c.l.b16 %v2587
    %v3693 = vunpack.c.h.b16 %v2587
    %v3694 = vunpack.c.l.b16 %v2588
    %v3695 = vunpack.c.l.b16 %v2589
    %v3696 = vunpack.c.h.b16 %v2589
    %v3697 = vunpack.c.l.b16 %v2590
    %v3698 = vunpack.c.h.b16 %v2590
    %v3699 = vunpack.c.l.b16 %v2591
    %v3700 = vunpack.c.h.b16 %v2591
    %v3701 = vunpack.c.l.b16 %v2592
    %v3702 = vunpack.c.l.b16 %v2593
    %v3703 = vunpack.c.h.b16 %v2593
    %v3704 = vunpack.c.l.b16 %v2594
    %v3705 = vunpack.c.h.b16 %v2594
    %v3706 = vunpack.c.l.b16 %v2595
    %v3707 = vunpack.c.h.b16 %v2595
    %v3708 = vunpack.c.l.b16 %v2596
    %v3709 = vunpack.c.l.b16 %v2597
    %v3710 = vunpack.c.h.b16 %v2597
    %v3711 = vunpack.c.l.b16 %v2598
    %v3712 = vunpack.c.h.b16 %v2598
    %v3713 = vunpack.c.l.b16 %v2599
    %v3714 = vunpack.c.h.b16 %v2599
    %v3715 = vunpack.c.l.b16 %v2600
    %v3716 = vunpack.c.l.b16 %v2601
    %v3717 = vunpack.c.h.b16 %v2601
    %v3718 = vunpack.c.l.b16 %v2602
    %v3719 = vunpack.c.h.b16 %v2602
    %v3720 = vunpack.c.l.b16 %v2603
    %v3721 = vunpack.c.h.b16 %v2603
    %v3722 = vunpack.c.l.b16 %v2604
    %v3723 = vunpack.c.l.b16 %v2605
    %v3724 = vunpack.c.h.b16 %v2605
    %v3725 = vunpack.c.l.b16 %v2606
    %v3726 = vunpack.c.h.b16 %v2606
    %v3727 = vunpack.c.l.b16 %v2607
    %v3728 = vunpack.c.h.b16 %v2607
    %v3729 = vunpack.c.l.b16 %v2608
    %v3730 = vunpack.c.l.b16 %v2609
    %v3731 = vunpack.c.h.b16 %v2609
    %v3732 = vunpack.c.l.b16 %v2610
    %v3733 = vunpack.c.h.b16 %v2610
    %v3734 = vunpack.c.l.b16 %v2611
    %v3735 = vunpack.c.h.b16 %v2611
    %v3736 = vunpack.c.l.b16 %v2612
    %v3737 = vunpack.c.l.b16 %v2613
    %v3738 = vunpack.c.h.b16 %v2613
    %v3739 = vunpack.c.l.b16 %v2614
    %v3740 = vunpack.c.h.b16 %v2614
    %v3741 = vunpack.c.l.b16 %v2615
    %v3742 = vunpack.c.h.b16 %v2615
    %v3743 = vunpack.c.l.b16 %v2616
    %v3744 = vunpack.c.l.b16 %v2617
    %v3745 = vunpack.c.h.b16 %v2617
    %v3746 = vunpack.c.l.b16 %v2618
    %v3747 = vunpack.c.h.b16 %v2618
    %v3748 = vunpack.c.l.b16 %v2619
    %v3749 = vunpack.c.h.b16 %v2619
    %v3750 = vunpack.c.l.b16 %v2620
    %v3751 = vunpack.c.l.b16 %v2621
    %v3752 = vunpack.c.h.b16 %v2621
    %v3753 = vunpack.c.l.b16 %v2622
    %v3754 = vunpack.c.h.b16 %v2622
    %v3755 = vunpack.c.l.b16 %v2623
    %v3756 = vunpack.c.h.b16 %v2623
    %v3757 = vunpack.c.l.b16 %v2624
    %v3758 = vunpack.c.l.b16 %v2625
    %v3759 = vunpack.c.h.b16 %v2625
    %v3760 = vunpack.c.l.b16 %v2626
    %v3761 = vunpack.c.h.b16 %v2626
    %v3762 = vunpack.c.l.b16 %v2627
    %v3763 = vunpack.c.h.b16 %v2627
    %v3764 = vunpack.c.l.b16 %v2628
    %v3765 = vunpack.c.l.b16 %v2629
    %v3766 = vunpack.c.h.b16 %v2629
    %v3767 = vunpack.c.l.b16 %v2630
    %v3768 = vunpack.c.h.b16 %v2630
    %v3769 = vunpack.c.l.b16 %v2631
    %v3770 = vunpack.c.h.b16 %v2631
    %v3771 = vunpack.c.l.b16 %v2632
    %v3772 = vunpack.c.l.b16 %v2633
    %v3773 = vunpack.c.h.b16 %v2633
    %v3774 = vunpack.c.l.b16 %v2634
    %v3775 = vunpack.c.h.b16 %v2634
    %v3776 = vunpack.c.l.b16 %v2635
    %v3777 = vunpack.c.h.b16 %v2635
    %v3778 = vunpack.c.l.b16 %v2636
    %v3779 = vunpack.c.l.b16 %v2637
    %v3780 = vunpack.c.h.b16 %v2637
    %v3781 = vunpack.c.l.b16 %v2638
    %v3782 = vunpack.c.h.b16 %v2638
    %v3783 = vunpack.c.l.b16 %v2639
    %v3784 = vunpack.c.h.b16 %v2639
    %v3785 = vunpack.c.l.b16 %v2640
    %v3786 = vunpack.c.l.b16 %v2641
    %v3787 = vunpack.c.h.b16 %v2641
    %v3788 = vunpack.c.l.b16 %v2642
    %v3789 = vunpack.c.h.b16 %v2642
    %v3790 = vunpack.c.l.b16 %v2643
    %v3791 = vunpack.c.h.b16 %v2643
    %v3792 = vunpack.c.l.b16 %v2644
    %v3793 = vunpack.c.l.b16 %v2645
    %v3794 = vunpack.c.h.b16 %v2645
    %v3795 = vunpack.c.l.b16 %v2646
    %v3796 = vunpack.c.h.b16 %v2646
    %v3797 = vunpack.c.l.b16 %v2647
    %v3798 = vunpack.c.h.b16 %v2647
    %v3799 = vunpack.c.l.b16 %v2648
    %v3800 = vunpack.c.l.b16 %v2649
    %v3801 = vunpack.c.h.b16 %v2649
    %v3802 = vunpack.c.l.b16 %v2650
    %v3803 = vunpack.c.h.b16 %v2650
    %v3804 = vunpack.c.l.b16 %v2651
    %v3805 = vunpack.c.h.b16 %v2651
    %v3806 = vunpack.c.l.b16 %v2652
    %v3807 = vunpack.c.l.b16 %v2653
    %v3808 = vunpack.c.h.b16 %v2653
    %v3809 = vunpack.c.l.b16 %v2654
    %v3810 = vunpack.c.h.b16 %v2654
    %v3811 = vunpack.c.l.b16 %v2655
    %v3812 = vunpack.c.h.b16 %v2655
    %v3813 = vunpack.c.l.b16 %v2656
    %v3814 = vunpack.c.l.b16 %v2657
    %v3815 = vunpack.c.h.b16 %v2657
    %v3816 = vunpack.c.l.b16 %v2658
    %v3817 = vunpack.c.h.b16 %v2658
    %v3818 = vunpack.c.l.b16 %v2659
    %v3819 = vunpack.c.h.b16 %v2659
    %v3820 = vunpack.c.l.b16 %v2660
    %v3821 = vunpack.c.l.b16 %v2661
    %v3822 = vunpack.c.h.b16 %v2661
    %v3823 = vunpack.c.l.b16 %v2662
    %v3824 = vunpack.c.h.b16 %v2662
    %v3825 = vunpack.c.l.b16 %v2663
    %v3826 = vunpack.c.h.b16 %v2663
    %v3827 = vunpack.c.l.b16 %v2664
    %v3828 = vunpack.c.l.b16 %v2665
    %v3829 = vunpack.c.h.b16 %v2665
    %v3830 = vunpack.c.l.b16 %v2666
    %v3831 = vunpack.c.h.b16 %v2666
    %v3832 = vunpack.c.l.b16 %v2667
    %v3833 = vunpack.c.h.b16 %v2667
    %v3834 = vunpack.c.l.b16 %v2668
    %v3835 = vunpack.c.l.b16 %v2669
    %v3836 = vunpack.c.h.b16 %v2669
    %v3837 = vunpack.c.l.b16 %v2670
    %v3838 = vunpack.c.h.b16 %v2670
    %v3839 = vunpack.c.l.b16 %v2671
    %v3840 = vunpack.c.h.b16 %v2671
    %v3841 = vunpack.c.l.b16 %v2672
    %v3842 = vunpack.c.l.b16 %v2673
    %v3843 = vunpack.c.h.b16 %v2673
    %v3844 = vunpack.c.l.b16 %v2674
    %v3845 = vunpack.c.h.b16 %v2674
    %v3846 = vunpack.c.l.b16 %v2675
    %v3847 = vunpack.c.h.b16 %v2675
    %v3848 = vunpack.c.l.b16 %v2676
    %v3849 = vunpack.c.l.b16 %v2677
    %v3850 = vunpack.c.h.b16 %v2677
    %v3851 = vunpack.c.l.b16 %v2678
    %v3852 = vunpack.c.h.b16 %v2678
    %v3853 = vunpack.c.l.b16 %v2679
    %v3854 = vunpack.c.h.b16 %v2679
    %v3855 = vunpack.c.l.b16 %v2680
    %v3856 = vunpack.c.l.b16 %v2681
    %v3857 = vunpack.c.h.b16 %v2681
    %v3858 = vunpack.c.l.b16 %v2682
    %v3859 = vunpack.c.h.b16 %v2682
    %v3860 = vunpack.c.l.b16 %v2683
    %v3861 = vunpack.c.h.b16 %v2683
    %v3862 = vunpack.c.l.b16 %v2684
    %v3863 = vunpack.c.l.b16 %v2685
    %v3864 = vunpack.c.h.b16 %v2685
    %v3865 = vunpack.c.l.b16 %v2686
    %v3866 = vunpack.c.h.b16 %v2686
    %v3867 = vunpack.c.l.b16 %v2687
    %v3868 = vunpack.c.h.b16 %v2687
    %v3869 = vunpack.c.l.b16 %v2688
    %v3870 = vunpack.c.l.b16 %v2689
    %v3871 = vunpack.c.h.b16 %v2689
    %v3872 = vunpack.c.l.b16 %v2690
    %v3873 = vunpack.c.h.b16 %v2690
    %v3874 = vunpack.c.l.b16 %v2691
    %v3875 = vunpack.c.h.b16 %v2691
    %v3876 = vunpack.c.l.b16 %v2692
    %v3877 = vunpack.c.l.b16 %v2693
    %v3878 = vunpack.c.h.b16 %v2693
    %v3879 = vunpack.c.l.b16 %v2694
    %v3880 = vunpack.c.h.b16 %v2694
    %v3881 = vunpack.c.l.b16 %v2695
    %v3882 = vunpack.c.h.b16 %v2695
    %v3883 = vunpack.c.l.b16 %v2696
    %v3884 = vunpack.c.l.b16 %v2697
    %v3885 = vunpack.c.h.b16 %v2697
    %v3886 = vunpack.c.l.b16 %v2698
    %v3887 = vunpack.c.h.b16 %v2698
    %v3888 = vunpack.c.l.b16 %v2699
    %v3889 = vunpack.c.h.b16 %v2699
    %v3890 = vunpack.c.l.b16 %v2700
    %v3891 = vunpack.c.l.b16 %v2701
    %v3892 = vunpack.c.h.b16 %v2701
    %v3893 = vunpack.c.l.b16 %v2702
    %v3894 = vunpack.c.h.b16 %v2702
    %v3895 = vunpack.c.l.b16 %v2703
    %v3896 = vunpack.c.h.b16 %v2703
    %v3897 = vunpack.c.l.b16 %v2704
    %v3898 = vunpack.c.l.b16 %v2705
    %v3899 = vunpack.c.h.b16 %v2705
    %v3900 = vunpack.c.l.b16 %v2706
    %v3901 = vunpack.c.h.b16 %v2706
    %v3902 = vunpack.c.l.b16 %v2707
    %v3903 = vunpack.c.h.b16 %v2707
    %v3904 = vunpack.c.l.b16 %v2708
    %v3905 = vunpack.c.l.b16 %v2709
    %v3906 = vunpack.c.h.b16 %v2709
    %v3907 = vunpack.c.l.b16 %v2710
    %v3908 = vunpack.c.h.b16 %v2710
    %v3909 = vunpack.c.l.b16 %v2711
    %v3910 = vunpack.c.h.b16 %v2711
    %v3911 = vunpack.c.l.b16 %v2712
    %v3912 = vunpack.c.l.b16 %v2713
    %v3913 = vunpack.c.h.b16 %v2713
    %v3914 = vunpack.c.l.b16 %v2714
    %v3915 = vunpack.c.h.b16 %v2714
    %v3916 = vunpack.c.l.b16 %v2715
    %v3917 = vunpack.c.h.b16 %v2715
    %v3918 = vunpack.c.l.b16 %v2716
    %v3919 = vunpack.c.l.b16 %v2717
    %v3920 = vunpack.c.h.b16 %v2717
    %v3921 = vunpack.c.l.b16 %v2718
    %v3922 = vunpack.c.h.b16 %v2718
    %v3923 = vunpack.c.l.b16 %v2719
    %v3924 = vunpack.c.h.b16 %v2719
    %v3925 = vunpack.c.l.b16 %v2720
    %v3926 = vunpack.c.l.b16 %v2721
    %v3927 = vunpack.c.h.b16 %v2721
    %v3928 = vunpack.c.l.b16 %v2722
    %v3929 = vunpack.c.h.b16 %v2722
    %v3930 = vunpack.c.l.b16 %v2723
    %v3931 = vunpack.c.h.b16 %v2723
    %v3932 = vunpack.c.l.b16 %v2724
    %v3933 = vunpack.c.l.b16 %v2725
    %v3934 = vunpack.c.h.b16 %v2725
    %v3935 = vunpack.c.l.b16 %v2726
    %v3936 = vunpack.c.h.b16 %v2726
    %v3937 = vunpack.c.l.b16 %v2727
    %v3938 = vunpack.c.h.b16 %v2727
    %v3939 = vunpack.c.l.b16 %v2728
    %v3940 = vunpack.c.l.b16 %v2729
    %v3941 = vunpack.c.h.b16 %v2729
    %v3942 = vunpack.c.l.b16 %v2730
    %v3943 = vunpack.c.h.b16 %v2730
    %v3944 = vunpack.c.l.b16 %v2731
    %v3945 = vunpack.c.h.b16 %v2731
    %v3946 = vunpack.c.l.b16 %v2732
    %v3947 = vunpack.c.l.b16 %v2733
    %v3948 = vunpack.c.h.b16 %v2733
    %v3949 = vunpack.c.l.b16 %v2734
    %v3950 = vunpack.c.h.b16 %v2734
    %v3951 = vunpack.c.l.b16 %v2735
    %v3952 = vunpack.c.h.b16 %v2735
    %v3953 = vunpack.c.l.b16 %v2736
    %v3954 = vunpack.c.l.b16 %v2737
    %v3955 = vunpack.c.h.b16 %v2737
    %v3956 = vunpack.c.l.b16 %v2738
    %v3957 = vunpack.c.h.b16 %v2738
    %v3958 = vunpack.c.l.b16 %v2739
    %v3959 = vunpack.c.h.b16 %v2739
    %v3960 = vunpack.c.l.b16 %v2740
    %v3961 = vunpack.c.l.b16 %v2741
    %v3962 = vunpack.c.h.b16 %v2741
    %v3963 = vunpack.c.l.b16 %v2742
    %v3964 = vunpack.c.h.b16 %v2742
    %v3965 = vunpack.c.l.b16 %v2743
    %v3966 = vunpack.c.h.b16 %v2743
    %v3967 = vunpack.c.l.b16 %v2744
    %v3968 = vunpack.c.l.b16 %v2745
    %v3969 = vunpack.c.h.b16 %v2745
    %v3970 = vunpack.c.l.b16 %v2746
    %v3971 = vunpack.c.h.b16 %v2746
    %v3972 = vunpack.c.l.b16 %v2747
    %v3973 = vunpack.c.h.b16 %v2747
    %v3974 = vunpack.c.l.b16 %v2748
    %v3975 = vunpack.c.l.b16 %v2749
    %v3976 = vunpack.c.h.b16 %v2749
    %v3977 = vunpack.c.l.b16 %v2750
    %v3978 = vunpack.c.h.b16 %v2750
    %v3979 = vunpack.c.l.b16 %v2751
    %v3980 = vunpack.c.h.b16 %v2751
    %v3981 = vunpack.c.l.b16 %v2752
    %v3982 = vunpack.c.l.b16 %v2753
    %v3983 = vunpack.c.h.b16 %v2753
    %v3984 = vunpack.c.l.b16 %v2754
    %v3985 = vunpack.c.h.b16 %v2754
    %v3986 = vunpack.c.l.b16 %v2755
    %v3987 = vunpack.c.h.b16 %v2755
    %v3988 = vunpack.c.l.b16 %v2756
    %v3989 = vunpack.c.l.b16 %v2757
    %v3990 = vunpack.c.h.b16 %v2757
    %v3991 = vunpack.c.l.b16 %v2758
    %v3992 = vunpack.c.h.b16 %v2758
    %v3993 = vunpack.c.l.b16 %v2759
    %v3994 = vunpack.c.h.b16 %v2759
    %v3995 = vunpack.c.l.b16 %v2760
    %v3996 = vunpack.c.l.b16 %v2761
    %v3997 = vunpack.c.h.b16 %v2761
    %v3998 = vunpack.c.l.b16 %v2762
    %v3999 = vunpack.c.h.b16 %v2762
    %v4000 = vunpack.c.l.b16 %v2763
    %v4001 = vunpack.c.h.b16 %v2763
    %v4002 = vunpack.c.l.b16 %v2764
    %v4003 = vunpack.c.l.b16 %v2765
    %v4004 = vunpack.c.h.b16 %v2765
    %v4005 = vunpack.c.l.b16 %v2766
    %v4006 = vunpack.c.h.b16 %v2766
    %v4007 = vunpack.c.l.b16 %v2767
    %v4008 = vunpack.c.h.b16 %v2767
    %v4009 = vunpack.c.l.b16 %v2768
    %v4010 = vunpack.c.l.b16 %v2769
    %v4011 = vunpack.c.h.b16 %v2769
    %v4012 = vunpack.c.l.b16 %v2770
    %v4013 = vunpack.c.h.b16 %v2770
    %v4014 = vunpack.c.l.b16 %v2771
    %v4015 = vunpack.c.h.b16 %v2771
    %v4016 = vunpack.c.l.b16 %v2772
    %v4017 = vunpack.c.l.b16 %v2773
    %v4018 = vunpack.c.h.b16 %v2773
    %v4019 = vunpack.c.l.b16 %v2774
    %v4020 = vunpack.c.h.b16 %v2774
    %v4021 = vunpack.c.l.b16 %v2775
    %v4022 = vunpack.c.h.b16 %v2775
    %v4023 = vunpack.c.l.b16 %v2776
    %v4024 = vunpack.c.l.b16 %v2777
    %v4025 = vunpack.c.h.b16 %v2777
    %v4026 = vunpack.c.l.b16 %v2778
    %v4027 = vunpack.c.h.b16 %v2778
    %v4028 = vunpack.c.l.b16 %v2779
    %v4029 = vunpack.c.h.b16 %v2779
    %v4030 = vunpack.c.l.b16 %v2780
    %v4031 = vunpack.c.l.b16 %v2781
    %v4032 = vunpack.c.h.b16 %v2781
    %v4033 = vunpack.c.l.b16 %v2782
    %v4034 = vunpack.c.h.b16 %v2782
    %v4035 = vunpack.c.l.b16 %v2783
    %v4036 = vunpack.c.h.b16 %v2783
    %v4037 = vunpack.c.l.b16 %v2784
    %v4038 = vunpack.c.l.b16 %v2785
    %v4039 = vunpack.c.h.b16 %v2785
    %v4040 = vunpack.c.l.b16 %v2786
    %v4041 = vunpack.c.h.b16 %v2786
    %v4042 = vunpack.c.l.b16 %v2787
    %v4043 = vunpack.c.h.b16 %v2787
    %v4044 = vunpack.c.l.b16 %v2788
    %v4045 = vunpack.c.l.b16 %v2789
    %v4046 = vunpack.c.h.b16 %v2789
    %v4047 = vunpack.c.l.b16 %v2790
    %v4048 = vunpack.c.h.b16 %v2790
    %v4049 = vunpack.c.l.b16 %v2791
    %v4050 = vunpack.c.h.b16 %v2791
    %v4051 = vunpack.c.l.b16 %v2792
    %v4052 = vunpack.c.l.b16 %v2793
    %v4053 = vunpack.c.h.b16 %v2793
    %v4054 = vunpack.c.l.b16 %v2794
    %v4055 = vunpack.c.h.b16 %v2794
    %v4056 = vunpack.c.l.b16 %v2795
    %v4057 = vunpack.c.h.b16 %v2795
    %v4058 = vunpack.c.l.b16 %v2796
    %v4059 = vunpack.c.l.b16 %v2797
    %v4060 = vunpack.c.h.b16 %v2797
    %v4061 = vunpack.c.l.b16 %v2798
    %v4062 = vunpack.c.h.b16 %v2798
    %v4063 = vunpack.c.l.b16 %v2799
    %v4064 = vunpack.c.h.b16 %v2799
    %v4065 = vunpack.c.l.b16 %v2800
    %v4066 = vunpack.c.l.b16 %v2801
    %v4067 = vunpack.c.h.b16 %v2801
    %v4068 = vunpack.c.l.b16 %v2802
    %v4069 = vunpack.c.h.b16 %v2802
    %v4070 = vunpack.c.l.b16 %v2803
    %v4071 = vunpack.c.h.b16 %v2803
    %v4072 = vunpack.c.l.b16 %v2804
    %v4073 = vunpack.c.l.b16 %v2805
    %v4074 = vunpack.c.h.b16 %v2805
    %v4075 = vunpack.c.l.b16 %v2806
    %v4076 = vunpack.c.h.b16 %v2806
    %v4077 = vunpack.c.l.b16 %v2807
    %v4078 = vunpack.c.h.b16 %v2807
    %v4079 = vunpack.c.l.b16 %v2808
    %v4080 = vunpack.c.l.b16 %v2809
    %v4081 = vunpack.c.h.b16 %v2809
    %v4082 = vunpack.c.l.b16 %v2810
    %v4083 = vunpack.c.h.b16 %v2810
    %v4084 = vunpack.c.l.b16 %v2811
    %v4085 = vunpack.c.h.b16 %v2811
    %v4086 = vunpack.c.l.b16 %v2812
    %v4087 = vunpack.c.l.b16 %v2813
    %v4088 = vunpack.c.h.b16 %v2813
    %v4089 = vunpack.c.l.b16 %v2814
    %v4090 = vunpack.c.h.b16 %v2814
    %v4091 = vunpack.c.l.b16 %v2815
    %v4092 = vunpack.c.h.b16 %v2815
    %v4093 = vunpack.c.l.b16 %v2816
    %v4094 = vunpack.c.l.b16 %v2817
    %v4095 = vunpack.c.h.b16 %v2817
    %v4096 = vunpack.c.l.b16 %v2818
    %v4097 = vunpack.c.h.b16 %v2818
    %v4098 = vunpack.c.l.b16 %v2819
    %v4099 = vunpack.c.h.b16 %v2819
    %v4100 = vunpack.c.l.b16 %v2820
    %v4101 = vunpack.c.l.b16 %v2821
    %v4102 = vunpack.c.h.b16 %v2821
    %v4103 = vunpack.c.l.b16 %v2822
    %v4104 = vunpack.c.h.b16 %v2822
    %v4105 = vunpack.c.l.b16 %v2823
    %v4106 = vunpack.c.h.b16 %v2823
    %v4107 = vunpack.c.l.b16 %v2824
    %v4108 = vunpack.c.l.b16 %v2825
    %v4109 = vunpack.c.h.b16 %v2825
    %v4110 = vunpack.c.l.b16 %v2826
    %v4111 = vunpack.c.h.b16 %v2826
    %v4112 = vunpack.c.l.b16 %v2827
    %v4113 = vunpack.c.h.b16 %v2827
    %v4114 = vunpack.c.l.b16 %v2828
    %v4115 = vunpack.c.l.b16 %v2829
    %v4116 = vunpack.c.h.b16 %v2829
    %v4117 = vunpack.c.l.b16 %v2830
    %v4118 = vunpack.c.h.b16 %v2830
    %v4119 = vunpack.c.l.b16 %v2831
    %v4120 = vunpack.c.h.b16 %v2831
    %v4121 = vunpack.c.l.b16 %v2832
    %v4122 = vunpack.c.l.b16 %v2833
    %v4123 = vunpack.c.h.b16 %v2833
    %v4124 = vunpack.c.l.b16 %v2834
    %v4125 = vunpack.c.h.b16 %v2834
    %v4126 = vunpack.c.l.b16 %v2835
    %v4127 = vunpack.c.h.b16 %v2835
    %v4128 = vunpack.c.l.b16 %v2836
    %v4129 = vunpack.c.l.b16 %v2837
    %v4130 = vunpack.c.h.b16 %v2837
    %v4131 = vunpack.c.l.b16 %v2838
    %v4132 = vunpack.c.h.b16 %v2838
    %v4133 = vunpack.c.l.b16 %v2839
    %v4134 = vunpack.c.h.b16 %v2839
    %v4135 = vunpack.c.l.b16 %v2840
    %v4136 = vunpack.c.l.b16 %v2841
    %v4137 = vunpack.c.h.b16 %v2841
    %v4138 = vunpack.c.l.b16 %v2842
    %v4139 = vunpack.c.h.b16 %v2842
    %v4140 = vunpack.c.l.b16 %v2843
    %v4141 = vunpack.c.h.b16 %v2843
    %v4142 = vunpack.c.l.b16 %v2844
    %v4143 = vunpack.c.l.b16 %v2845
    %v4144 = vunpack.c.h.b16 %v2845
    %v4145 = vunpack.c.l.b16 %v2846
    %v4146 = vunpack.c.h.b16 %v2846
    %v4147 = vunpack.c.l.b16 %v2847
    %v4148 = vunpack.c.h.b16 %v2847
    %v4149 = vunpack.c.l.b16 %v2848
    %v4150 = vunpack.c.l.b16 %v2849
    %v4151 = vunpack.c.h.b16 %v2849
    %v4152 = vunpack.c.l.b16 %v2850
    %v4153 = vunpack.c.h.b16 %v2850
    %v4154 = vunpack.c.l.b16 %v2851
    %v4155 = vunpack.c.h.b16 %v2851
    %v4156 = vunpack.c.l.b16 %v2852
    %v4157 = vunpack.c.l.b16 %v2853
    %v4158 = vunpack.c.h.b16 %v2853
    %v4159 = vunpack.c.l.b16 %v2854
    %v4160 = vunpack.c.h.b16 %v2854
    %v4161 = vunpack.c.l.b16 %v2855
    %v4162 = vunpack.c.h.b16 %v2855
    %v4163 = vunpack.c.l.b16 %v2856
    %v4164 = vunpack.c.l.b16 %v2857
    %v4165 = vunpack.c.h.b16 %v2857
    %v4166 = vunpack.c.l.b16 %v2858
    %v4167 = vunpack.c.h.b16 %v2858
    %v4168 = vunpack.c.l.b16 %v2859
    %v4169 = vunpack.c.h.b16 %v2859
    %v4170 = vunpack.c.l.b16 %v2860
    %v4171 = vunpack.c.l.b16 %v2861
    %v4172 = vunpack.c.h.b16 %v2861
    %v4173 = vunpack.c.l.b16 %v2862
    %v4174 = vunpack.c.h.b16 %v2862
    %v4175 = vunpack.c.l.b16 %v2863
    %v4176 = vunpack.c.h.b16 %v2863
    %v4177 = vunpack.c.l.b16 %v2864
    %v4178 = vunpack.c.l.b16 %v2865
    %v4179 = vunpack.c.h.b16 %v2865
    %v4180 = vunpack.c.l.b16 %v2866
    %v4181 = vunpack.c.h.b16 %v2866
    %v4182 = vunpack.c.l.b16 %v2867
    %v4183 = vunpack.c.h.b16 %v2867
    %v4184 = vunpack.c.l.b16 %v2868
    %v4185 = vunpack.c.l.b16 %v2869
    %v4186 = vunpack.c.h.b16 %v2869
    %v4187 = vunpack.c.l.b16 %v2870
    %v4188 = vunpack.c.h.b16 %v2870
    %v4189 = vunpack.c.l.b16 %v2871
    %v4190 = vunpack.c.h.b16 %v2871
    %v4191 = vunpack.c.l.b16 %v2872
    %v4192 = vunpack.c.l.b16 %v2873
    %v4193 = vunpack.c.h.b16 %v2873
    %v4194 = vunpack.c.l.b16 %v2874
    %v4195 = vunpack.c.h.b16 %v2874
    %v4196 = vunpack.c.l.b16 %v2875
    %v4197 = vunpack.c.h.b16 %v2875
    %v4198 = vunpack.c.l.b16 %v2876
    %v4199 = vunpack.c.l.b16 %v2877
    %v4200 = vunpack.c.h.b16 %v2877
    %v4201 = vunpack.c.l.b16 %v2878
    %v4202 = vunpack.c.h.b16 %v2878
    %v4203 = vunpack.c.l.b16 %v2879
    %v4204 = vunpack.c.h.b16 %v2879
    %v4205 = vunpack.c.l.b16 %v2880
    %v4206 = vunpack.c.l.b16 %v2881
    %v4207 = vunpack.c.h.b16 %v2881
    %v4208 = vunpack.c.l.b16 %v2882
    %v4209 = vunpack.c.h.b16 %v2882
    %v4210 = vunpack.c.l.b16 %v2883
    %v4211 = vunpack.c.h.b16 %v2883
    %v4212 = vunpack.c.l.b16 %v2884
    %v4213 = vunpack.c.l.b16 %v2885
    %v4214 = vunpack.c.h.b16 %v2885
    %v4215 = vunpack.c.l.b16 %v2886
    %v4216 = vunpack.c.h.b16 %v2886
    %v4217 = vunpack.c.l.b16 %v2887
    %v4218 = vunpack.c.h.b16 %v2887
    %v4219 = vunpack.c.l.b16 %v2888
    %v4220 = vunpack.c.l.b16 %v2889
    %v4221 = vunpack.c.h.b16 %v2889
    %v4222 = vunpack.c.l.b16 %v2890
    %v4223 = vunpack.c.h.b16 %v2890
    %v4224 = vunpack.c.l.b16 %v2891
    %v4225 = vunpack.c.h.b16 %v2891
    %v4226 = vunpack.c.l.b16 %v2892
    %v4227 = vunpack.c.l.b16 %v2893
    %v4228 = vunpack.c.h.b16 %v2893
    %v4229 = vunpack.c.l.b16 %v2894
    %v4230 = vunpack.c.h.b16 %v2894
    %v4231 = vunpack.c.l.b16 %v2895
    %v4232 = vunpack.c.h.b16 %v2895
    %v4233 = vunpack.c.l.b16 %v2896
    %v4234 = vunpack.c.l.b16 %v2897
    %v4235 = vunpack.c.h.b16 %v2897
    %v4236 = vunpack.c.l.b16 %v2898
    %v4237 = vunpack.c.h.b16 %v2898
    %v4238 = vunpack.c.l.b16 %v2899
    %v4239 = vunpack.c.h.b16 %v2899
    %v4240 = vunpack.c.l.b16 %v2900
    %v4241 = vunpack.c.l.b16 %v2901
    %v4242 = vunpack.c.h.b16 %v2901
    %v4243 = vunpack.c.l.b16 %v2902
    %v4244 = vunpack.c.h.b16 %v2902
    %v4245 = vunpack.c.l.b16 %v2903
    %v4246 = vunpack.c.h.b16 %v2903
    %v4247 = vunpack.c.l.b16 %v2904
    %v4248 = vunpack.c.l.b16 %v2905
    %v4249 = vunpack.c.h.b16 %v2905
    %v4250 = vunpack.c.l.b16 %v2906
    %v4251 = vunpack.c.h.b16 %v2906
    %v4252 = vunpack.c.l.b16 %v2907
    %v4253 = vunpack.c.h.b16 %v2907
    %v4254 = vunpack.c.l.b16 %v2908
    %v4255 = vunpack.c.l.b16 %v2909
    %v4256 = vunpack.c.h.b16 %v2909
    %v4257 = vunpack.c.l.b16 %v2910
    %v4258 = vunpack.c.h.b16 %v2910
    %v4259 = vunpack.c.l.b16 %v2911
    %v4260 = vunpack.c.h.b16 %v2911
    %v4261 = vunpack.c.l.b16 %v2912
    %v4262 = vunpack.c.l.b16 %v2913
    %v4263 = vunpack.c.h.b16 %v2913
    %v4264 = vunpack.c.l.b16 %v2914
    %v4265 = vunpack.c.h.b16 %v2914
    %v4266 = vunpack.c.l.b16 %v2915
    %v4267 = vunpack.c.h.b16 %v2915
    %v4268 = vunpack.c.l.b16 %v2916
    %v4269 = vunpack.c.l.b16 %v2917
    %v4270 = vunpack.c.h.b16 %v2917
    %v4271 = vunpack.c.l.b16 %v2918
    %v4272 = vunpack.c.h.b16 %v2918
    %v4273 = vunpack.c.l.b16 %v2919
    %v4274 = vunpack.c.h.b16 %v2919
    %v4275 = vunpack.c.l.b16 %v2920
    %v4276 = vunpack.c.l.b16 %v2921
    %v4277 = vunpack.c.h.b16 %v2921
    %v4278 = vunpack.c.l.b16 %v2922
    %v4279 = vunpack.c.h.b16 %v2922
    %v4280 = vunpack.c.l.b16 %v2923
    %v4281 = vunpack.c.h.b16 %v2923
    %v4282 = vunpack.c.l.b16 %v2924
    %v4283 = vunpack.c.l.b16 %v2925
    %v4284 = vunpack.c.h.b16 %v2925
    %v4285 = vunpack.c.l.b16 %v2926
    %v4286 = vunpack.c.h.b16 %v2926
    %v4287 = vunpack.c.l.b16 %v2927
    %v4288 = vunpack.c.h.b16 %v2927
    %v4289 = vunpack.c.l.b16 %v2928
    %v4290 = vunpack.c.l.b16 %v2929
    %v4291 = vunpack.c.h.b16 %v2929
    %v4292 = vunpack.c.l.b16 %v2930
    %v4293 = vunpack.c.h.b16 %v2930
    %v4294 = vunpack.c.l.b16 %v2931
    %v4295 = vunpack.c.h.b16 %v2931
    %v4296 = vunpack.c.l.b16 %v2932
    %v4297 = vunpack.c.l.b16 %v2933
    %v4298 = vunpack.c.h.b16 %v2933
    %v4299 = vunpack.c.l.b16 %v2934
    %v4300 = vunpack.c.h.b16 %v2934
    %v4301 = vunpack.c.l.b16 %v2935
    %v4302 = vunpack.c.h.b16 %v2935
    %v4303 = vunpack.c.l.b16 %v2936
    %v4304 = vunpack.c.l.b16 %v2937
    %v4305 = vunpack.c.h.b16 %v2937
    %v4306 = vunpack.c.l.b16 %v2938
    %v4307 = vunpack.c.h.b16 %v2938
    %v4308 = vunpack.c.l.b16 %v2939
    %v4309 = vunpack.c.h.b16 %v2939
    %v4310 = vunpack.c.l.b16 %v2940
    %v4311 = vunpack.c.l.b16 %v2941
    %v4312 = vunpack.c.h.b16 %v2941
    %v4313 = vunpack.c.l.b16 %v2942
    %v4314 = vunpack.c.h.b16 %v2942
    %v4315 = vunpack.c.l.b16 %v2943
    %v4316 = vunpack.c.h.b16 %v2943
    %v4317 = vunpack.c.l.b16 %v2944
    %v4318 = vunpack.c.l.b16 %v2945
    %v4319 = vunpack.c.h.b16 %v2945
    %v4320 = vunpack.c.l.b16 %v2946
    %v4321 = vunpack.c.h.b16 %v2946
    %v4322 = vunpack.c.l.b16 %v2947
    %v4323 = vunpack.c.h.b16 %v2947
    %v4324 = vunpack.c.l.b16 %v2948
    %v4325 = vunpack.c.l.b16 %v2949
    %v4326 = vunpack.c.h.b16 %v2949
    %v4327 = vunpack.c.l.b16 %v2950
    %v4328 = vunpack.c.h.b16 %v2950
    %v4329 = vunpack.c.l.b16 %v2951
    %v4330 = vunpack.c.h.b16 %v2951
    %v4331 = vunpack.c.l.b16 %v2952
    %v4332 = vunpack.c.l.b16 %v2953
    %v4333 = vunpack.c.h.b16 %v2953
    %v4334 = vunpack.c.l.b16 %v2954
    %v4335 = vunpack.c.h.b16 %v2954
    %v4336 = vunpack.c.l.b16 %v2955
    %v4337 = vunpack.c.h.b16 %v2955
    %v4338 = vunpack.c.l.b16 %v2956
    %v4339 = vunpack.c.l.b16 %v2957
    %v4340 = vunpack.c.h.b16 %v2957
    %v4341 = vunpack.c.l.b16 %v2958
    %v4342 = vunpack.c.h.b16 %v2958
    %v4343 = vunpack.c.l.b16 %v2959
    %v4344 = vunpack.c.h.b16 %v2959
    %v4345 = vunpack.c.l.b16 %v2960
    %v4346 = vunpack.c.l.b16 %v2961
    %v4347 = vunpack.c.h.b16 %v2961
    %v4348 = vunpack.c.l.b16 %v2962
    %v4349 = vunpack.c.h.b16 %v2962
    %v4350 = vunpack.c.l.b16 %v2963
    %v4351 = vunpack.c.h.b16 %v2963
    %v4352 = vunpack.c.l.b16 %v2964
    %v4353 = vunpack.c.l.b16 %v2965
    %v4354 = vunpack.c.h.b16 %v2965
    %v4355 = vunpack.c.l.b16 %v2966
    %v4356 = vunpack.c.h.b16 %v2966
    %v4357 = vunpack.c.l.b16 %v2967
    %v4358 = vunpack.c.h.b16 %v2967
    %v4359 = vunpack.c.l.b16 %v2968
    %v4360 = vunpack.c.l.b16 %v2969
    %v4361 = vunpack.c.h.b16 %v2969
    %v4362 = vunpack.c.l.b16 %v2970
    %v4363 = vunpack.c.h.b16 %v2970
    %v4364 = vunpack.c.l.b16 %v2971
    %v4365 = vunpack.c.h.b16 %v2971
    %v4366 = vunpack.c.l.b16 %v2972
    %v4367 = vunpack.c.l.b16 %v2973
    %v4368 = vunpack.c.h.b16 %v2973
    %v4369 = vunpack.c.l.b16 %v2974
    %v4370 = vunpack.c.h.b16 %v2974
    %v4371 = vunpack.c.l.b16 %v2975
    %v4372 = vunpack.c.h.b16 %v2975
    %v4373 = vunpack.c.l.b16 %v2976
    %v4374 = vunpack.c.l.b16 %v2977
    %v4375 = vunpack.c.h.b16 %v2977
    %v4376 = vunpack.c.l.b16 %v2978
    %v4377 = vunpack.c.h.b16 %v2978
    %v4378 = vunpack.c.l.b16 %v2979
    %v4379 = vunpack.c.h.b16 %v2979
    %v4380 = vunpack.c.l.b16 %v2980
    %v4381 = vunpack.c.l.b16 %v2981
    %v4382 = vunpack.c.h.b16 %v2981
    %v4383 = vunpack.c.l.b16 %v2982
    %v4384 = vunpack.c.h.b16 %v2982
    %v4385 = vunpack.c.l.b16 %v2983
    %v4386 = vunpack.c.h.b16 %v2983
    %v4387 = vunpack.c.l.b16 %v2984
    %v4388 = vunpack.c.l.b16 %v2985
    %v4389 = vunpack.c.h.b16 %v2985
    %v4390 = vunpack.c.l.b16 %v2986
    %v4391 = vunpack.c.h.b16 %v2986
    %v4392 = vunpack.c.l.b16 %v2987
    %v4393 = vunpack.c.h.b16 %v2987
    %v4394 = vunpack.c.l.b16 %v2988
    %v4395 = vunpack.c.l.b16 %v2989
    %v4396 = vunpack.c.h.b16 %v2989
    %v4397 = vunpack.c.l.b16 %v2990
    %v4398 = vunpack.c.h.b16 %v2990
    %v4399 = vunpack.c.l.b16 %v2991
    %v4400 = vunpack.c.h.b16 %v2991
    %v4401 = vunpack.c.l.b16 %v2992
    %v4402 = vunpack.c.l.b16 %v2993
    %v4403 = vunpack.c.h.b16 %v2993
    %v4404 = vunpack.c.l.b16 %v2994
    %v4405 = vunpack.c.h.b16 %v2994
    %v4406 = vunpack.c.l.b16 %v2995
    %v4407 = vunpack.c.h.b16 %v2995
    %v4408 = vunpack.c.l.b16 %v2996
    %v4409 = vunpack.c.l.b16 %v2997
    %v4410 = vunpack.c.h.b16 %v2997
    %v4411 = vunpack.c.l.b16 %v2998
    %v4412 = vunpack.c.h.b16 %v2998
    %v4413 = vunpack.c.l.b16 %v2999
    %v4414 = vunpack.c.h.b16 %v2999
    %v4415 = vunpack.c.l.b16 %v3000
    %v4416 = vunpack.c.l.b16 %v3001
    %v4417 = vunpack.c.h.b16 %v3001
    %v4418 = vunpack.c.l.b16 %v3002
    %v4419 = vunpack.c.h.b16 %v3002
    %v4420 = vunpack.c.l.b16 %v3003
    %v4421 = vunpack.c.h.b16 %v3003
    %v4422 = vunpack.c.l.b16 %v3004
    %v4423 = vunpack.c.l.b16 %v3005
    %v4424 = vunpack.c.h.b16 %v3005
    %v4425 = vunpack.c.l.b16 %v3006
    %v4426 = vunpack.c.h.b16 %v3006
    %v4427 = vunpack.c.l.b16 %v3007
    %v4428 = vunpack.c.h.b16 %v3007
    %v4429 = vunpack.c.l.b16 %v3008
    %v4430 = vunpack.c.l.b16 %v3009
    %v4431 = vunpack.c.h.b16 %v3009
    %v4432 = vunpack.c.l.b16 %v3010
    %v4433 = vunpack.c.h.b16 %v3010
    %v4434 = vunpack.c.l.b16 %v3011
    %v4435 = vunpack.c.h.b16 %v3011
    %v4436 = vunpack.c.l.b16 %v3012
    %v4437 = vunpack.c.l.b16 %v3013
    %v4438 = vunpack.c.h.b16 %v3013
    %v4439 = vunpack.c.l.b16 %v3014
    %v4440 = vunpack.c.h.b16 %v3014
    %v4441 = vunpack.c.l.b16 %v3015
    %v4442 = vunpack.c.h.b16 %v3015
    %v4443 = vunpack.c.l.b16 %v3016
    %v4444 = vunpack.c.l.b16 %v3017
    %v4445 = vunpack.c.h.b16 %v3017
    %v4446 = vunpack.c.l.b16 %v3018
    %v4447 = vunpack.c.h.b16 %v3018
    %v4448 = vunpack.c.l.b16 %v3019
    %v4449 = vunpack.c.h.b16 %v3019
    %v4450 = vunpack.c.l.b16 %v3020
    %v4451 = vunpack.c.l.b16 %v3021
    %v4452 = vunpack.c.h.b16 %v3021
    %v4453 = vunpack.c.l.b16 %v3022
    %v4454 = vunpack.c.h.b16 %v3022
    %v4455 = vunpack.c.l.b16 %v3023
    %v4456 = vunpack.c.h.b16 %v3023
    %v4457 = vunpack.c.l.b16 %v3024
    %v4458 = vunpack.c.l.b16 %v3025
    %v4459 = vunpack.c.h.b16 %v3025
    %v4460 = vunpack.c.l.b16 %v3026
    %v4461 = vunpack.c.h.b16 %v3026
    %v4462 = vunpack.c.l.b16 %v3027
    %v4463 = vunpack.c.h.b16 %v3027
    %v4464 = vunpack.c.l.b16 %v3028
    %v4465 = vunpack.c.l.b16 %v3029
    %v4466 = vunpack.c.h.b16 %v3029
    %v4467 = vunpack.c.l.b16 %v3030
    %v4468 = vunpack.c.h.b16 %v3030
    %v4469 = vunpack.c.l.b16 %v3031
    %v4470 = vunpack.c.h.b16 %v3031
    %v4471 = vunpack.c.l.b16 %v3032
    %v4472 = vunpack.c.l.b16 %v3033
    %v4473 = vunpack.c.h.b16 %v3033
    %v4474 = vunpack.c.l.b16 %v3034
    %v4475 = vunpack.c.h.b16 %v3034
    %v4476 = vunpack.c.l.b16 %v3035
    %v4477 = vunpack.c.h.b16 %v3035
    %v4478 = vunpack.c.l.b16 %v3036
    %v4479 = vunpack.c.l.b16 %v3037
    %v4480 = vunpack.c.h.b16 %v3037
    %v4481 = vunpack.c.l.b16 %v3038
    %v4482 = vunpack.c.h.b16 %v3038
    %v4483 = vunpack.c.l.b16 %v3039
    %v4484 = vunpack.c.h.b16 %v3039
    %v4485 = vunpack.c.l.b16 %v3040
    %v4486 = vpack.c.b16 %v3597, %v3590
    %v4487 = vpack.c.b16 %v3598, %v3591
    %v4488 = vpack.c.b16 %v3599, %v3592
    %v4489 = vpack.c.b16 %v3600, %v3593
    %v4490 = vpack.c.b16 %v3601, %v3594
    %v4491 = vpack.c.b16 %v3602, %v3595
    %v4492 = vpack.c.b16 %v3603, %v3596
    %v4493 = vpack.c.b16 %v3611, %v3604
    %v4494 = vpack.c.b16 %v3612, %v3605
    %v4495 = vpack.c.b16 %v3613, %v3606
    %v4496 = vpack.c.b16 %v3614, %v3607
    %v4497 = vpack.c.b16 %v3615, %v3608
    %v4498 = vpack.c.b16 %v3616, %v3609
    %v4499 = vpack.c.b16 %v3617, %v3610
    %v4500 = vpack.c.b16 %v3625, %v3618
    %v4501 = vpack.c.b16 %v3626, %v3619
    %v4502 = vpack.c.b16 %v3627, %v3620
    %v4503 = vpack.c.b16 %v3628, %v3621
    %v4504 = vpack.c.b16 %v3629, %v3622
    %v4505 = vpack.c.b16 %v3630, %v3623
    %v4506 = vpack.c.b16 %v3631, %v3624
    %v4507 = vpack.c.b16 %v3639, %v3632
    %v4508 = vpack.c.b16 %v3640, %v3633
    %v4509 = vpack.c.b16 %v3641, %v3634
    %v4510 = vpack.c.b16 %v3642, %v3635
    %v4511 = vpack.c.b16 %v3643, %v3636
    %v4512 = vpack.c.b16 %v3644, %v3637
    %v4513 = vpack.c.b16 %v3645, %v3638
    %v4514 = vpack.c.b16 %v3653, %v3646
    %v4515 = vpack.c.b16 %v3654, %v3647
    %v4516 = vpack.c.b16 %v3655, %v3648
    %v4517 = vpack.c.b16 %v3656, %v3649
    %v4518 = vpack.c.b16 %v3657, %v3650
    %v4519 = vpack.c.b16 %v3658, %v3651
    %v4520 = vpack.c.b16 %v3659, %v3652
    %v4521 = vpack.c.b16 %v3667, %v3660
    %v4522 = vpack.c.b16 %v3668, %v3661
    %v4523 = vpack.c.b16 %v3669, %v3662
    %v4524 = vpack.c.b16 %v3670, %v3663
    %v4525 = vpack.c.b16 %v3671, %v3664
    %v4526 = vpack.c.b16 %v3672, %v3665
    %v4527 = vpack.c.b16 %v3673, %v3666
    %v4528 = vpack.c.b16 %v3681, %v3674
    %v4529 = vpack.c.b16 %v3682, %v3675
    %v4530 = vpack.c.b16 %v3683, %v3676
    %v4531 = vpack.c.b16 %v3684, %v3677
    %v4532 = vpack.c.b16 %v3685, %v3678
    %v4533 = vpack.c.b16 %v3686, %v3679
    %v4534 = vpack.c.b16 %v3687, %v3680
    %v4535 = vpack.c.b16 %v3695, %v3688
    %v4536 = vpack.c.b16 %v3696, %v3689
    %v4537 = vpack.c.b16 %v3697, %v3690
    %v4538 = vpack.c.b16 %v3698, %v3691
    %v4539 = vpack.c.b16 %v3699, %v3692
    %v4540 = vpack.c.b16 %v3700, %v3693
    %v4541 = vpack.c.b16 %v3701, %v3694
    %v4542 = vpack.c.b16 %v3709, %v3702
    %v4543 = vpack.c.b16 %v3710, %v3703
    %v4544 = vpack.c.b16 %v3711, %v3704
    %v4545 = vpack.c.b16 %v3712, %v3705
    %v4546 = vpack.c.b16 %v3713, %v3706
    %v4547 = vpack.c.b16 %v3714, %v3707
    %v4548 = vpack.c.b16 %v3715, %v3708
    %v4549 = vpack.c.b16 %v3723, %v3716
    %v4550 = vpack.c.b16 %v3724, %v3717
    %v4551 = vpack.c.b16 %v3725, %v3718
    %v4552 = vpack.c.b16 %v3726, %v3719
    %v4553 = vpack.c.b16 %v3727, %v3720
    %v4554 = vpack.c.b16 %v3728, %v3721
    %v4555 = vpack.c.b16 %v3729, %v3722
    %v4556 = vpack.c.b16 %v3737, %v3730
    %v4557 = vpack.c.b16 %v3738, %v3731
    %v4558 = vpack.c.b16 %v3739, %v3732
    %v4559 = vpack.c.b16 %v3740, %v3733
    %v4560 = vpack.c.b16 %v3741, %v3734
    %v4561 = vpack.c.b16 %v3742, %v3735
    %v4562 = vpack.c.b16 %v3743, %v3736
    %v4563 = vpack.c.b16 %v3751, %v3744
    %v4564 = vpack.c.b16 %v3752, %v3745
    %v4565 = vpack.c.b16 %v3753, %v3746
    %v4566 = vpack.c.b16 %v3754, %v3747
    %v4567 = vpack.c.b16 %v3755, %v3748
    %v4568 = vpack.c.b16 %v3756, %v3749
    %v4569 = vpack.c.b16 %v3757, %v3750
    %v4570 = vpack.c.b16 %v3765, %v3758
    %v4571 = vpack.c.b16 %v3766, %v3759
    %v4572 = vpack.c.b16 %v3767, %v3760
    %v4573 = vpack.c.b16 %v3768, %v3761
    %v4574 = vpack.c.b16 %v3769, %v3762
    %v4575 = vpack.c.b16 %v3770, %v3763
    %v4576 = vpack.c.b16 %v3771, %v3764
    %v4577 = vpack.c.b16 %v3779, %v3772
    %v4578 = vpack.c.b16 %v3780, %v3773
    %v4579 = vpack.c.b16 %v3781, %v3774
    %v4580 = vpack.c.b16 %v3782, %v3775
    %v4581 = vpack.c.b16 %v3783, %v3776
    %v4582 = vpack.c.b16 %v3784, %v3777
    %v4583 = vpack.c.b16 %v3785, %v3778
    %v4584 = vpack.c.b16 %v3793, %v3786
    %v4585 = vpack.c.b16 %v3794, %v3787
    %v4586 = vpack.c.b16 %v3795, %v3788
    %v4587 = vpack.c.b16 %v3796, %v3789
    %v4588 = vpack.c.b16 %v3797, %v3790
    %v4589 = vpack.c.b16 %v3798, %v3791
    %v4590 = vpack.c.b16 %v3799, %v3792
    %v4591 = vpack.c.b16 %v3807, %v3800
    %v4592 = vpack.c.b16 %v3808, %v3801
    %v4593 = vpack.c.b16 %v3809, %v3802
    %v4594 = vpack.c.b16 %v3810, %v3803
    %v4595 = vpack.c.b16 %v3811, %v3804
    %v4596 = vpack.c.b16 %v3812, %v3805
    %v4597 = vpack.c.b16 %v3813, %v3806
    %v4598 = vpack.c.b16 %v3821, %v3814
    %v4599 = vpack.c.b16 %v3822, %v3815
    %v4600 = vpack.c.b16 %v3823, %v3816
    %v4601 = vpack.c.b16 %v3824, %v3817
    %v4602 = vpack.c.b16 %v3825, %v3818
    %v4603 = vpack.c.b16 %v3826, %v3819
    %v4604 = vpack.c.b16 %v3827, %v3820
    %v4605 = vpack.c.b16 %v3835, %v3828
    %v4606 = vpack.c.b16 %v3836, %v3829
    %v4607 = vpack.c.b16 %v3837, %v3830
    %v4608 = vpack.c.b16 %v3838, %v3831
    %v4609 = vpack.c.b16 %v3839, %v3832
    %v4610 = vpack.c.b16 %v3840, %v3833
    %v4611 = vpack.c.b16 %v3841, %v3834
    %v4612 = vpack.c.b16 %v3849, %v3842
    %v4613 = vpack.c.b16 %v3850, %v3843
    %v4614 = vpack.c.b16 %v3851, %v3844
    %v4615 = vpack.c.b16 %v3852, %v3845
    %v4616 = vpack.c.b16 %v3853, %v3846
    %v4617 = vpack.c.b16 %v3854, %v3847
    %v4618 = vpack.c.b16 %v3855, %v3848
    %v4619 = vpack.c.b16 %v3863, %v3856
    %v4620 = vpack.c.b16 %v3864, %v3857
    %v4621 = vpack.c.b16 %v3865, %v3858
    %v4622 = vpack.c.b16 %v3866, %v3859
    %v4623 = vpack.c.b16 %v3867, %v3860
    %v4624 = vpack.c.b16 %v3868, %v3861
    %v4625 = vpack.c.b16 %v3869, %v3862
    %v4626 = vpack.c.b16 %v3877, %v3870
    %v4627 = vpack.c.b16 %v3878, %v3871
    %v4628 = vpack.c.b16 %v3879, %v3872
    %v4629 = vpack.c.b16 %v3880, %v3873
    %v4630 = vpack.c.b16 %v3881, %v3874
    %v4631 = vpack.c.b16 %v3882, %v3875
    %v4632 = vpack.c.b16 %v3883, %v3876
    %v4633 = vpack.c.b16 %v3891, %v3884
    %v4634 = vpack.c.b16 %v3892, %v3885
    %v4635 = vpack.c.b16 %v3893, %v3886
    %v4636 = vpack.c.b16 %v3894, %v3887
    %v4637 = vpack.c.b16 %v3895, %v3888
    %v4638 = vpack.c.b16 %v3896, %v3889
    %v4639 = vpack.c.b16 %v3897, %v3890
    %v4640 = vpack.c.b16 %v3905, %v3898
    %v4641 = vpack.c.b16 %v3906, %v3899
    %v4642 = vpack.c.b16 %v3907, %v3900
    %v4643 = vpack.c.b16 %v3908, %v3901
    %v4644 = vpack.c.b16 %v3909, %v3902
    %v4645 = vpack.c.b16 %v3910, %v3903
    %v4646 = vpack.c.b16 %v3911, %v3904
    %v4647 = vpack.c.b16 %v3919, %v3912
    %v4648 = vpack.c.b16 %v3920, %v3913
    %v4649 = vpack.c.b16 %v3921, %v3914
    %v4650 = vpack.c.b16 %v3922, %v3915
    %v4651 = vpack.c.b16 %v3923, %v3916
    %v4652 = vpack.c.b16 %v3924, %v3917
    %v4653 = vpack.c.b16 %v3925, %v3918
    %v4654 = vpack.c.b16 %v3933, %v3926
    %v4655 = vpack.c.b16 %v3934, %v3927
    %v4656 = vpack.c.b16 %v3935, %v3928
    %v4657 = vpack.c.b16 %v3936, %v3929
    %v4658 = vpack.c.b16 %v3937, %v3930
    %v4659 = vpack.c.b16 %v3938, %v3931
    %v4660 = vpack.c.b16 %v3939, %v3932
    %v4661 = vpack.c.b16 %v3947, %v3940
    %v4662 = vpack.c.b16 %v3948, %v3941
    %v4663 = vpack.c.b16 %v3949, %v3942
    %v4664 = vpack.c.b16 %v3950, %v3943
    %v4665 = vpack.c.b16 %v3951, %v3944
    %v4666 = vpack.c.b16 %v3952, %v3945
    %v4667 = vpack.c.b16 %v3953, %v3946
    %v4668 = vpack.c.b16 %v3961, %v3954
    %v4669 = vpack.c.b16 %v3962, %v3955
    %v4670 = vpack.c.b16 %v3963, %v3956
    %v4671 = vpack.c.b16 %v3964, %v3957
    %v4672 = vpack.c.b16 %v3965, %v3958
    %v4673 = vpack.c.b16 %v3966, %v3959
    %v4674 = vpack.c.b16 %v3967, %v3960
    %v4675 = vpack.c.b16 %v3975, %v3968
    %v4676 = vpack.c.b16 %v3976, %v3969
    %v4677 = vpack.c.b16 %v3977, %v3970
    %v4678 = vpack.c.b16 %v3978, %v3971
    %v4679 = vpack.c.b16 %v3979, %v3972
    %v4680 = vpack.c.b16 %v3980, %v3973
    %v4681 = vpack.c.b16 %v3981, %v3974
    %v4682 = vpack.c.b16 %v3989, %v3982
    %v4683 = vpack.c.b16 %v3990, %v3983
    %v4684 = vpack.c.b16 %v3991, %v3984
    %v4685 = vpack.c.b16 %v3992, %v3985
    %v4686 = vpack.c.b16 %v3993, %v3986
    %v4687 = vpack.c.b16 %v3994, %v3987
    %v4688 = vpack.c.b16 %v3995, %v3988
    %v4689 = vpack.c.b16 %v4003, %v3996
    %v4690 = vpack.c.b16 %v4004, %v3997
    %v4691 = vpack.c.b16 %v4005, %v3998
    %v4692 = vpack.c.b16 %v4006, %v3999
    %v4693 = vpack.c.b16 %v4007, %v4000
    %v4694 = vpack.c.b16 %v4008, %v4001
    %v4695 = vpack.c.b16 %v4009, %v4002
    %v4696 = vpack.c.b16 %v4017, %v4010
    %v4697 = vpack.c.b16 %v4018, %v4011
    %v4698 = vpack.c.b16 %v4019, %v4012
    %v4699 = vpack.c.b16 %v4020, %v4013
    %v4700 = vpack.c.b16 %v4021, %v4014
    %v4701 = vpack.c.b16 %v4022, %v4015
    %v4702 = vpack.c.b16 %v4023, %v4016
    %v4703 = vpack.c.b16 %v4031, %v4024
    %v4704 = vpack.c.b16 %v4032, %v4025
    %v4705 = vpack.c.b16 %v4033, %v4026
    %v4706 = vpack.c.b16 %v4034, %v4027
    %v4707 = vpack.c.b16 %v4035, %v4028
    %v4708 = vpack.c.b16 %v4036, %v4029
    %v4709 = vpack.c.b16 %v4037, %v4030
    %v4710 = vpack.c.b16 %v4045, %v4038
    %v4711 = vpack.c.b16 %v4046, %v4039
    %v4712 = vpack.c.b16 %v4047, %v4040
    %v4713 = vpack.c.b16 %v4048, %v4041
    %v4714 = vpack.c.b16 %v4049, %v4042
    %v4715 = vpack.c.b16 %v4050, %v4043
    %v4716 = vpack.c.b16 %v4051, %v4044
    %v4717 = vpack.c.b16 %v4059, %v4052
    %v4718 = vpack.c.b16 %v4060, %v4053
    %v4719 = vpack.c.b16 %v4061, %v4054
    %v4720 = vpack.c.b16 %v4062, %v4055
    %v4721 = vpack.c.b16 %v4063, %v4056
    %v4722 = vpack.c.b16 %v4064, %v4057
    %v4723 = vpack.c.b16 %v4065, %v4058
    %v4724 = vpack.c.b16 %v4073, %v4066
    %v4725 = vpack.c.b16 %v4074, %v4067
    %v4726 = vpack.c.b16 %v4075, %v4068
    %v4727 = vpack.c.b16 %v4076, %v4069
    %v4728 = vpack.c.b16 %v4077, %v4070
    %v4729 = vpack.c.b16 %v4078, %v4071
    %v4730 = vpack.c.b16 %v4079, %v4072
    %v4731 = vpack.c.b16 %v4087, %v4080
    %v4732 = vpack.c.b16 %v4088, %v4081
    %v4733 = vpack.c.b16 %v4089, %v4082
    %v4734 = vpack.c.b16 %v4090, %v4083
    %v4735 = vpack.c.b16 %v4091, %v4084
    %v4736 = vpack.c.b16 %v4092, %v4085
    %v4737 = vpack.c.b16 %v4093, %v4086
    %v4738 = vpack.c.b16 %v4101, %v4094
    %v4739 = vpack.c.b16 %v4102, %v4095
    %v4740 = vpack.c.b16 %v4103, %v4096
    %v4741 = vpack.c.b16 %v4104, %v4097
    %v4742 = vpack.c.b16 %v4105, %v4098
    %v4743 = vpack.c.b16 %v4106, %v4099
    %v4744 = vpack.c.b16 %v4107, %v4100
    %v4745 = vpack.c.b16 %v4115, %v4108
    %v4746 = vpack.c.b16 %v4116, %v4109
    %v4747 = vpack.c.b16 %v4117, %v4110
    %v4748 = vpack.c.b16 %v4118, %v4111
    %v4749 = vpack.c.b16 %v4119, %v4112
    %v4750 = vpack.c.b16 %v4120, %v4113
    %v4751 = vpack.c.b16 %v4121, %v4114
    %v4752 = vpack.c.b16 %v4129, %v4122
    %v4753 = vpack.c.b16 %v4130, %v4123
    %v4754 = vpack.c.b16 %v4131, %v4124
    %v4755 = vpack.c.b16 %v4132, %v4125
    %v4756 = vpack.c.b16 %v4133, %v4126
    %v4757 = vpack.c.b16 %v4134, %v4127
    %v4758 = vpack.c.b16 %v4135, %v4128
    %v4759 = vpack.c.b16 %v4143, %v4136
    %v4760 = vpack.c.b16 %v4144, %v4137
    %v4761 = vpack.c.b16 %v4145, %v4138
    %v4762 = vpack.c.b16 %v4146, %v4139
    %v4763 = vpack.c.b16 %v4147, %v4140
    %v4764 = vpack.c.b16 %v4148, %v4141
    %v4765 = vpack.c.b16 %v4149, %v4142
    %v4766 = vpack.c.b16 %v4157, %v4150
    %v4767 = vpack.c.b16 %v4158, %v4151
    %v4768 = vpack.c.b16 %v4159, %v4152
    %v4769 = vpack.c.b16 %v4160, %v4153
    %v4770 = vpack.c.b16 %v4161, %v4154
    %v4771 = vpack.c.b16 %v4162, %v4155
    %v4772 = vpack.c.b16 %v4163, %v4156
    %v4773 = vpack.c.b16 %v4171, %v4164
    %v4774 = vpack.c.b16 %v4172, %v4165
    %v4775 = vpack.c.b16 %v4173, %v4166
    %v4776 = vpack.c.b16 %v4174, %v4167
    %v4777 = vpack.c.b16 %v4175, %v4168
    %v4778 = vpack.c.b16 %v4176, %v4169
    %v4779 = vpack.c.b16 %v4177, %v4170
    %v4780 = vpack.c.b16 %v4185, %v4178
    %v4781 = vpack.c.b16 %v4186, %v4179
    %v4782 = vpack.c.b16 %v4187, %v4180
    %v4783 = vpack.c.b16 %v4188, %v4181
    %v4784 = vpack.c.b16 %v4189, %v4182
    %v4785 = vpack.c.b16 %v4190, %v4183
    %v4786 = vpack.c.b16 %v4191, %v4184
    %v4787 = vpack.c.b16 %v4199, %v4192
    %v4788 = vpack.c.b16 %v4200, %v4193
    %v4789 = vpack.c.b16 %v4201, %v4194
    %v4790 = vpack.c.b16 %v4202, %v4195
    %v4791 = vpack.c.b16 %v4203, %v4196
    %v4792 = vpack.c.b16 %v4204, %v4197
    %v4793 = vpack.c.b16 %v4205, %v4198
    %v4794 = vpack.c.b16 %v4213, %v4206
    %v4795 = vpack.c.b16 %v4214, %v4207
    %v4796 = vpack.c.b16 %v4215, %v4208
    %v4797 = vpack.c.b16 %v4216, %v4209
    %v4798 = vpack.c.b16 %v4217, %v4210
    %v4799 = vpack.c.b16 %v4218, %v4211
    %v4800 = vpack.c.b16 %v4219, %v4212
    %v4801 = vpack.c.b16 %v4227, %v4220
    %v4802 = vpack.c.b16 %v4228, %v4221
    %v4803 = vpack.c.b16 %v4229, %v4222
    %v4804 = vpack.c.b16 %v4230, %v4223
    %v4805 = vpack.c.b16 %v4231, %v4224
    %v4806 = vpack.c.b16 %v4232, %v4225
    %v4807 = vpack.c.b16 %v4233, %v4226
    %v4808 = vpack.c.b16 %v4241, %v4234
    %v4809 = vpack.c.b16 %v4242, %v4235
    %v4810 = vpack.c.b16 %v4243, %v4236
    %v4811 = vpack.c.b16 %v4244, %v4237
    %v4812 = vpack.c.b16 %v4245, %v4238
    %v4813 = vpack.c.b16 %v4246, %v4239
    %v4814 = vpack.c.b16 %v4247, %v4240
    %v4815 = vpack.c.b16 %v4255, %v4248
    %v4816 = vpack.c.b16 %v4256, %v4249
    %v4817 = vpack.c.b16 %v4257, %v4250
    %v4818 = vpack.c.b16 %v4258, %v4251
    %v4819 = vpack.c.b16 %v4259, %v4252
    %v4820 = vpack.c.b16 %v4260, %v4253
    %v4821 = vpack.c.b16 %v4261, %v4254
    %v4822 = vpack.c.b16 %v4269, %v4262
    %v4823 = vpack.c.b16 %v4270, %v4263
    %v4824 = vpack.c.b16 %v4271, %v4264
    %v4825 = vpack.c.b16 %v4272, %v4265
    %v4826 = vpack.c.b16 %v4273, %v4266
    %v4827 = vpack.c.b16 %v4274, %v4267
    %v4828 = vpack.c.b16 %v4275, %v4268
    %v4829 = vpack.c.b16 %v4283, %v4276
    %v4830 = vpack.c.b16 %v4284, %v4277
    %v4831 = vpack.c.b16 %v4285, %v4278
    %v4832 = vpack.c.b16 %v4286, %v4279
    %v4833 = vpack.c.b16 %v4287, %v4280
    %v4834 = vpack.c.b16 %v4288, %v4281
    %v4835 = vpack.c.b16 %v4289, %v4282
    %v4836 = vpack.c.b16 %v4297, %v4290
    %v4837 = vpack.c.b16 %v4298, %v4291
    %v4838 = vpack.c.b16 %v4299, %v4292
    %v4839 = vpack.c.b16 %v4300, %v4293
    %v4840 = vpack.c.b16 %v4301, %v4294
    %v4841 = vpack.c.b16 %v4302, %v4295
    %v4842 = vpack.c.b16 %v4303, %v4296
    %v4843 = vpack.c.b16 %v4311, %v4304
    %v4844 = vpack.c.b16 %v4312, %v4305
    %v4845 = vpack.c.b16 %v4313, %v4306
    %v4846 = vpack.c.b16 %v4314, %v4307
    %v4847 = vpack.c.b16 %v4315, %v4308
    %v4848 = vpack.c.b16 %v4316, %v4309
    %v4849 = vpack.c.b16 %v4317, %v4310
    %v4850 = vpack.c.b16 %v4325, %v4318
    %v4851 = vpack.c.b16 %v4326, %v4319
    %v4852 = vpack.c.b16 %v4327, %v4320
    %v4853 = vpack.c.b16 %v4328, %v4321
    %v4854 = vpack.c.b16 %v4329, %v4322
    %v4855 = vpack.c.b16 %v4330, %v4323
    %v4856 = vpack.c.b16 %v4331, %v4324
    %v4857 = vpack.c.b16 %v4339, %v4332
    %v4858 = vpack.c.b16 %v4340, %v4333
    %v4859 = vpack.c.b16 %v4341, %v4334
    %v4860 = vpack.c.b16 %v4342, %v4335
    %v4861 = vpack.c.b16 %v4343, %v4336
    %v4862 = vpack.c.b16 %v4344, %v4337
    %v4863 = vpack.c.b16 %v4345, %v4338
    %v4864 = vpack.c.b16 %v4353, %v4346
    %v4865 = vpack.c.b16 %v4354, %v4347
    %v4866 = vpack.c.b16 %v4355, %v4348
    %v4867 = vpack.c.b16 %v4356, %v4349
    %v4868 = vpack.c.b16 %v4357, %v4350
    %v4869 = vpack.c.b16 %v4358, %v4351
    %v4870 = vpack.c.b16 %v4359, %v4352
    %v4871 = vpack.c.b16 %v4367, %v4360
    %v4872 = vpack.c.b16 %v4368, %v4361
    %v4873 = vpack.c.b16 %v4369, %v4362
    %v4874 = vpack.c.b16 %v4370, %v4363
    %v4875 = vpack.c.b16 %v4371, %v4364
    %v4876 = vpack.c.b16 %v4372, %v4365
    %v4877 = vpack.c.b16 %v4373, %v4366
    %v4878 = vpack.c.b16 %v4381, %v4374
    %v4879 = vpack.c.b16 %v4382, %v4375
    %v4880 = vpack.c.b16 %v4383, %v4376
    %v4881 = vpack.c.b16 %v4384, %v4377
    %v4882 = vpack.c.b16 %v4385, %v4378
    %v4883 = vpack.c.b16 %v4386, %v4379
    %v4884 = vpack.c.b16 %v4387, %v4380
    %v4885 = vpack.c.b16 %v4395, %v4388
    %v4886 = vpack.c.b16 %v4396, %v4389
    %v4887 = vpack.c.b16 %v4397, %v4390
    %v4888 = vpack.c.b16 %v4398, %v4391
    %v4889 = vpack.c.b16 %v4399, %v4392
    %v4890 = vpack.c.b16 %v4400, %v4393
    %v4891 = vpack.c.b16 %v4401, %v4394
    %v4892 = vpack.c.b16 %v4409, %v4402
    %v4893 = vpack.c.b16 %v4410, %v4403
    %v4894 = vpack.c.b16 %v4411, %v4404
    %v4895 = vpack.c.b16 %v4412, %v4405
    %v4896 = vpack.c.b16 %v4413, %v4406
    %v4897 = vpack.c.b16 %v4414, %v4407
    %v4898 = vpack.c.b16 %v4415, %v4408
    %v4899 = vpack.c.b16 %v4423, %v4416
    %v4900 = vpack.c.b16 %v4424, %v4417
    %v4901 = vpack.c.b16 %v4425, %v4418
    %v4902 = vpack.c.b16 %v4426, %v4419
    %v4903 = vpack.c.b16 %v4427, %v4420
    %v4904 = vpack.c.b16 %v4428, %v4421
    %v4905 = vpack.c.b16 %v4429, %v4422
    %v4906 = vpack.c.b16 %v4437, %v4430
    %v4907 = vpack.c.b16 %v4438, %v4431
    %v4908 = vpack.c.b16 %v4439, %v4432
    %v4909 = vpack.c.b16 %v4440, %v4433
    %v4910 = vpack.c.b16 %v4441, %v4434
    %v4911 = vpack.c.b16 %v4442, %v4435
    %v4912 = vpack.c.b16 %v4443, %v4436
    %v4913 = vpack.c.b16 %v4451, %v4444
    %v4914 = vpack.c.b16 %v4452, %v4445
    %v4915 = vpack.c.b16 %v4453, %v4446
    %v4916 = vpack.c.b16 %v4454, %v4447
    %v4917 = vpack.c.b16 %v4455, %v4448
    %v4918 = vpack.c.b16 %v4456, %v4449
    %v4919 = vpack.c.b16 %v4457, %v4450
    %v4920 = vpack.c.b16 %v4465, %v4458
    %v4921 = vpack.c.b16 %v4466, %v4459
    %v4922 = vpack.c.b16 %v4467, %v4460
    %v4923 = vpack.c.b16 %v4468, %v4461
    %v4924 = vpack.c.b16 %v4469, %v4462
    %v4925 = vpack.c.b16 %v4470, %v4463
    %v4926 = vpack.c.b16 %v4471, %v4464
    %v4927 = vpack.c.b16 %v4479, %v4472
    %v4928 = vpack.c.b16 %v4480, %v4473
    %v4929 = vpack.c.b16 %v4481, %v4474
    %v4930 = vpack.c.b16 %v4482, %v4475
    %v4931 = vpack.c.b16 %v4483, %v4476
    %v4932 = vpack.c.b16 %v4484, %v4477
    %v4933 = vpack.c.b16 %v4485, %v4478
    %5382 = vmatprep.subr.bf16.mxu0 %v4487
    %5383 = vmatpush1.bf16.msra.mxu0 %v4486
    %5384 = vmatprep.subr.bf16.mxu0 %v4494
    %5385 = vmatpush1.bf16.msra.mxu0 %v4493
    %5386 = vmatprep.subr.bf16.mxu0 %v4501
    %5387 = vmatpush1.bf16.msra.mxu0 %v4500
    %5388 = vmatprep.subr.bf16.mxu0 %v4508
    %5389 = vmatpush1.bf16.msra.mxu0 %v4507
    %5390 = vmatprep.subr.bf16.mxu0 %v4515
    %5391 = vmatpush1.bf16.msra.mxu0 %v4514
    %5392 = vmatprep.subr.bf16.mxu0 %v4522
    %5393 = vmatpush1.bf16.msra.mxu0 %v4521
    %5394 = vmatprep.subr.bf16.mxu0 %v4529
    %5395 = vmatpush1.bf16.msra.mxu0 %v4528
    %5396 = vmatprep.subr.bf16.mxu0 %v4536
    %5397 = vmatpush1.bf16.msra.mxu0 %v4535
    %5398 = vmatprep.subr.bf16.mxu0 %v4543
    %5399 = vmatpush1.bf16.msra.mxu0 %v4542
    %5400 = vmatprep.subr.bf16.mxu0 %v4550
    %5401 = vmatpush1.bf16.msra.mxu0 %v4549
    %5402 = vmatprep.subr.bf16.mxu0 %v4557
    %5403 = vmatpush1.bf16.msra.mxu0 %v4556
    %5404 = vmatprep.subr.bf16.mxu0 %v4564
    %5405 = vmatpush1.bf16.msra.mxu0 %v4563
    %5406 = vmatprep.subr.bf16.mxu0 %v4571
    %5407 = vmatpush1.bf16.msra.mxu0 %v4570
    %5408 = vmatprep.subr.bf16.mxu0 %v4578
    %5409 = vmatpush1.bf16.msra.mxu0 %v4577
    %5410 = vmatprep.subr.bf16.mxu0 %v4585
    %5411 = vmatpush1.bf16.msra.mxu0 %v4584
    %5412 = vmatprep.subr.bf16.mxu0 %v4592
    %5413 = vmatpush1.bf16.msra.mxu0 %v4591
    %5414 = vmatprep.mubr.bf16.mxu0 %v2522
    %5415 = vmatmul.mubr.bf16.gmra.mrb[0].mxu0 %v2521
    %v5416 = vpop.f32.mrb[0].mxu0
    %v5417 = vadd.f32 %v3046, %v5416
    %v5418 = vpop.f32.mrb[0].mxu0
    %v5419 = vadd.f32 %v3050, %v5418
    %v5420 = vpop.f32.mrb[0].mxu0
    %v5421 = vpop.f32.mrb[0].mxu0
    %5422 = vdwg.mxu0
    %5423 = vmatprep.subr.bf16.mxu0 %v4599
    %5424 = vmatpush1.bf16.msra.mxu0 %v4598
    %5425 = vmatprep.subr.bf16.mxu0 %v4606
    %5426 = vmatpush1.bf16.msra.mxu0 %v4605
    %5427 = vmatprep.subr.bf16.mxu0 %v4613
    %5428 = vmatpush1.bf16.msra.mxu0 %v4612
    %5429 = vmatprep.subr.bf16.mxu0 %v4620
    %5430 = vmatpush1.bf16.msra.mxu0 %v4619
    %5431 = vmatprep.subr.bf16.mxu0 %v4627
    %5432 = vmatpush1.bf16.msra.mxu0 %v4626
    %5433 = vmatprep.subr.bf16.mxu0 %v4634
    %5434 = vmatpush1.bf16.msra.mxu0 %v4633
    %5435 = vmatprep.subr.bf16.mxu0 %v4641
    %5436 = vmatpush1.bf16.msra.mxu0 %v4640
    %5437 = vmatprep.subr.bf16.mxu0 %v4648
    %5438 = vmatpush1.bf16.msra.mxu0 %v4647
    %5439 = vmatprep.subr.bf16.mxu0 %v4655
    %5440 = vmatpush1.bf16.msra.mxu0 %v4654
    %5441 = vmatprep.subr.bf16.mxu0 %v4662
    %5442 = vmatpush1.bf16.msra.mxu0 %v4661
    %5443 = vmatprep.subr.bf16.mxu0 %v4669
    %5444 = vmatpush1.bf16.msra.mxu0 %v4668
    %5445 = vmatprep.subr.bf16.mxu0 %v4676
    %5446 = vmatpush1.bf16.msra.mxu0 %v4675
    %5447 = vmatprep.subr.bf16.mxu0 %v4683
    %5448 = vmatpush1.bf16.msra.mxu0 %v4682
    %5449 = vmatprep.subr.bf16.mxu0 %v4690
    %5450 = vmatpush1.bf16.msra.mxu0 %v4689
    %5451 = vmatprep.subr.bf16.mxu0 %v4697
    %5452 = vmatpush1.bf16.msra.mxu0 %v4696
    %5453 = vmatprep.subr.bf16.mxu0 %v4704
    %5454 = vmatpush1.bf16.msra.mxu0 %v4703
    %5455 = vmatprep.mubr.bf16.mxu0 %v2524
    %5456 = vmatmul.mubr.bf16.gmra.mrb[0].mxu0 %v2523
    %v5457 = vpop.f32.mrb[0].mxu0
    %v5458 = vadd.f32 %v5417, %v5457
    %v5459 = vpop.f32.mrb[0].mxu0
    %v5460 = vadd.f32 %v5419, %v5459
    %v5461 = vpop.f32.mrb[0].mxu0
    %v5462 = vpop.f32.mrb[0].mxu0
    %5463 = vdwg.mxu0
    %5464 = vmatprep.subr.bf16.mxu0 %v4711
    %5465 = vmatpush1.bf16.msra.mxu0 %v4710
    %5466 = vmatprep.subr.bf16.mxu0 %v4718
    %5467 = vmatpush1.bf16.msra.mxu0 %v4717
    %5468 = vmatprep.subr.bf16.mxu0 %v4725
    %5469 = vmatpush1.bf16.msra.mxu0 %v4724
    %5470 = vmatprep.subr.bf16.mxu0 %v4732
    %5471 = vmatpush1.bf16.msra.mxu0 %v4731
    %5472 = vmatprep.subr.bf16.mxu0 %v4739
    %5473 = vmatpush1.bf16.msra.mxu0 %v4738
    %5474 = vmatprep.subr.bf16.mxu0 %v4746
    %5475 = vmatpush1.bf16.msra.mxu0 %v4745
    %5476 = vmatprep.subr.bf16.mxu0 %v4753
    %5477 = vmatpush1.bf16.msra.mxu0 %v4752
    %5478 = vmatprep.subr.bf16.mxu0 %v4760
    %5479 = vmatpush1.bf16.msra.mxu0 %v4759
    %5480 = vmatprep.subr.bf16.mxu0 %v4767
    %5481 = vmatpush1.bf16.msra.mxu0 %v4766
    %5482 = vmatprep.subr.bf16.mxu0 %v4774
    %5483 = vmatpush1.bf16.msra.mxu0 %v4773
    %5484 = vmatprep.subr.bf16.mxu0 %v4781
    %5485 = vmatpush1.bf16.msra.mxu0 %v4780
    %5486 = vmatprep.subr.bf16.mxu0 %v4788
    %5487 = vmatpush1.bf16.msra.mxu0 %v4787
    %5488 = vmatprep.subr.bf16.mxu0 %v4795
    %5489 = vmatpush1.bf16.msra.mxu0 %v4794
    %5490 = vmatprep.subr.bf16.mxu0 %v4802
    %5491 = vmatpush1.bf16.msra.mxu0 %v4801
    %5492 = vmatprep.subr.bf16.mxu0 %v4809
    %5493 = vmatpush1.bf16.msra.mxu0 %v4808
    %5494 = vmatprep.subr.bf16.mxu0 %v4816
    %5495 = vmatpush1.bf16.msra.mxu0 %v4815
    %5496 = vmatprep.mubr.bf16.mxu0 %v2526
    %5497 = vmatmul.mubr.bf16.gmra.mrb[0].mxu0 %v2525
    %v5498 = vpop.f32.mrb[0].mxu0
    %v5499 = vadd.f32 %v5458, %v5498
    %v5500 = vpop.f32.mrb[0].mxu0
    %v5501 = vadd.f32 %v5460, %v5500
    %v5502 = vpop.f32.mrb[0].mxu0
    %v5503 = vpop.f32.mrb[0].mxu0
    %5504 = vdwg.mxu0
    %5505 = vmatprep.subr.bf16.mxu0 %v4823
    %5506 = vmatpush1.bf16.msra.mxu0 %v4822
    %5507 = vmatprep.subr.bf16.mxu0 %v4830
    %5508 = vmatpush1.bf16.msra.mxu0 %v4829
    %5509 = vmatprep.subr.bf16.mxu0 %v4837
    %5510 = vmatpush1.bf16.msra.mxu0 %v4836
    %5511 = vmatprep.subr.bf16.mxu0 %v4844
    %5512 = vmatpush1.bf16.msra.mxu0 %v4843
    %5513 = vmatprep.subr.bf16.mxu0 %v4851
    %5514 = vmatpush1.bf16.msra.mxu0 %v4850
    %5515 = vmatprep.subr.bf16.mxu0 %v4858
    %5516 = vmatpush1.bf16.msra.mxu0 %v4857
    %5517 = vmatprep.subr.bf16.mxu0 %v4865
    %5518 = vmatpush1.bf16.msra.mxu0 %v4864
    %5519 = vmatprep.subr.bf16.mxu0 %v4872
    %5520 = vmatpush1.bf16.msra.mxu0 %v4871
    %5521 = vmatprep.subr.bf16.mxu0 %v4879
    %5522 = vmatpush1.bf16.msra.mxu0 %v4878
    %5523 = vmatprep.subr.bf16.mxu0 %v4886
    %5524 = vmatpush1.bf16.msra.mxu0 %v4885
    %5525 = vmatprep.subr.bf16.mxu0 %v4893
    %5526 = vmatpush1.bf16.msra.mxu0 %v4892
    %5527 = vmatprep.subr.bf16.mxu0 %v4900
    %5528 = vmatpush1.bf16.msra.mxu0 %v4899
    %5529 = vmatprep.subr.bf16.mxu0 %v4907
    %5530 = vmatpush1.bf16.msra.mxu0 %v4906
    %5531 = vmatprep.subr.bf16.mxu0 %v4914
    %5532 = vmatpush1.bf16.msra.mxu0 %v4913
    %5533 = vmatprep.subr.bf16.mxu0 %v4921
    %5534 = vmatpush1.bf16.msra.mxu0 %v4920
    %5535 = vmatprep.subr.bf16.mxu0 %v4928
    %5536 = vmatpush1.bf16.msra.mxu0 %v4927
    %5537 = vmatprep.mubr.bf16.mxu0 %v2528
    %5538 = vmatmul.mubr.bf16.gmra.mrb[0].mxu0 %v2527
    %v5539 = vpop.f32.mrb[0].mxu0
    %v5540 = vadd.f32 %v5499, %v5539
    %v5541 = vpop.f32.mrb[0].mxu0
    %v5542 = vadd.f32 %v5501, %v5541
    %v5543 = vpop.f32.mrb[0].mxu0
    %v5544 = vpop.f32.mrb[0].mxu0
    %5545 = vdwg.mxu0
    %5546 = vmatprep.subr.bf16.mxu0 %v4489
    %5547 = vmatpush1.bf16.msra.mxu0 %v4488
    %5548 = vmatprep.subr.bf16.mxu0 %v4496
    %5549 = vmatpush1.bf16.msra.mxu0 %v4495
    %5550 = vmatprep.subr.bf16.mxu0 %v4503
    %5551 = vmatpush1.bf16.msra.mxu0 %v4502
    %5552 = vmatprep.subr.bf16.mxu0 %v4510
    %5553 = vmatpush1.bf16.msra.mxu0 %v4509
    %5554 = vmatprep.subr.bf16.mxu0 %v4517
    %5555 = vmatpush1.bf16.msra.mxu0 %v4516
    %5556 = vmatprep.subr.bf16.mxu0 %v4524
    %5557 = vmatpush1.bf16.msra.mxu0 %v4523
    %5558 = vmatprep.subr.bf16.mxu0 %v4531
    %5559 = vmatpush1.bf16.msra.mxu0 %v4530
    %5560 = vmatprep.subr.bf16.mxu0 %v4538
    %5561 = vmatpush1.bf16.msra.mxu0 %v4537
    %5562 = vmatprep.subr.bf16.mxu0 %v4545
    %5563 = vmatpush1.bf16.msra.mxu0 %v4544
    %5564 = vmatprep.subr.bf16.mxu0 %v4552
    %5565 = vmatpush1.bf16.msra.mxu0 %v4551
    %5566 = vmatprep.subr.bf16.mxu0 %v4559
    %5567 = vmatpush1.bf16.msra.mxu0 %v4558
    %5568 = vmatprep.subr.bf16.mxu0 %v4566
    %5569 = vmatpush1.bf16.msra.mxu0 %v4565
    %5570 = vmatprep.subr.bf16.mxu0 %v4573
    %5571 = vmatpush1.bf16.msra.mxu0 %v4572
    %5572 = vmatprep.subr.bf16.mxu0 %v4580
    %5573 = vmatpush1.bf16.msra.mxu0 %v4579
    %5574 = vmatprep.subr.bf16.mxu0 %v4587
    %5575 = vmatpush1.bf16.msra.mxu0 %v4586
    %5576 = vmatprep.subr.bf16.mxu0 %v4594
    %5577 = vmatpush1.bf16.msra.mxu0 %v4593
    %5578 = vmatprep.mubr.bf16.mxu0 %v2522
    %5579 = vmatmul.mubr.bf16.gmra.mrb[0].mxu0 %v2521
    %v5580 = vpop.f32.mrb[0].mxu0
    %v5581 = vadd.f32 %v3054, %v5580
    %v5582 = vpop.f32.mrb[0].mxu0
    %v5583 = vadd.f32 %v3058, %v5582
    %v5584 = vpop.f32.mrb[0].mxu0
    %v5585 = vpop.f32.mrb[0].mxu0
    %5586 = vdwg.mxu0
    %5587 = vmatprep.subr.bf16.mxu0 %v4601
    %5588 = vmatpush1.bf16.msra.mxu0 %v4600
    %5589 = vmatprep.subr.bf16.mxu0 %v4608
    %5590 = vmatpush1.bf16.msra.mxu0 %v4607
    %5591 = vmatprep.subr.bf16.mxu0 %v4615
    %5592 = vmatpush1.bf16.msra.mxu0 %v4614
    %5593 = vmatprep.subr.bf16.mxu0 %v4622
    %5594 = vmatpush1.bf16.msra.mxu0 %v4621
    %5595 = vmatprep.subr.bf16.mxu0 %v4629
    %5596 = vmatpush1.bf16.msra.mxu0 %v4628
    %5597 = vmatprep.subr.bf16.mxu0 %v4636
    %5598 = vmatpush1.bf16.msra.mxu0 %v4635
    %5599 = vmatprep.subr.bf16.mxu0 %v4643
    %5600 = vmatpush1.bf16.msra.mxu0 %v4642
    %5601 = vmatprep.subr.bf16.mxu0 %v4650
    %5602 = vmatpush1.bf16.msra.mxu0 %v4649
    %5603 = vmatprep.subr.bf16.mxu0 %v4657
    %5604 = vmatpush1.bf16.msra.mxu0 %v4656
    %5605 = vmatprep.subr.bf16.mxu0 %v4664
    %5606 = vmatpush1.bf16.msra.mxu0 %v4663
    %5607 = vmatprep.subr.bf16.mxu0 %v4671
    %5608 = vmatpush1.bf16.msra.mxu0 %v4670
    %5609 = vmatprep.subr.bf16.mxu0 %v4678
    %5610 = vmatpush1.bf16.msra.mxu0 %v4677
    %5611 = vmatprep.subr.bf16.mxu0 %v4685
    %5612 = vmatpush1.bf16.msra.mxu0 %v4684
    %5613 = vmatprep.subr.bf16.mxu0 %v4692
    %5614 = vmatpush1.bf16.msra.mxu0 %v4691
    %5615 = vmatprep.subr.bf16.mxu0 %v4699
    %5616 = vmatpush1.bf16.msra.mxu0 %v4698
    %5617 = vmatprep.subr.bf16.mxu0 %v4706
    %5618 = vmatpush1.bf16.msra.mxu0 %v4705
    %5619 = vmatprep.mubr.bf16.mxu0 %v2524
    %5620 = vmatmul.mubr.bf16.gmra.mrb[0].mxu0 %v2523
    %v5621 = vpop.f32.mrb[0].mxu0
    %v5622 = vadd.f32 %v5581, %v5621
    %v5623 = vpop.f32.mrb[0].mxu0
    %v5624 = vadd.f32 %v5583, %v5623
    %v5625 = vpop.f32.mrb[0].mxu0
    %v5626 = vpop.f32.mrb[0].mxu0
    %5627 = vdwg.mxu0
    %5628 = vmatprep.subr.bf16.mxu0 %v4713
    %5629 = vmatpush1.bf16.msra.mxu0 %v4712
    %5630 = vmatprep.subr.bf16.mxu0 %v4720
    %5631 = vmatpush1.bf16.msra.mxu0 %v4719
    %5632 = vmatprep.subr.bf16.mxu0 %v4727
    %5633 = vmatpush1.bf16.msra.mxu0 %v4726
    %5634 = vmatprep.subr.bf16.mxu0 %v4734
    %5635 = vmatpush1.bf16.msra.mxu0 %v4733
    %5636 = vmatprep.subr.bf16.mxu0 %v4741
    %5637 = vmatpush1.bf16.msra.mxu0 %v4740
    %5638 = vmatprep.subr.bf16.mxu0 %v4748
    %5639 = vmatpush1.bf16.msra.mxu0 %v4747
    %5640 = vmatprep.subr.bf16.mxu0 %v4755
    %5641 = vmatpush1.bf16.msra.mxu0 %v4754
    %5642 = vmatprep.subr.bf16.mxu0 %v4762
    %5643 = vmatpush1.bf16.msra.mxu0 %v4761
    %5644 = vmatprep.subr.bf16.mxu0 %v4769
    %5645 = vmatpush1.bf16.msra.mxu0 %v4768
    %5646 = vmatprep.subr.bf16.mxu0 %v4776
    %5647 = vmatpush1.bf16.msra.mxu0 %v4775
    %5648 = vmatprep.subr.bf16.mxu0 %v4783
    %5649 = vmatpush1.bf16.msra.mxu0 %v4782
    %5650 = vmatprep.subr.bf16.mxu0 %v4790
    %5651 = vmatpush1.bf16.msra.mxu0 %v4789
    %5652 = vmatprep.subr.bf16.mxu0 %v4797
    %5653 = vmatpush1.bf16.msra.mxu0 %v4796
    %5654 = vmatprep.subr.bf16.mxu0 %v4804
    %5655 = vmatpush1.bf16.msra.mxu0 %v4803
    %5656 = vmatprep.subr.bf16.mxu0 %v4811
    %5657 = vmatpush1.bf16.msra.mxu0 %v4810
    %5658 = vmatprep.subr.bf16.mxu0 %v4818
    %5659 = vmatpush1.bf16.msra.mxu0 %v4817
    %5660 = vmatprep.mubr.bf16.mxu0 %v2526
    %5661 = vmatmul.mubr.bf16.gmra.mrb[0].mxu0 %v2525
    %v5662 = vpop.f32.mrb[0].mxu0
    %v5663 = vadd.f32 %v5622, %v5662
    %v5664 = vpop.f32.mrb[0].mxu0
    %v5665 = vadd.f32 %v5624, %v5664
    %v5666 = vpop.f32.mrb[0].mxu0
    %v5667 = vpop.f32.mrb[0].mxu0
    %5668 = vdwg.mxu0
    %5669 = vmatprep.subr.bf16.mxu0 %v4825
    %5670 = vmatpush1.bf16.msra.mxu0 %v4824
    %5671 = vmatprep.subr.bf16.mxu0 %v4832
    %5672 = vmatpush1.bf16.msra.mxu0 %v4831
    %5673 = vmatprep.subr.bf16.mxu0 %v4839
    %5674 = vmatpush1.bf16.msra.mxu0 %v4838
    %5675 = vmatprep.subr.bf16.mxu0 %v4846
    %5676 = vmatpush1.bf16.msra.mxu0 %v4845
    %5677 = vmatprep.subr.bf16.mxu0 %v4853
    %5678 = vmatpush1.bf16.msra.mxu0 %v4852
    %5679 = vmatprep.subr.bf16.mxu0 %v4860
    %5680 = vmatpush1.bf16.msra.mxu0 %v4859
    %5681 = vmatprep.subr.bf16.mxu0 %v4867
    %5682 = vmatpush1.bf16.msra.mxu0 %v4866
    %5683 = vmatprep.subr.bf16.mxu0 %v4874
    %5684 = vmatpush1.bf16.msra.mxu0 %v4873
    %5685 = vmatprep.subr.bf16.mxu0 %v4881
    %5686 = vmatpush1.bf16.msra.mxu0 %v4880
    %5687 = vmatprep.subr.bf16.mxu0 %v4888
    %5688 = vmatpush1.bf16.msra.mxu0 %v4887
    %5689 = vmatprep.subr.bf16.mxu0 %v4895
    %5690 = vmatpush1.bf16.msra.mxu0 %v4894
    %5691 = vmatprep.subr.bf16.mxu0 %v4902
    %5692 = vmatpush1.bf16.msra.mxu0 %v4901
    %5693 = vmatprep.subr.bf16.mxu0 %v4909
    %5694 = vmatpush1.bf16.msra.mxu0 %v4908
    %5695 = vmatprep.subr.bf16.mxu0 %v4916
    %5696 = vmatpush1.bf16.msra.mxu0 %v4915
    %5697 = vmatprep.subr.bf16.mxu0 %v4923
    %5698 = vmatpush1.bf16.msra.mxu0 %v4922
    %5699 = vmatprep.subr.bf16.mxu0 %v4930
    %5700 = vmatpush1.bf16.msra.mxu0 %v4929
    %5701 = vmatprep.mubr.bf16.mxu0 %v2528
    %5702 = vmatmul.mubr.bf16.gmra.mrb[0].mxu0 %v2527
    %v5703 = vpop.f32.mrb[0].mxu0
    %v5704 = vadd.f32 %v5663, %v5703
    %v5705 = vpop.f32.mrb[0].mxu0
    %v5706 = vadd.f32 %v5665, %v5705
    %v5707 = vpop.f32.mrb[0].mxu0
    %v5708 = vpop.f32.mrb[0].mxu0
    %5709 = vdwg.mxu0
    %5710 = vmatprep.subr.bf16.mxu0 %v4491
    %5711 = vmatpush1.bf16.msra.mxu0 %v4490
    %5712 = vmatprep.subr.bf16.mxu0 %v4498
    %5713 = vmatpush1.bf16.msra.mxu0 %v4497
    %5714 = vmatprep.subr.bf16.mxu0 %v4505
    %5715 = vmatpush1.bf16.msra.mxu0 %v4504
    %5716 = vmatprep.subr.bf16.mxu0 %v4512
    %5717 = vmatpush1.bf16.msra.mxu0 %v4511
    %5718 = vmatprep.subr.bf16.mxu0 %v4519
    %5719 = vmatpush1.bf16.msra.mxu0 %v4518
    %5720 = vmatprep.subr.bf16.mxu0 %v4526
    %5721 = vmatpush1.bf16.msra.mxu0 %v4525
    %5722 = vmatprep.subr.bf16.mxu0 %v4533
    %5723 = vmatpush1.bf16.msra.mxu0 %v4532
    %5724 = vmatprep.subr.bf16.mxu0 %v4540
    %5725 = vmatpush1.bf16.msra.mxu0 %v4539
    %5726 = vmatprep.subr.bf16.mxu0 %v4547
    %5727 = vmatpush1.bf16.msra.mxu0 %v4546
    %5728 = vmatprep.subr.bf16.mxu0 %v4554
    %5729 = vmatpush1.bf16.msra.mxu0 %v4553
    %5730 = vmatprep.subr.bf16.mxu0 %v4561
    %5731 = vmatpush1.bf16.msra.mxu0 %v4560
    %5732 = vmatprep.subr.bf16.mxu0 %v4568
    %5733 = vmatpush1.bf16.msra.mxu0 %v4567
    %5734 = vmatprep.subr.bf16.mxu0 %v4575
    %5735 = vmatpush1.bf16.msra.mxu0 %v4574
    %5736 = vmatprep.subr.bf16.mxu0 %v4582
    %5737 = vmatpush1.bf16.msra.mxu0 %v4581
    %5738 = vmatprep.subr.bf16.mxu0 %v4589
    %5739 = vmatpush1.bf16.msra.mxu0 %v4588
    %5740 = vmatprep.subr.bf16.mxu0 %v4596
    %5741 = vmatpush1.bf16.msra.mxu0 %v4595
    %5742 = vmatprep.mubr.bf16.mxu0 %v2522
    %5743 = vmatmul.mubr.bf16.gmra.mrb[0].mxu0 %v2521
    %v5744 = vpop.f32.mrb[0].mxu0
    %v5745 = vadd.f32 %v3062, %v5744
    %v5746 = vpop.f32.mrb[0].mxu0
    %v5747 = vadd.f32 %v3066, %v5746
    %v5748 = vpop.f32.mrb[0].mxu0
    %v5749 = vpop.f32.mrb[0].mxu0
    %5750 = vdwg.mxu0
    %5751 = vmatprep.subr.bf16.mxu0 %v4603
    %5752 = vmatpush1.bf16.msra.mxu0 %v4602
    %5753 = vmatprep.subr.bf16.mxu0 %v4610
    %5754 = vmatpush1.bf16.msra.mxu0 %v4609
    %5755 = vmatprep.subr.bf16.mxu0 %v4617
    %5756 = vmatpush1.bf16.msra.mxu0 %v4616
    %5757 = vmatprep.subr.bf16.mxu0 %v4624
    %5758 = vmatpush1.bf16.msra.mxu0 %v4623
    %5759 = vmatprep.subr.bf16.mxu0 %v4631
    %5760 = vmatpush1.bf16.msra.mxu0 %v4630
    %5761 = vmatprep.subr.bf16.mxu0 %v4638
    %5762 = vmatpush1.bf16.msra.mxu0 %v4637
    %5763 = vmatprep.subr.bf16.mxu0 %v4645
    %5764 = vmatpush1.bf16.msra.mxu0 %v4644
    %5765 = vmatprep.subr.bf16.mxu0 %v4652
    %5766 = vmatpush1.bf16.msra.mxu0 %v4651
    %5767 = vmatprep.subr.bf16.mxu0 %v4659
    %5768 = vmatpush1.bf16.msra.mxu0 %v4658
    %5769 = vmatprep.subr.bf16.mxu0 %v4666
    %5770 = vmatpush1.bf16.msra.mxu0 %v4665
    %5771 = vmatprep.subr.bf16.mxu0 %v4673
    %5772 = vmatpush1.bf16.msra.mxu0 %v4672
    %5773 = vmatprep.subr.bf16.mxu0 %v4680
    %5774 = vmatpush1.bf16.msra.mxu0 %v4679
    %5775 = vmatprep.subr.bf16.mxu0 %v4687
    %5776 = vmatpush1.bf16.msra.mxu0 %v4686
    %5777 = vmatprep.subr.bf16.mxu0 %v4694
    %5778 = vmatpush1.bf16.msra.mxu0 %v4693
    %5779 = vmatprep.subr.bf16.mxu0 %v4701
    %5780 = vmatpush1.bf16.msra.mxu0 %v4700
    %5781 = vmatprep.subr.bf16.mxu0 %v4708
    %5782 = vmatpush1.bf16.msra.mxu0 %v4707
    %5783 = vmatprep.mubr.bf16.mxu0 %v2524
    %5784 = vmatmul.mubr.bf16.gmra.mrb[0].mxu0 %v2523
    %v5785 = vpop.f32.mrb[0].mxu0
    %v5786 = vadd.f32 %v5745, %v5785
    %v5787 = vpop.f32.mrb[0].mxu0
    %v5788 = vadd.f32 %v5747, %v5787
    %v5789 = vpop.f32.mrb[0].mxu0
    %v5790 = vpop.f32.mrb[0].mxu0
    %5791 = vdwg.mxu0
    %5792 = vmatprep.subr.bf16.mxu0 %v4715
    %5793 = vmatpush1.bf16.msra.mxu0 %v4714
    %5794 = vmatprep.subr.bf16.mxu0 %v4722
    %5795 = vmatpush1.bf16.msra.mxu0 %v4721
    %5796 = vmatprep.subr.bf16.mxu0 %v4729
    %5797 = vmatpush1.bf16.msra.mxu0 %v4728
    %5798 = vmatprep.subr.bf16.mxu0 %v4736
    %5799 = vmatpush1.bf16.msra.mxu0 %v4735
    %5800 = vmatprep.subr.bf16.mxu0 %v4743
    %5801 = vmatpush1.bf16.msra.mxu0 %v4742
    %5802 = vmatprep.subr.bf16.mxu0 %v4750
    %5803 = vmatpush1.bf16.msra.mxu0 %v4749
    %5804 = vmatprep.subr.bf16.mxu0 %v4757
    %5805 = vmatpush1.bf16.msra.mxu0 %v4756
    %5806 = vmatprep.subr.bf16.mxu0 %v4764
    %5807 = vmatpush1.bf16.msra.mxu0 %v4763
    %5808 = vmatprep.subr.bf16.mxu0 %v4771
    %5809 = vmatpush1.bf16.msra.mxu0 %v4770
    %5810 = vmatprep.subr.bf16.mxu0 %v4778
    %5811 = vmatpush1.bf16.msra.mxu0 %v4777
    %5812 = vmatprep.subr.bf16.mxu0 %v4785
    %5813 = vmatpush1.bf16.msra.mxu0 %v4784
    %5814 = vmatprep.subr.bf16.mxu0 %v4792
    %5815 = vmatpush1.bf16.msra.mxu0 %v4791
    %5816 = vmatprep.subr.bf16.mxu0 %v4799
    %5817 = vmatpush1.bf16.msra.mxu0 %v4798
    %5818 = vmatprep.subr.bf16.mxu0 %v4806
    %5819 = vmatpush1.bf16.msra.mxu0 %v4805
    %5820 = vmatprep.subr.bf16.mxu0 %v4813
    %5821 = vmatpush1.bf16.msra.mxu0 %v4812
    %5822 = vmatprep.subr.bf16.mxu0 %v4820
    %5823 = vmatpush1.bf16.msra.mxu0 %v4819
    %5824 = vmatprep.mubr.bf16.mxu0 %v2526
    %5825 = vmatmul.mubr.bf16.gmra.mrb[0].mxu0 %v2525
    %v5826 = vpop.f32.mrb[0].mxu0
    %v5827 = vadd.f32 %v5786, %v5826
    %v5828 = vpop.f32.mrb[0].mxu0
    %v5829 = vadd.f32 %v5788, %v5828
    %v5830 = vpop.f32.mrb[0].mxu0
    %v5831 = vpop.f32.mrb[0].mxu0
    %5832 = vdwg.mxu0
    %5833 = vmatprep.subr.bf16.mxu0 %v4827
    %5834 = vmatpush1.bf16.msra.mxu0 %v4826
    %5835 = vmatprep.subr.bf16.mxu0 %v4834
    %5836 = vmatpush1.bf16.msra.mxu0 %v4833
    %5837 = vmatprep.subr.bf16.mxu0 %v4841
    %5838 = vmatpush1.bf16.msra.mxu0 %v4840
    %5839 = vmatprep.subr.bf16.mxu0 %v4848
    %5840 = vmatpush1.bf16.msra.mxu0 %v4847
    %5841 = vmatprep.subr.bf16.mxu0 %v4855
    %5842 = vmatpush1.bf16.msra.mxu0 %v4854
    %5843 = vmatprep.subr.bf16.mxu0 %v4862
    %5844 = vmatpush1.bf16.msra.mxu0 %v4861
    %5845 = vmatprep.subr.bf16.mxu0 %v4869
    %5846 = vmatpush1.bf16.msra.mxu0 %v4868
    %5847 = vmatprep.subr.bf16.mxu0 %v4876
    %5848 = vmatpush1.bf16.msra.mxu0 %v4875
    %5849 = vmatprep.subr.bf16.mxu0 %v4883
    %5850 = vmatpush1.bf16.msra.mxu0 %v4882
    %5851 = vmatprep.subr.bf16.mxu0 %v4890
    %5852 = vmatpush1.bf16.msra.mxu0 %v4889
    %5853 = vmatprep.subr.bf16.mxu0 %v4897
    %5854 = vmatpush1.bf16.msra.mxu0 %v4896
    %5855 = vmatprep.subr.bf16.mxu0 %v4904
    %5856 = vmatpush1.bf16.msra.mxu0 %v4903
    %5857 = vmatprep.subr.bf16.mxu0 %v4911
    %5858 = vmatpush1.bf16.msra.mxu0 %v4910
    %5859 = vmatprep.subr.bf16.mxu0 %v4918
    %5860 = vmatpush1.bf16.msra.mxu0 %v4917
    %5861 = vmatprep.subr.bf16.mxu0 %v4925
    %5862 = vmatpush1.bf16.msra.mxu0 %v4924
    %5863 = vmatprep.subr.bf16.mxu0 %v4932
    %5864 = vmatpush1.bf16.msra.mxu0 %v4931
    %5865 = vmatprep.mubr.bf16.mxu0 %v2528
    %5866 = vmatmul.mubr.bf16.gmra.mrb[0].mxu0 %v2527
    %v5867 = vpop.f32.mrb[0].mxu0
    %v5868 = vadd.f32 %v5827, %v5867
    %v5869 = vpop.f32.mrb[0].mxu0
    %v5870 = vadd.f32 %v5829, %v5869
    %v5871 = vpop.f32.mrb[0].mxu0
    %v5872 = vpop.f32.mrb[0].mxu0
    %5873 = vdwg.mxu0
    %5874 = vmatprep.subr.bf16.mxu0 0
    %5875 = vmatpush1.bf16.msra.mxu0 %v4492
    %5876 = vmatprep.subr.bf16.mxu0 0
    %5877 = vmatpush1.bf16.msra.mxu0 %v4499
    %5878 = vmatprep.subr.bf16.mxu0 0
    %5879 = vmatpush1.bf16.msra.mxu0 %v4506
    %5880 = vmatprep.subr.bf16.mxu0 0
    %5881 = vmatpush1.bf16.msra.mxu0 %v4513
    %5882 = vmatprep.subr.bf16.mxu0 0
    %5883 = vmatpush1.bf16.msra.mxu0 %v4520
    %5884 = vmatprep.subr.bf16.mxu0 0
    %5885 = vmatpush1.bf16.msra.mxu0 %v4527
    %5886 = vmatprep.subr.bf16.mxu0 0
    %5887 = vmatpush1.bf16.msra.mxu0 %v4534
    %5888 = vmatprep.subr.bf16.mxu0 0
    %5889 = vmatpush1.bf16.msra.mxu0 %v4541
    %5890 = vmatprep.subr.bf16.mxu0 0
    %5891 = vmatpush1.bf16.msra.mxu0 %v4548
    %5892 = vmatprep.subr.bf16.mxu0 0
    %5893 = vmatpush1.bf16.msra.mxu0 %v4555
    %5894 = vmatprep.subr.bf16.mxu0 0
    %5895 = vmatpush1.bf16.msra.mxu0 %v4562
    %5896 = vmatprep.subr.bf16.mxu0 0
    %5897 = vmatpush1.bf16.msra.mxu0 %v4569
    %5898 = vmatprep.subr.bf16.mxu0 0
    %5899 = vmatpush1.bf16.msra.mxu0 %v4576
    %5900 = vmatprep.subr.bf16.mxu0 0
    %5901 = vmatpush1.bf16.msra.mxu0 %v4583
    %5902 = vmatprep.subr.bf16.mxu0 0
    %5903 = vmatpush1.bf16.msra.mxu0 %v4590
    %5904 = vmatprep.subr.bf16.mxu0 0
    %5905 = vmatpush1.bf16.msra.mxu0 %v4597
    %5906 = vmatprep.mubr.bf16.mxu0 %v2522
    %5907 = vmatmul.mubr.bf16.gmra.mrb[0].mxu0 %v2521
    %v5908 = vpop.f32.mrb[0].mxu0
    %v5909 = vadd.f32 %v3070, %v5908
    %v5910 = vpop.f32.mrb[0].mxu0
    %v5911 = vpop.f32.mrb[0].mxu0
    %v5912 = vpop.f32.mrb[0].mxu0
    %5913 = vdwg.mxu0
    %5914 = vmatprep.subr.bf16.mxu0 0
    %5915 = vmatpush1.bf16.msra.mxu0 %v4604
    %5916 = vmatprep.subr.bf16.mxu0 0
    %5917 = vmatpush1.bf16.msra.mxu0 %v4611
    %5918 = vmatprep.subr.bf16.mxu0 0
    %5919 = vmatpush1.bf16.msra.mxu0 %v4618
    %5920 = vmatprep.subr.bf16.mxu0 0
    %5921 = vmatpush1.bf16.msra.mxu0 %v4625
    %5922 = vmatprep.subr.bf16.mxu0 0
    %5923 = vmatpush1.bf16.msra.mxu0 %v4632
    %5924 = vmatprep.subr.bf16.mxu0 0
    %5925 = vmatpush1.bf16.msra.mxu0 %v4639
    %5926 = vmatprep.subr.bf16.mxu0 0
    %5927 = vmatpush1.bf16.msra.mxu0 %v4646
    %5928 = vmatprep.subr.bf16.mxu0 0
    %5929 = vmatpush1.bf16.msra.mxu0 %v4653
    %5930 = vmatprep.subr.bf16.mxu0 0
    %5931 = vmatpush1.bf16.msra.mxu0 %v4660
    %5932 = vmatprep.subr.bf16.mxu0 0
    %5933 = vmatpush1.bf16.msra.mxu0 %v4667
    %5934 = vmatprep.subr.bf16.mxu0 0
    %5935 = vmatpush1.bf16.msra.mxu0 %v4674
    %5936 = vmatprep.subr.bf16.mxu0 0
    %5937 = vmatpush1.bf16.msra.mxu0 %v4681
    %5938 = vmatprep.subr.bf16.mxu0 0
    %5939 = vmatpush1.bf16.msra.mxu0 %v4688
    %5940 = vmatprep.subr.bf16.mxu0 0
    %5941 = vmatpush1.bf16.msra.mxu0 %v4695
    %5942 = vmatprep.subr.bf16.mxu0 0
    %5943 = vmatpush1.bf16.msra.mxu0 %v4702
    %5944 = vmatprep.subr.bf16.mxu0 0
    %5945 = vmatpush1.bf16.msra.mxu0 %v4709
    %5946 = vmatprep.mubr.bf16.mxu0 %v2524
    %5947 = vmatmul.mubr.bf16.gmra.mrb[0].mxu0 %v2523
    %v5948 = vpop.f32.mrb[0].mxu0
    %v5949 = vadd.f32 %v5909, %v5948
    %v5950 = vpop.f32.mrb[0].mxu0
    %v5951 = vpop.f32.mrb[0].mxu0
    %v5952 = vpop.f32.mrb[0].mxu0
    %5953 = vdwg.mxu0
    %5954 = vmatprep.subr.bf16.mxu0 0
    %5955 = vmatpush1.bf16.msra.mxu0 %v4716
    %5956 = vmatprep.subr.bf16.mxu0 0
    %5957 = vmatpush1.bf16.msra.mxu0 %v4723
    %5958 = vmatprep.subr.bf16.mxu0 0
    %5959 = vmatpush1.bf16.msra.mxu0 %v4730
    %5960 = vmatprep.subr.bf16.mxu0 0
    %5961 = vmatpush1.bf16.msra.mxu0 %v4737
    %5962 = vmatprep.subr.bf16.mxu0 0
    %5963 = vmatpush1.bf16.msra.mxu0 %v4744
    %5964 = vmatprep.subr.bf16.mxu0 0
    %5965 = vmatpush1.bf16.msra.mxu0 %v4751
    %5966 = vmatprep.subr.bf16.mxu0 0
    %5967 = vmatpush1.bf16.msra.mxu0 %v4758
    %5968 = vmatprep.subr.bf16.mxu0 0
    %5969 = vmatpush1.bf16.msra.mxu0 %v4765
    %5970 = vmatprep.subr.bf16.mxu0 0
    %5971 = vmatpush1.bf16.msra.mxu0 %v4772
    %5972 = vmatprep.subr.bf16.mxu0 0
    %5973 = vmatpush1.bf16.msra.mxu0 %v4779
    %5974 = vmatprep.subr.bf16.mxu0 0
    %5975 = vmatpush1.bf16.msra.mxu0 %v4786
    %5976 = vmatprep.subr.bf16.mxu0 0
    %5977 = vmatpush1.bf16.msra.mxu0 %v4793
    %5978 = vmatprep.subr.bf16.mxu0 0
    %5979 = vmatpush1.bf16.msra.mxu0 %v4800
    %5980 = vmatprep.subr.bf16.mxu0 0
    %5981 = vmatpush1.bf16.msra.mxu0 %v4807
    %5982 = vmatprep.subr.bf16.mxu0 0
    %5983 = vmatpush1.bf16.msra.mxu0 %v4814
    %5984 = vmatprep.subr.bf16.mxu0 0
    %5985 = vmatpush1.bf16.msra.mxu0 %v4821
    %5986 = vmatprep.mubr.bf16.mxu0 %v2526
    %5987 = vmatmul.mubr.bf16.gmra.mrb[0].mxu0 %v2525
    %v5988 = vpop.f32.mrb[0].mxu0
    %v5989 = vadd.f32 %v5949, %v5988
    %v5990 = vpop.f32.mrb[0].mxu0
    %v5991 = vpop.f32.mrb[0].mxu0
    %v5992 = vpop.f32.mrb[0].mxu0
    %5993 = vdwg.mxu0
    %5994 = vmatprep.subr.bf16.mxu0 0
    %5995 = vmatpush1.bf16.msra.mxu0 %v4828
    %5996 = vmatprep.subr.bf16.mxu0 0
    %5997 = vmatpush1.bf16.msra.mxu0 %v4835
    %5998 = vmatprep.subr.bf16.mxu0 0
    %5999 = vmatpush1.bf16.msra.mxu0 %v4842
    %6000 = vmatprep.subr.bf16.mxu0 0
    %6001 = vmatpush1.bf16.msra.mxu0 %v4849
    %6002 = vmatprep.subr.bf16.mxu0 0
    %6003 = vmatpush1.bf16.msra.mxu0 %v4856
    %6004 = vmatprep.subr.bf16.mxu0 0
    %6005 = vmatpush1.bf16.msra.mxu0 %v4863
    %6006 = vmatprep.subr.bf16.mxu0 0
    %6007 = vmatpush1.bf16.msra.mxu0 %v4870
    %6008 = vmatprep.subr.bf16.mxu0 0
    %6009 = vmatpush1.bf16.msra.mxu0 %v4877
    %6010 = vmatprep.subr.bf16.mxu0 0
    %6011 = vmatpush1.bf16.msra.mxu0 %v4884
    %6012 = vmatprep.subr.bf16.mxu0 0
    %6013 = vmatpush1.bf16.msra.mxu0 %v4891
    %6014 = vmatprep.subr.bf16.mxu0 0
    %6015 = vmatpush1.bf16.msra.mxu0 %v4898
    %6016 = vmatprep.subr.bf16.mxu0 0
    %6017 = vmatpush1.bf16.msra.mxu0 %v4905
    %6018 = vmatprep.subr.bf16.mxu0 0
    %6019 = vmatpush1.bf16.msra.mxu0 %v4912
    %6020 = vmatprep.subr.bf16.mxu0 0
    %6021 = vmatpush1.bf16.msra.mxu0 %v4919
    %6022 = vmatprep.subr.bf16.mxu0 0
    %6023 = vmatpush1.bf16.msra.mxu0 %v4926
    %6024 = vmatprep.subr.bf16.mxu0 0
    %6025 = vmatpush1.bf16.msra.mxu0 %v4933
    %6026 = vmatprep.mubr.bf16.mxu0 %v2528
    %6027 = vmatmul.mubr.bf16.gmra.mrb[0].mxu0 %v2527
    %v6028 = vpop.f32.mrb[0].mxu0
    %v6029 = vadd.f32 %v5989, %v6028
    %v6030 = vpop.f32.mrb[0].mxu0
    %v6031 = vpop.f32.mrb[0].mxu0
    %v6032 = vpop.f32.mrb[0].mxu0
    %6033 = vdwg.mxu0
    %v6034 = vsub.f32 0.0, %v5540
    %v6035 = vsub.f32 0.0, %v5542
    %v6036 = vsub.f32 0.0, %v5704
    %v6037 = vsub.f32 0.0, %v5706
    %v6038 = vsub.f32 0.0, %v5868
    %v6039 = vsub.f32 0.0, %v5870
    %v6040 = vsub.f32 0.0, %v6029
    %v6041 = vmul.f32 %v6034, 1.442695
    %v6042 = vpow.pop %v6041
    %v6043 = vmul.f32 %v6035, 1.442695
    %v6044 = vpow.pop %v6043
    %v6045 = vmul.f32 %v6036, 1.442695
    %v6046 = vpow.pop %v6045
    %v6047 = vmul.f32 %v6037, 1.442695
    %v6048 = vpow.pop %v6047
    %v6049 = vmul.f32 %v6038, 1.442695
    %v6050 = vpow.pop %v6049
    %v6051 = vmul.f32 %v6039, 1.442695
    %v6052 = vpow.pop %v6051
    %v6053 = vmul.f32 %v6040, 1.442695
    %v6054 = vpow.pop %v6053
    %v6055 = vadd.f32 %v6042, 1.0
    %v6056 = vadd.f32 %v6044, 1.0
    %v6057 = vadd.f32 %v6046, 1.0
    %v6058 = vadd.f32 %v6048, 1.0
    %v6059 = vadd.f32 %v6050, 1.0
    %v6060 = vadd.f32 %v6052, 1.0
    %v6061 = vadd.f32 %v6054, 1.0
    %v6062 = vrcp.pop %v6055
    %v6063 = vrcp.pop %v6056
    %v6064 = vrcp.pop %v6057
    %v6065 = vrcp.pop %v6058
    %v6066 = vrcp.pop %v6059
    %v6067 = vrcp.pop %v6060
    %v6068 = vrcp.pop %v6061
    %v6069 = vpack.c.bf16 %v6062, %v6062
    %v6070 = vpack.c.bf16 %v6063, %v6063
    %v6071 = vpack.c.bf16 %v6064, %v6064
    %v6072 = vpack.c.bf16 %v6065, %v6065
    %v6073 = vpack.c.bf16 %v6066, %v6066
    %v6074 = vpack.c.bf16 %v6067, %v6067
    %v6075 = vpack.c.bf16 %v6068, %v6068
    %v6083 = vunpack.c.l.b16 %v6069
    %v6084 = vunpack.c.l.b16 %v6070
    %v6085 = vunpack.c.l.b16 %v6071
    %v6086 = vunpack.c.l.b16 %v6072
    %v6087 = vunpack.c.l.b16 %v6073
    %v6088 = vunpack.c.l.b16 %v6074
    %v6089 = vunpack.c.l.b16 %v6075
    %v6090 = vpack.c.b16 %v6084, %v6083
    %v6091 = vpack.c.b16 %v6086, %v6085
    %v6092 = vpack.c.b16 %v6088, %v6087
    %v6093 = vpack.c.b16 %v6089, %v6089
    %6098 = vst [vmem:[%s7] sm:$0xff] %v6090
    %6099 = vst [vmem:[%s7 + $0x8] sm:$0xff] %v6091
    %6100 = vst [vmem:[%s7 + $0x10] sm:$0xff] %v6092
    %6101 = vst [vmem:[%s7 + $0x18] sm:$0xf] %v6093
    // Predicated region
    $region54: #{decoder_forward.1} parent=1 // pred_check
      _
    $region55: #{decoder_forward.1} parent=1 // pred_check_branch
      %6103 = sbr.rel (0) target = $region57
    $region56: #{decoder_forward.1} parent=1 // pred_region
      _
    $region57: #{decoder_forward.1} parent=1 // pred_fallthru
      _
    // Predicated region
    $region58: #{decoder_forward.1} parent=1 // pred_check
      _
    $region59: #{decoder_forward.1} parent=1 // pred_check_branch
      %6105 = sbr.rel (0) target = $region61
    $region60: #{decoder_forward.1} parent=1 // pred_region
      _
    $region61: #{decoder_forward.1} parent=1 // pred_fallthru
      _
    %6106 = vsyncpa [#allocation3], 1
    %6107 = vsyncpa [#allocation5], 1
    %6108 = vsyncpa [#allocation8], 1
    %6109 = vsyncpa [#allocation11], 1

</llo_original>
